<compile_context>
chip_gen: v7x
topology: tpu7x:2x2x1
jax: 0.10.0
libtpu: 0.0.40
codegen_flags: <defaults>
</compile_context>

<pallas_src>
import functools

import jax
import jax.numpy as jnp
import numpy as np
from jax import lax
from jax.experimental import pallas as pl
from jax.experimental.pallas import tpu as pltpu

NEG_SLOPE = 0.01      # F.leaky_relu default
DOWN_STRIDE = 2       # the module hard-codes stride=2 for the downsample conv


def _lrelu(x):
    return jnp.where(x >= 0, x, NEG_SLOPE * x)


# ------------------------------- Pallas kernel ------------------------------ #

def _fused_block_kernel(x_ref, w0_ref, w1_ref, wd_ref,
                        b0_ref, b1_ref, bd_ref,
                        pool_ref, sub_ref, qpad_ref,
                        o_ref,
                        lhs0_ref, lhs1_ref, *,
                        k, d, H0, W0):
    """Whole block forward for one image of the batch grid.

    x_ref    : (Hp, Wp, Cin)            spatially padded NHWC image (batch squeezed)
    w0_ref   : (k*k*Cin, C)             conv_0 weights as one im2col GEMM matrix
    w1_ref   : (k*k*C,  C)              conv_1 weights (real channels, no padding)
    wd_ref   : (k*k*Cin, C)             stride-2 downsample conv weights
    b*_ref   : (1, C)                   biases
    pool_ref : (H1*W1, H0*W0)           avg_pool2d(r) as a linear map
    sub_ref  : (H2*W2, H0*W0)           stride-2 row subsampling of the dense im2col
    qpad_ref : (k*k, H2*W2, H1*W1)      conv_1 per-tap shift + zero-pad gather matrices
    o_ref    : (H2*W2, C)               final output (real channels only)
    lhs0_ref : (H0*W0, k*k*Cin)  VMEM   shared im2col for conv_0 / downsample
    lhs1_ref : (H2*W2, k*k*C)    VMEM   im2col for conv_1
    """
    cin = x_ref.shape[-1]
    c = w0_ref.shape[-1]
    m0 = H0 * W0

    # ---- shared im2col (stride-1 taps), assembled with static lane-offset stores ----
    for i in range(k):
        for j in range(k):
            t = i * k + j
            slab = x_ref[i * d:i * d + H0, j * d:j * d + W0, :]       # (H0, W0, Cin)
            lhs0_ref[:, t * cin:(t + 1) * cin] = slab.reshape(m0, cin)
    lhs0 = lhs0_ref[...]                                              # (H0*W0, k*k*Cin)

    # ---- conv_0 + leaky_relu: one whole-image GEMM ----
    a0 = jnp.dot(lhs0, w0_ref[...], preferred_element_type=jnp.float32) + b0_ref[...]
    a0 = _lrelu(a0)                                                   # (H0*W0, C)

    # ---- avg_pool2d(r) as one GEMM with the precomputed pooling matrix ----
    pooled = jnp.dot(pool_ref[...], a0, preferred_element_type=jnp.float32)  # (H1*W1, C)

    # ---- conv_1 im2col: per-tap gather matrices fold in the spatial zero padding ----
    q = qpad_ref[...]                                                 # (k*k, H2*W2, H1*W1)
    for t in range(k * k):
        lhs1_ref[:, t * c:(t + 1) * c] = jnp.dot(
            q[t], pooled, preferred_element_type=jnp.float32)
    conv1 = jnp.dot(lhs1_ref[...], w1_ref[...],
                    preferred_element_type=jnp.float32) + b1_ref[...]
    conv1 = _lrelu(conv1)                                             # (H2*W2, C)

    # ---- stride-2 downsample conv: reuse lhs0, subsample its rows, one GEMM ----
    lhs_d = jnp.dot(sub_ref[...], lhs0, preferred_element_type=jnp.float32)  # (H2*W2, k*k*Cin)
    down = jnp.dot(lhs_d, wd_ref[...], preferred_element_type=jnp.float32) + bd_ref[...]

    # ---- residual add + final leaky_relu ----
    o_ref[...] = _lrelu(conv1 + down).astype(o_ref.dtype)


# ------------------------------- host wrappers ------------------------------ #

def _conv_out(size, ksz, stride, padding, dilation):
    return (size + 2 * padding - dilation * (ksz - 1) - 1) // stride + 1


def prepare_params(raw, *, height, width, kernel_size, padding, dilation, reduction_factor):
    """Torch OIHW weights -> im2col GEMM matrices + precomputed gather/pool matrices."""
    k, p, d, r = kernel_size, padding, dilation, reduction_factor
    cout = int(raw["w0"].shape[0])

    H0 = _conv_out(height, k, 1, p, d)
    W0 = _conv_out(width, k, 1, p, d)
    H1, W1 = H0 // r, W0 // r
    H2 = _conv_out(H1, k, 1, p, d)
    W2 = _conv_out(W1, k, 1, p, d)

    def gemm(w):
        o, i, kh, kw = w.shape
        m = np.transpose(np.asarray(w, np.float32), (2, 3, 1, 0)).reshape(kh * kw * i, o)
        return jnp.asarray(m)

    def bias(b):
        return jnp.asarray(np.asarray(b, np.float32).reshape(1, cout))

    # avg_pool2d(r) (kernel=stride=r, floor: trailing rows/cols dropped) as a matrix.
    pool = np.zeros((H1 * W1, H0 * W0), np.float32)
    inv = 1.0 / float(r * r)
    for h1 in range(H1):
        for w1 in range(W1):
            for rr in range(r):
                for cc in range(r):
                    pool[h1 * W1 + w1, (h1 * r + rr) * W0 + (w1 * r + cc)] = inv

    # stride-2 subsampling of the dense stride-1 im2col rows (same k/p/d as conv_0).
    sub = np.zeros((H2 * W2, H0 * W0), np.float32)
    for h2 in range(H2):
        for w2 in range(W2):
            sub[h2 * W2 + w2, (DOWN_STRIDE * h2) * W0 + DOWN_STRIDE * w2] = 1.0

    # conv_1 per-tap gather matrices with the spatial zero padding folded in.
    qpad = np.zeros((k * k, H2 * W2, H1 * W1), np.float32)
    for i in range(k):
        for j in range(k):
            t = i * k + j
            for h2 in range(H2):
                for w2 in range(W2):
                    ph, pw = h2 + i * d - p, w2 + j * d - p
                    if 0 <= ph < H1 and 0 <= pw < W1:
                        qpad[t, h2 * W2 + w2, ph * W1 + pw] = 1.0

    return {
        "w0": gemm(raw["w0"]), "w1": gemm(raw["w1"]), "wd": gemm(raw["wd"]),
        "b0": bias(raw["b0"]), "b1": bias(raw["b1"]), "bd": bias(raw["bd"]),
        "pool_mat": jnp.asarray(pool), "sub_mat": jnp.asarray(sub),
        "qpad": jnp.asarray(qpad),
    }


@functools.partial(jax.jit, static_argnames=("cout", "kernel_size", "padding",
                                              "dilation", "reduction_factor"))
def forward(x_nchw, params, *, cout, kernel_size, padding, dilation, reduction_factor):
    """Full block forward. Input/output: NCHW float32."""
    k, d, p, r = kernel_size, dilation, padding, reduction_factor
    N, Cin, H, W = x_nchw.shape

    x = jnp.transpose(x_nchw, (0, 2, 3, 1)).astype(jnp.float32)            # -> NHWC
    xp = jnp.pad(x, ((0, 0), (p, p), (p, p), (0, 0)))
    Hp, Wp = H + 2 * p, W + 2 * p

    H0 = _conv_out(H, k, 1, p, d)
    W0 = _conv_out(W, k, 1, p, d)
    H1, W1 = H0 // r, W0 // r
    H2 = _conv_out(H1, k, 1, p, d)
    W2 = _conv_out(W1, k, 1, p, d)
    Hd = _conv_out(H, k, DOWN_STRIDE, p, d)
    Wd = _conv_out(W, k, DOWN_STRIDE, p, d)
    if (H2, W2) != (Hd, Wd):
        raise ValueError(f"residual shape mismatch: conv_1 {(H2, W2)} vs downsample {(Hd, Wd)}")

    kk_in = k * k * Cin
    kk_c = k * k * cout

    kernel = functools.partial(_fused_block_kernel, k=k, d=d, H0=H0, W0=W0)

    out = pl.pallas_call(
        kernel,
        out_shape=jax.ShapeDtypeStruct((N, H2 * W2, cout), jnp.float32),
        grid=(N,),
        in_specs=[
            pl.BlockSpec((None, Hp, Wp, Cin), lambda n: (n, 0, 0, 0)),   # per-image block
            pl.BlockSpec((kk_in, cout), lambda n: (0, 0)),               # weights resident
            pl.BlockSpec((kk_c, cout), lambda n: (0, 0)),
            pl.BlockSpec((kk_in, cout), lambda n: (0, 0)),
            pl.BlockSpec((1, cout), lambda n: (0, 0)),
            pl.BlockSpec((1, cout), lambda n: (0, 0)),
            pl.BlockSpec((1, cout), lambda n: (0, 0)),
            pl.BlockSpec((H1 * W1, H0 * W0), lambda n: (0, 0)),
            pl.BlockSpec((H2 * W2, H0 * W0), lambda n: (0, 0)),
            pl.BlockSpec((k * k, H2 * W2, H1 * W1), lambda n: (0, 0, 0)),
        ],
        out_specs=pl.BlockSpec((None, H2 * W2, cout), lambda n: (n, 0, 0)),
        scratch_shapes=[
            pltpu.VMEM((H0 * W0, kk_in), jnp.float32),     # shared stride-1 im2col
            pltpu.VMEM((H2 * W2, kk_c), jnp.float32),      # conv_1 im2col
        ],
        compiler_params=pltpu.CompilerParams(dimension_semantics=("parallel",)),
    )(xp, params["w0"], params["w1"], params["wd"],
      params["b0"], params["b1"], params["bd"],
      params["pool_mat"], params["sub_mat"], params["qpad"])

    out = out.reshape(N, H2, W2, cout)
    return jnp.transpose(out, (0, 3, 1, 2))                                # -> NCHW


# --------------------------- reference (plain JAX) --------------------------- #

def _conv_ref(x_nchw, w_oihw, b, stride, padding, dilation):
    out = lax.conv_general_dilated(
        x_nchw, w_oihw, window_strides=(stride, stride),
        padding=[(padding, padding), (padding, padding)],
        rhs_dilation=(dilation, dilation),
        dimension_numbers=("NCHW", "OIHW", "NCHW"))
    return out + b[None, :, None, None]


def ref_forward(x, raw, *, padding, dilation, reduction_factor):
    r = reduction_factor
    out = _lrelu(_conv_ref(x, raw["w0"], raw["b0"], 1, padding, dilation))
    N, C, H, W = out.shape
    H1, W1 = H // r, W // r
    out = out[:, :, :H1 * r, :W1 * r].reshape(N, C, H1, r, W1, r).mean(axis=(3, 5))
    out = _lrelu(_conv_ref(out, raw["w1"], raw["b1"], 1, padding, dilation))
    down = _conv_ref(x, raw["wd"], raw["bd"], DOWN_STRIDE, padding, dilation)
    return _lrelu(out + down)


# ------------------------------------ main ----------------------------------- #

if __name__ == "__main__":
    batch, in_ch, spatial = 2, 4, 16
    num_filters, kernel_size, padding, dilation = 8, 3, 1, 1
    reduction_factor = 2
    use_bias = True

    key = jax.random.PRNGKey(0)
    k_x, k_w0, k_b0, k_w1, k_b1, k_wd, k_bd = jax.random.split(key, 7)

    x = jax.random.normal(k_x, (batch, in_ch, spatial, spatial), dtype=jnp.float32)

    raw = {
        "w0": 0.1 * jax.random.normal(k_w0, (num_filters, in_ch, kernel_size, kernel_size), jnp.float32),
        "b0": (0.1 * jax.random.normal(k_b0, (num_filters,), jnp.float32)) if use_bias
              else jnp.zeros((num_filters,), jnp.float32),
        "w1": 0.1 * jax.random.normal(k_w1, (num_filters, num_filters, kernel_size, kernel_size), jnp.float32),
        "b1": (0.1 * jax.random.normal(k_b1, (num_filters,), jnp.float32)) if use_bias
              else jnp.zeros((num_filters,), jnp.float32),
        "wd": 0.1 * jax.random.normal(k_wd, (num_filters, in_ch, kernel_size, kernel_size), jnp.float32),
        "bd": (0.1 * jax.random.normal(k_bd, (num_filters,), jnp.float32)) if use_bias
              else jnp.zeros((num_filters,), jnp.float32),
    }

    params = prepare_params(raw, height=spatial, width=spatial, kernel_size=kernel_size,
                            padding=padding, dilation=dilation,
                            reduction_factor=reduction_factor)

    out = forward(x, params, cout=num_filters, kernel_size=kernel_size,
                  padding=padding, dilation=dilation, reduction_factor=reduction_factor)
    out = jax.block_until_ready(out)

    ref = jax.block_until_ready(
        ref_forward(x, raw, padding=padding, dilation=dilation,
                    reduction_factor=reduction_factor))

    assert out.shape == (batch, num_filters, spatial // 2, spatial // 2), out.shape
    np.testing.assert_allclose(np.asarray(out), np.asarray(ref), rtol=5e-3, atol=5e-3)

    print("KERNEL_OK")
</pallas_src>

<mosaic_0001>
module attributes {stable_mosaic.version = 11 : i64} {
  func.func @_fused_block_kernel(%arg0: i32, %arg1: memref<1x18x18x4xf32, #tpu.memory_space<vmem>>, %arg2: memref<36x8xf32, #tpu.memory_space<vmem>>, %arg3: memref<72x8xf32, #tpu.memory_space<vmem>>, %arg4: memref<36x8xf32, #tpu.memory_space<vmem>>, %arg5: memref<1x8xf32, #tpu.memory_space<vmem>>, %arg6: memref<1x8xf32, #tpu.memory_space<vmem>>, %arg7: memref<1x8xf32, #tpu.memory_space<vmem>>, %arg8: memref<64x256xf32, #tpu.memory_space<vmem>>, %arg9: memref<64x256xf32, #tpu.memory_space<vmem>>, %arg10: memref<9x64x64xf32, #tpu.memory_space<vmem>>, %arg11: memref<1x64x8xf32, #tpu.memory_space<vmem>>, %arg12: memref<256x36xf32, #tpu.memory_space<vmem>>, %arg13: memref<64x72xf32, #tpu.memory_space<vmem>>) attributes {dimension_semantics = [#tpu.dimension_semantics<parallel>], iteration_bounds = array<i64: 2>, scalar_prefetch = 0 : i64, scratch_operands = 2 : i64, tpu.core_type = #tpu.core_type<tc>, window_params = [{transform_indices = @transform_0, window_bounds = array<i64: 1, 18, 18, 4>}, {pipeline_mode = #tpu.pipeline_mode<synchronous>, transform_indices = @transform_1, window_bounds = array<i64: 36, 8>}, {pipeline_mode = #tpu.pipeline_mode<synchronous>, transform_indices = @transform_2, window_bounds = array<i64: 72, 8>}, {pipeline_mode = #tpu.pipeline_mode<synchronous>, transform_indices = @transform_3, window_bounds = array<i64: 36, 8>}, {pipeline_mode = #tpu.pipeline_mode<synchronous>, transform_indices = @transform_4, window_bounds = array<i64: 1, 8>}, {pipeline_mode = #tpu.pipeline_mode<synchronous>, transform_indices = @transform_5, window_bounds = array<i64: 1, 8>}, {pipeline_mode = #tpu.pipeline_mode<synchronous>, transform_indices = @transform_6, window_bounds = array<i64: 1, 8>}, {pipeline_mode = #tpu.pipeline_mode<synchronous>, transform_indices = @transform_7, window_bounds = array<i64: 64, 256>}, {pipeline_mode = #tpu.pipeline_mode<synchronous>, transform_indices = @transform_8, window_bounds = array<i64: 64, 256>}, {pipeline_mode = #tpu.pipeline_mode<synchronous>, transform_indices = @transform_9, window_bounds = array<i64: 9, 64, 64>}, {transform_indices = @transform_10, window_bounds = array<i64: 1, 64, 8>}]} {
    %c0 = arith.constant 0 : index
    %c0_0 = arith.constant 0 : index
    %c0_1 = arith.constant 0 : index
    %c0_2 = arith.constant 0 : index
    %0 = vector.load %arg1[%c0, %c0_0, %c0_1, %c0_2] : memref<1x18x18x4xf32, #tpu.memory_space<vmem>>, vector<1x16x16x4xf32>
    %1 = vector.shape_cast %0 : vector<1x16x16x4xf32> to vector<16x16x4xf32>
    %2 = vector.shape_cast %1 : vector<16x16x4xf32> to vector<256x4xf32>
    %c0_3 = arith.constant 0 : index
    %c0_4 = arith.constant 0 : index
    %3 = vector.load %arg12[%c0_3, %c0_4] : memref<256x36xf32, #tpu.memory_space<vmem>>, vector<256x4xf32>
    tpu.vector_store %arg12[%c0_3, %c0_4], %2 {strides = array<i32>} : memref<256x36xf32, #tpu.memory_space<vmem>>, vector<256x4xf32>,
    %c0_5 = arith.constant 0 : index
    %c0_6 = arith.constant 0 : index
    %c1 = arith.constant 1 : index
    %c0_7 = arith.constant 0 : index
    %4 = vector.load %arg1[%c0_5, %c0_6, %c1, %c0_7] : memref<1x18x18x4xf32, #tpu.memory_space<vmem>>, vector<1x16x16x4xf32>
    %5 = vector.shape_cast %4 : vector<1x16x16x4xf32> to vector<16x16x4xf32>
    %6 = vector.shape_cast %5 : vector<16x16x4xf32> to vector<256x4xf32>
    %c0_8 = arith.constant 0 : index
    %c4 = arith.constant 4 : index
    %7 = vector.load %arg12[%c0_8, %c4] : memref<256x36xf32, #tpu.memory_space<vmem>>, vector<256x4xf32>
    tpu.vector_store %arg12[%c0_8, %c4], %6 {strides = array<i32>} : memref<256x36xf32, #tpu.memory_space<vmem>>, vector<256x4xf32>,
    %c0_9 = arith.constant 0 : index
    %c0_10 = arith.constant 0 : index
    %c2 = arith.constant 2 : index
    %c0_11 = arith.constant 0 : index
    %8 = vector.load %arg1[%c0_9, %c0_10, %c2, %c0_11] : memref<1x18x18x4xf32, #tpu.memory_space<vmem>>, vector<1x16x16x4xf32>
    %9 = vector.shape_cast %8 : vector<1x16x16x4xf32> to vector<16x16x4xf32>
    %10 = vector.shape_cast %9 : vector<16x16x4xf32> to vector<256x4xf32>
    %c0_12 = arith.constant 0 : index
    %c8 = arith.constant 8 : index
    %11 = vector.load %arg12[%c0_12, %c8] : memref<256x36xf32, #tpu.memory_space<vmem>>, vector<256x4xf32>
    tpu.vector_store %arg12[%c0_12, %c8], %10 {strides = array<i32>} : memref<256x36xf32, #tpu.memory_space<vmem>>, vector<256x4xf32>,
    %c0_13 = arith.constant 0 : index
    %c1_14 = arith.constant 1 : index
    %c0_15 = arith.constant 0 : index
    %c0_16 = arith.constant 0 : index
    %12 = vector.load %arg1[%c0_13, %c1_14, %c0_15, %c0_16] : memref<1x18x18x4xf32, #tpu.memory_space<vmem>>, vector<1x16x16x4xf32>
    %13 = vector.shape_cast %12 : vector<1x16x16x4xf32> to vector<16x16x4xf32>
    %14 = vector.shape_cast %13 : vector<16x16x4xf32> to vector<256x4xf32>
    %c0_17 = arith.constant 0 : index
    %c12 = arith.constant 12 : index
    %15 = vector.load %arg12[%c0_17, %c12] : memref<256x36xf32, #tpu.memory_space<vmem>>, vector<256x4xf32>
    tpu.vector_store %arg12[%c0_17, %c12], %14 {strides = array<i32>} : memref<256x36xf32, #tpu.memory_space<vmem>>, vector<256x4xf32>,
    %c0_18 = arith.constant 0 : index
    %c1_19 = arith.constant 1 : index
    %c1_20 = arith.constant 1 : index
    %c0_21 = arith.constant 0 : index
    %16 = vector.load %arg1[%c0_18, %c1_19, %c1_20, %c0_21] : memref<1x18x18x4xf32, #tpu.memory_space<vmem>>, vector<1x16x16x4xf32>
    %17 = vector.shape_cast %16 : vector<1x16x16x4xf32> to vector<16x16x4xf32>
    %18 = vector.shape_cast %17 : vector<16x16x4xf32> to vector<256x4xf32>
    %c0_22 = arith.constant 0 : index
    %c16 = arith.constant 16 : index
    %19 = vector.load %arg12[%c0_22, %c16] : memref<256x36xf32, #tpu.memory_space<vmem>>, vector<256x4xf32>
    tpu.vector_store %arg12[%c0_22, %c16], %18 {strides = array<i32>} : memref<256x36xf32, #tpu.memory_space<vmem>>, vector<256x4xf32>,
    %c0_23 = arith.constant 0 : index
    %c1_24 = arith.constant 1 : index
    %c2_25 = arith.constant 2 : index
    %c0_26 = arith.constant 0 : index
    %20 = vector.load %arg1[%c0_23, %c1_24, %c2_25, %c0_26] : memref<1x18x18x4xf32, #tpu.memory_space<vmem>>, vector<1x16x16x4xf32>
    %21 = vector.shape_cast %20 : vector<1x16x16x4xf32> to vector<16x16x4xf32>
    %22 = vector.shape_cast %21 : vector<16x16x4xf32> to vector<256x4xf32>
    %c0_27 = arith.constant 0 : index
    %c20 = arith.constant 20 : index
    %23 = vector.load %arg12[%c0_27, %c20] : memref<256x36xf32, #tpu.memory_space<vmem>>, vector<256x4xf32>
    tpu.vector_store %arg12[%c0_27, %c20], %22 {strides = array<i32>} : memref<256x36xf32, #tpu.memory_space<vmem>>, vector<256x4xf32>,
    %c0_28 = arith.constant 0 : index
    %c2_29 = arith.constant 2 : index
    %c0_30 = arith.constant 0 : index
    %c0_31 = arith.constant 0 : index
    %24 = vector.load %arg1[%c0_28, %c2_29, %c0_30, %c0_31] : memref<1x18x18x4xf32, #tpu.memory_space<vmem>>, vector<1x16x16x4xf32>
    %25 = vector.shape_cast %24 : vector<1x16x16x4xf32> to vector<16x16x4xf32>
    %26 = vector.shape_cast %25 : vector<16x16x4xf32> to vector<256x4xf32>
    %c0_32 = arith.constant 0 : index
    %c24 = arith.constant 24 : index
    %27 = vector.load %arg12[%c0_32, %c24] : memref<256x36xf32, #tpu.memory_space<vmem>>, vector<256x4xf32>
    tpu.vector_store %arg12[%c0_32, %c24], %26 {strides = array<i32>} : memref<256x36xf32, #tpu.memory_space<vmem>>, vector<256x4xf32>,
    %c0_33 = arith.constant 0 : index
    %c2_34 = arith.constant 2 : index
    %c1_35 = arith.constant 1 : index
    %c0_36 = arith.constant 0 : index
    %28 = vector.load %arg1[%c0_33, %c2_34, %c1_35, %c0_36] : memref<1x18x18x4xf32, #tpu.memory_space<vmem>>, vector<1x16x16x4xf32>
    %29 = vector.shape_cast %28 : vector<1x16x16x4xf32> to vector<16x16x4xf32>
    %30 = vector.shape_cast %29 : vector<16x16x4xf32> to vector<256x4xf32>
    %c0_37 = arith.constant 0 : index
    %c28 = arith.constant 28 : index
    %31 = vector.load %arg12[%c0_37, %c28] : memref<256x36xf32, #tpu.memory_space<vmem>>, vector<256x4xf32>
    tpu.vector_store %arg12[%c0_37, %c28], %30 {strides = array<i32>} : memref<256x36xf32, #tpu.memory_space<vmem>>, vector<256x4xf32>,
    %c0_38 = arith.constant 0 : index
    %c2_39 = arith.constant 2 : index
    %c2_40 = arith.constant 2 : index
    %c0_41 = arith.constant 0 : index
    %32 = vector.load %arg1[%c0_38, %c2_39, %c2_40, %c0_41] : memref<1x18x18x4xf32, #tpu.memory_space<vmem>>, vector<1x16x16x4xf32>
    %33 = vector.shape_cast %32 : vector<1x16x16x4xf32> to vector<16x16x4xf32>
    %34 = vector.shape_cast %33 : vector<16x16x4xf32> to vector<256x4xf32>
    %c0_42 = arith.constant 0 : index
    %c32 = arith.constant 32 : index
    %35 = vector.load %arg12[%c0_42, %c32] : memref<256x36xf32, #tpu.memory_space<vmem>>, vector<256x4xf32>
    tpu.vector_store %arg12[%c0_42, %c32], %34 {strides = array<i32>} : memref<256x36xf32, #tpu.memory_space<vmem>>, vector<256x4xf32>,
    %c0_43 = arith.constant 0 : index
    %c0_44 = arith.constant 0 : index
    %36 = vector.load %arg12[%c0_43, %c0_44] : memref<256x36xf32, #tpu.memory_space<vmem>>, vector<256x36xf32>
    %c0_45 = arith.constant 0 : index
    %c0_46 = arith.constant 0 : index
    %37 = vector.load %arg2[%c0_45, %c0_46] : memref<36x8xf32, #tpu.memory_space<vmem>>, vector<36x8xf32>
    %cst = arith.constant dense<0.000000e+00> : vector<256x8xf32>
    %38 = tpu.matmul %36, %37, %cst {dimension_numbers = #tpu.dot_dimension_numbers<[1], [0], [0], [1], [0, 0, 1, 1], [], []>} : vector<256x36xf32>, vector<36x8xf32>, vector<256x8xf32> -> vector<256x8xf32>
    %c0_47 = arith.constant 0 : index
    %c0_48 = arith.constant 0 : index
    %39 = vector.load %arg5[%c0_47, %c0_48] : memref<1x8xf32, #tpu.memory_space<vmem>>, vector<1x8xf32>
    %40 = vector.broadcast %39 : vector<1x8xf32> to vector<256x8xf32>
    %41 = arith.addf %38, %40 : vector<256x8xf32>
    %cst_49 = arith.constant 0.000000e+00 : f32
    %42 = vector.broadcast %cst_49 : f32 to vector<256x8xf32>
    %43 = arith.cmpf oge, %41, %42 : vector<256x8xf32>
    %cst_50 = arith.constant 0.00999999977 : f32
    %44 = vector.broadcast %cst_50 : f32 to vector<256x8xf32>
    %45 = arith.mulf %44, %41 : vector<256x8xf32>
    %46 = arith.select %43, %41, %45 : vector<256x8xi1>, vector<256x8xf32>
    %c0_51 = arith.constant 0 : index
    %c0_52 = arith.constant 0 : index
    %47 = vector.load %arg8[%c0_51, %c0_52] : memref<64x256xf32, #tpu.memory_space<vmem>>, vector<64x256xf32>
    %cst_53 = arith.constant dense<0.000000e+00> : vector<64x8xf32>
    %48 = tpu.matmul %47, %46, %cst_53 {dimension_numbers = #tpu.dot_dimension_numbers<[1], [0], [0], [1], [0, 0, 1, 1], [], []>} : vector<64x256xf32>, vector<256x8xf32>, vector<64x8xf32> -> vector<64x8xf32>
    %c0_54 = arith.constant 0 : index
    %c0_55 = arith.constant 0 : index
    %c0_56 = arith.constant 0 : index
    %49 = vector.load %arg10[%c0_54, %c0_55, %c0_56] : memref<9x64x64xf32, #tpu.memory_space<vmem>>, vector<9x64x64xf32>
    %50 = vector.extract_strided_slice %49 {offsets = [0, 0, 0], sizes = [1, 64, 64], strides = [1, 1, 1]} : vector<9x64x64xf32> to vector<1x64x64xf32>
    %51 = vector.shape_cast %50 : vector<1x64x64xf32> to vector<64x64xf32>
    %cst_57 = arith.constant dense<0.000000e+00> : vector<64x8xf32>
    %52 = tpu.matmul %51, %48, %cst_57 {dimension_numbers = #tpu.dot_dimension_numbers<[1], [0], [0], [1], [0, 0, 1, 1], [], []>} : vector<64x64xf32>, vector<64x8xf32>, vector<64x8xf32> -> vector<64x8xf32>
    %c0_58 = arith.constant 0 : index
    %c0_59 = arith.constant 0 : index
    %53 = vector.load %arg13[%c0_58, %c0_59] : memref<64x72xf32, #tpu.memory_space<vmem>>, vector<64x8xf32>
    tpu.vector_store %arg13[%c0_58, %c0_59], %52 {strides = array<i32>} : memref<64x72xf32, #tpu.memory_space<vmem>>, vector<64x8xf32>,
    %54 = vector.extract_strided_slice %49 {offsets = [1, 0, 0], sizes = [1, 64, 64], strides = [1, 1, 1]} : vector<9x64x64xf32> to vector<1x64x64xf32>
    %55 = vector.shape_cast %54 : vector<1x64x64xf32> to vector<64x64xf32>
    %cst_60 = arith.constant dense<0.000000e+00> : vector<64x8xf32>
    %56 = tpu.matmul %55, %48, %cst_60 {dimension_numbers = #tpu.dot_dimension_numbers<[1], [0], [0], [1], [0, 0, 1, 1], [], []>} : vector<64x64xf32>, vector<64x8xf32>, vector<64x8xf32> -> vector<64x8xf32>
    %c0_61 = arith.constant 0 : index
    %c8_62 = arith.constant 8 : index
    %57 = vector.load %arg13[%c0_61, %c8_62] : memref<64x72xf32, #tpu.memory_space<vmem>>, vector<64x8xf32>
    tpu.vector_store %arg13[%c0_61, %c8_62], %56 {strides = array<i32>} : memref<64x72xf32, #tpu.memory_space<vmem>>, vector<64x8xf32>,
    %58 = vector.extract_strided_slice %49 {offsets = [2, 0, 0], sizes = [1, 64, 64], strides = [1, 1, 1]} : vector<9x64x64xf32> to vector<1x64x64xf32>
    %59 = vector.shape_cast %58 : vector<1x64x64xf32> to vector<64x64xf32>
    %cst_63 = arith.constant dense<0.000000e+00> : vector<64x8xf32>
    %60 = tpu.matmul %59, %48, %cst_63 {dimension_numbers = #tpu.dot_dimension_numbers<[1], [0], [0], [1], [0, 0, 1, 1], [], []>} : vector<64x64xf32>, vector<64x8xf32>, vector<64x8xf32> -> vector<64x8xf32>
    %c0_64 = arith.constant 0 : index
    %c16_65 = arith.constant 16 : index
    %61 = vector.load %arg13[%c0_64, %c16_65] : memref<64x72xf32, #tpu.memory_space<vmem>>, vector<64x8xf32>
    tpu.vector_store %arg13[%c0_64, %c16_65], %60 {strides = array<i32>} : memref<64x72xf32, #tpu.memory_space<vmem>>, vector<64x8xf32>,
    %62 = vector.extract_strided_slice %49 {offsets = [3, 0, 0], sizes = [1, 64, 64], strides = [1, 1, 1]} : vector<9x64x64xf32> to vector<1x64x64xf32>
    %63 = vector.shape_cast %62 : vector<1x64x64xf32> to vector<64x64xf32>
    %cst_66 = arith.constant dense<0.000000e+00> : vector<64x8xf32>
    %64 = tpu.matmul %63, %48, %cst_66 {dimension_numbers = #tpu.dot_dimension_numbers<[1], [0], [0], [1], [0, 0, 1, 1], [], []>} : vector<64x64xf32>, vector<64x8xf32>, vector<64x8xf32> -> vector<64x8xf32>
    %c0_67 = arith.constant 0 : index
    %c24_68 = arith.constant 24 : index
    %65 = vector.load %arg13[%c0_67, %c24_68] : memref<64x72xf32, #tpu.memory_space<vmem>>, vector<64x8xf32>
    tpu.vector_store %arg13[%c0_67, %c24_68], %64 {strides = array<i32>} : memref<64x72xf32, #tpu.memory_space<vmem>>, vector<64x8xf32>,
    %66 = vector.extract_strided_slice %49 {offsets = [4, 0, 0], sizes = [1, 64, 64], strides = [1, 1, 1]} : vector<9x64x64xf32> to vector<1x64x64xf32>
    %67 = vector.shape_cast %66 : vector<1x64x64xf32> to vector<64x64xf32>
    %cst_69 = arith.constant dense<0.000000e+00> : vector<64x8xf32>
    %68 = tpu.matmul %67, %48, %cst_69 {dimension_numbers = #tpu.dot_dimension_numbers<[1], [0], [0], [1], [0, 0, 1, 1], [], []>} : vector<64x64xf32>, vector<64x8xf32>, vector<64x8xf32> -> vector<64x8xf32>
    %c0_70 = arith.constant 0 : index
    %c32_71 = arith.constant 32 : index
    %69 = vector.load %arg13[%c0_70, %c32_71] : memref<64x72xf32, #tpu.memory_space<vmem>>, vector<64x8xf32>
    tpu.vector_store %arg13[%c0_70, %c32_71], %68 {strides = array<i32>} : memref<64x72xf32, #tpu.memory_space<vmem>>, vector<64x8xf32>,
    %70 = vector.extract_strided_slice %49 {offsets = [5, 0, 0], sizes = [1, 64, 64], strides = [1, 1, 1]} : vector<9x64x64xf32> to vector<1x64x64xf32>
    %71 = vector.shape_cast %70 : vector<1x64x64xf32> to vector<64x64xf32>
    %cst_72 = arith.constant dense<0.000000e+00> : vector<64x8xf32>
    %72 = tpu.matmul %71, %48, %cst_72 {dimension_numbers = #tpu.dot_dimension_numbers<[1], [0], [0], [1], [0, 0, 1, 1], [], []>} : vector<64x64xf32>, vector<64x8xf32>, vector<64x8xf32> -> vector<64x8xf32>
    %c0_73 = arith.constant 0 : index
    %c40 = arith.constant 40 : index
    %73 = vector.load %arg13[%c0_73, %c40] : memref<64x72xf32, #tpu.memory_space<vmem>>, vector<64x8xf32>
    tpu.vector_store %arg13[%c0_73, %c40], %72 {strides = array<i32>} : memref<64x72xf32, #tpu.memory_space<vmem>>, vector<64x8xf32>,
    %74 = vector.extract_strided_slice %49 {offsets = [6, 0, 0], sizes = [1, 64, 64], strides = [1, 1, 1]} : vector<9x64x64xf32> to vector<1x64x64xf32>
    %75 = vector.shape_cast %74 : vector<1x64x64xf32> to vector<64x64xf32>
    %cst_74 = arith.constant dense<0.000000e+00> : vector<64x8xf32>
    %76 = tpu.matmul %75, %48, %cst_74 {dimension_numbers = #tpu.dot_dimension_numbers<[1], [0], [0], [1], [0, 0, 1, 1], [], []>} : vector<64x64xf32>, vector<64x8xf32>, vector<64x8xf32> -> vector<64x8xf32>
    %c0_75 = arith.constant 0 : index
    %c48 = arith.constant 48 : index
    %77 = vector.load %arg13[%c0_75, %c48] : memref<64x72xf32, #tpu.memory_space<vmem>>, vector<64x8xf32>
    tpu.vector_store %arg13[%c0_75, %c48], %76 {strides = array<i32>} : memref<64x72xf32, #tpu.memory_space<vmem>>, vector<64x8xf32>,
    %78 = vector.extract_strided_slice %49 {offsets = [7, 0, 0], sizes = [1, 64, 64], strides = [1, 1, 1]} : vector<9x64x64xf32> to vector<1x64x64xf32>
    %79 = vector.shape_cast %78 : vector<1x64x64xf32> to vector<64x64xf32>
    %cst_76 = arith.constant dense<0.000000e+00> : vector<64x8xf32>
    %80 = tpu.matmul %79, %48, %cst_76 {dimension_numbers = #tpu.dot_dimension_numbers<[1], [0], [0], [1], [0, 0, 1, 1], [], []>} : vector<64x64xf32>, vector<64x8xf32>, vector<64x8xf32> -> vector<64x8xf32>
    %c0_77 = arith.constant 0 : index
    %c56 = arith.constant 56 : index
    %81 = vector.load %arg13[%c0_77, %c56] : memref<64x72xf32, #tpu.memory_space<vmem>>, vector<64x8xf32>
    tpu.vector_store %arg13[%c0_77, %c56], %80 {strides = array<i32>} : memref<64x72xf32, #tpu.memory_space<vmem>>, vector<64x8xf32>,
    %82 = vector.extract_strided_slice %49 {offsets = [8, 0, 0], sizes = [1, 64, 64], strides = [1, 1, 1]} : vector<9x64x64xf32> to vector<1x64x64xf32>
    %83 = vector.shape_cast %82 : vector<1x64x64xf32> to vector<64x64xf32>
    %cst_78 = arith.constant dense<0.000000e+00> : vector<64x8xf32>
    %84 = tpu.matmul %83, %48, %cst_78 {dimension_numbers = #tpu.dot_dimension_numbers<[1], [0], [0], [1], [0, 0, 1, 1], [], []>} : vector<64x64xf32>, vector<64x8xf32>, vector<64x8xf32> -> vector<64x8xf32>
    %c0_79 = arith.constant 0 : index
    %c64 = arith.constant 64 : index
    %85 = vector.load %arg13[%c0_79, %c64] : memref<64x72xf32, #tpu.memory_space<vmem>>, vector<64x8xf32>
    tpu.vector_store %arg13[%c0_79, %c64], %84 {strides = array<i32>} : memref<64x72xf32, #tpu.memory_space<vmem>>, vector<64x8xf32>,
    %c0_80 = arith.constant 0 : index
    %c0_81 = arith.constant 0 : index
    %86 = vector.load %arg13[%c0_80, %c0_81] : memref<64x72xf32, #tpu.memory_space<vmem>>, vector<64x72xf32>
    %c0_82 = arith.constant 0 : index
    %c0_83 = arith.constant 0 : index
    %87 = vector.load %arg3[%c0_82, %c0_83] : memref<72x8xf32, #tpu.memory_space<vmem>>, vector<72x8xf32>
    %cst_84 = arith.constant dense<0.000000e+00> : vector<64x8xf32>
    %88 = tpu.matmul %86, %87, %cst_84 {dimension_numbers = #tpu.dot_dimension_numbers<[1], [0], [0], [1], [0, 0, 1, 1], [], []>} : vector<64x72xf32>, vector<72x8xf32>, vector<64x8xf32> -> vector<64x8xf32>
    %c0_85 = arith.constant 0 : index
    %c0_86 = arith.constant 0 : index
    %89 = vector.load %arg6[%c0_85, %c0_86] : memref<1x8xf32, #tpu.memory_space<vmem>>, vector<1x8xf32>
    %90 = vector.broadcast %89 : vector<1x8xf32> to vector<64x8xf32>
    %91 = arith.addf %88, %90 : vector<64x8xf32>
    %cst_87 = arith.constant 0.000000e+00 : f32
    %92 = vector.broadcast %cst_87 : f32 to vector<64x8xf32>
    %93 = arith.cmpf oge, %91, %92 : vector<64x8xf32>
    %cst_88 = arith.constant 0.00999999977 : f32
    %94 = vector.broadcast %cst_88 : f32 to vector<64x8xf32>
    %95 = arith.mulf %94, %91 : vector<64x8xf32>
    %96 = arith.select %93, %91, %95 : vector<64x8xi1>, vector<64x8xf32>
    %c0_89 = arith.constant 0 : index
    %c0_90 = arith.constant 0 : index
    %97 = vector.load %arg9[%c0_89, %c0_90] : memref<64x256xf32, #tpu.memory_space<vmem>>, vector<64x256xf32>
    %cst_91 = arith.constant dense<0.000000e+00> : vector<64x36xf32>
    %98 = tpu.matmul %97, %36, %cst_91 {dimension_numbers = #tpu.dot_dimension_numbers<[1], [0], [0], [1], [0, 0, 1, 1], [], []>} : vector<64x256xf32>, vector<256x36xf32>, vector<64x36xf32> -> vector<64x36xf32>
    %c0_92 = arith.constant 0 : index
    %c0_93 = arith.constant 0 : index
    %99 = vector.load %arg4[%c0_92, %c0_93] : memref<36x8xf32, #tpu.memory_space<vmem>>, vector<36x8xf32>
    %cst_94 = arith.constant dense<0.000000e+00> : vector<64x8xf32>
    %100 = tpu.matmul %98, %99, %cst_94 {dimension_numbers = #tpu.dot_dimension_numbers<[1], [0], [0], [1], [0, 0, 1, 1], [], []>} : vector<64x36xf32>, vector<36x8xf32>, vector<64x8xf32> -> vector<64x8xf32>
    %c0_95 = arith.constant 0 : index
    %c0_96 = arith.constant 0 : index
    %101 = vector.load %arg7[%c0_95, %c0_96] : memref<1x8xf32, #tpu.memory_space<vmem>>, vector<1x8xf32>
    %102 = vector.broadcast %101 : vector<1x8xf32> to vector<64x8xf32>
    %103 = arith.addf %100, %102 : vector<64x8xf32>
    %104 = arith.addf %96, %103 : vector<64x8xf32>
    %cst_97 = arith.constant 0.000000e+00 : f32
    %105 = vector.broadcast %cst_97 : f32 to vector<64x8xf32>
    %106 = arith.cmpf oge, %104, %105 : vector<64x8xf32>
    %cst_98 = arith.constant 0.00999999977 : f32
    %107 = vector.broadcast %cst_98 : f32 to vector<64x8xf32>
    %108 = arith.mulf %107, %104 : vector<64x8xf32>
    %109 = arith.select %106, %104, %108 : vector<64x8xi1>, vector<64x8xf32>
    %c0_99 = arith.constant 0 : index
    %c0_100 = arith.constant 0 : index
    %c0_101 = arith.constant 0 : index
    %110 = vector.load %arg11[%c0_99, %c0_100, %c0_101] : memref<1x64x8xf32, #tpu.memory_space<vmem>>, vector<1x64x8xf32>
    %111 = vector.shape_cast %110 : vector<1x64x8xf32> to vector<64x8xf32>
    %112 = vector.shape_cast %109 : vector<64x8xf32> to vector<1x64x8xf32>
    tpu.vector_store %arg11[%c0_99, %c0_100, %c0_101], %112 {strides = array<i32>} : memref<1x64x8xf32, #tpu.memory_space<vmem>>, vector<1x64x8xf32>,
    return
  }
  func.func @transform_0(%arg0: i32) -> (i32, i32, i32, i32) {
    %c0_i32 = arith.constant 0 : i32
    %c0_i32_0 = arith.constant 0 : i32
    %c0_i32_1 = arith.constant 0 : i32
    %c0_i32_2 = arith.constant 0 : i32
    return %arg0, %c0_i32, %c0_i32_0, %c0_i32_1 : i32, i32, i32, i32
  }
  func.func @transform_1(%arg0: i32) -> (i32, i32) {
    %c0_i32 = arith.constant 0 : i32
    %c0_i32_0 = arith.constant 0 : i32
    %c0_i32_1 = arith.constant 0 : i32
    return %c0_i32, %c0_i32_0 : i32, i32
  }
  func.func @transform_2(%arg0: i32) -> (i32, i32) {
    %c0_i32 = arith.constant 0 : i32
    %c0_i32_0 = arith.constant 0 : i32
    %c0_i32_1 = arith.constant 0 : i32
    return %c0_i32, %c0_i32_0 : i32, i32
  }
  func.func @transform_3(%arg0: i32) -> (i32, i32) {
    %c0_i32 = arith.constant 0 : i32
    %c0_i32_0 = arith.constant 0 : i32
    %c0_i32_1 = arith.constant 0 : i32
    return %c0_i32, %c0_i32_0 : i32, i32
  }
  func.func @transform_4(%arg0: i32) -> (i32, i32) {
    %c0_i32 = arith.constant 0 : i32
    %c0_i32_0 = arith.constant 0 : i32
    %c0_i32_1 = arith.constant 0 : i32
    return %c0_i32, %c0_i32_0 : i32, i32
  }
  func.func @transform_5(%arg0: i32) -> (i32, i32) {
    %c0_i32 = arith.constant 0 : i32
    %c0_i32_0 = arith.constant 0 : i32
    %c0_i32_1 = arith.constant 0 : i32
    return %c0_i32, %c0_i32_0 : i32, i32
  }
  func.func @transform_6(%arg0: i32) -> (i32, i32) {
    %c0_i32 = arith.constant 0 : i32
    %c0_i32_0 = arith.constant 0 : i32
    %c0_i32_1 = arith.constant 0 : i32
    return %c0_i32, %c0_i32_0 : i32, i32
  }
  func.func @transform_7(%arg0: i32) -> (i32, i32) {
    %c0_i32 = arith.constant 0 : i32
    %c0_i32_0 = arith.constant 0 : i32
    %c0_i32_1 = arith.constant 0 : i32
    return %c0_i32, %c0_i32_0 : i32, i32
  }
  func.func @transform_8(%arg0: i32) -> (i32, i32) {
    %c0_i32 = arith.constant 0 : i32
    %c0_i32_0 = arith.constant 0 : i32
    %c0_i32_1 = arith.constant 0 : i32
    return %c0_i32, %c0_i32_0 : i32, i32
  }
  func.func @transform_9(%arg0: i32) -> (i32, i32, i32) {
    %c0_i32 = arith.constant 0 : i32
    %c0_i32_0 = arith.constant 0 : i32
    %c0_i32_1 = arith.constant 0 : i32
    %c0_i32_2 = arith.constant 0 : i32
    return %c0_i32, %c0_i32_0, %c0_i32_1 : i32, i32, i32
  }
  func.func @transform_10(%arg0: i32) -> (i32, i32, i32) {
    %c0_i32 = arith.constant 0 : i32
    %c0_i32_0 = arith.constant 0 : i32
    %c0_i32_1 = arith.constant 0 : i32
    return %arg0, %c0_i32, %c0_i32_0 : i32, i32, i32
  }
}

</mosaic_0001>

<llo_original>
// kernel: forward.1
$region0: #{forward.1}
  #allocation0 [shape = 'u32[]', space=smem, size = 0x4, offset = 0x4, fixed_abs, tag = 'smem constant byte address 0x4 - core index']
  #allocation1 [shape = 'u32[144,128]{1,0:T(1,128)}', space=vmem, size = 0x12000, scoped, tag = 'internal scratch']
  #allocation2 [shape = 'f32[256,36]{1,0:T(8,128)}', space=vmem, size = 0x20000, scoped, tag = 'scratch operand']
  #allocation3 [shape = 'f32[64,72]{1,0:T(8,128)}', space=vmem, size = 0x8000, scoped, tag = 'scratch operand']
  %s0 = inlined_call_operand.vmem [shape: f32[2,18,18,4], index: 0, kind: input, shape index: {}]
  %s1 = inlined_call_operand.vmem [shape: f32[36,8], index: 1, kind: input, shape index: {}]
  %s2 = inlined_call_operand.vmem [shape: f32[72,8], index: 2, kind: input, shape index: {}]
  %s3 = inlined_call_operand.vmem [shape: f32[36,8], index: 3, kind: input, shape index: {}]
  %s4 = inlined_call_operand.vmem [shape: f32[1,8], index: 4, kind: input, shape index: {}]
  %s5 = inlined_call_operand.vmem [shape: f32[1,8], index: 5, kind: input, shape index: {}]
  %s6 = inlined_call_operand.vmem [shape: f32[1,8], index: 6, kind: input, shape index: {}]
  %s7 = inlined_call_operand.vmem [shape: f32[64,256], index: 7, kind: input, shape index: {}]
  %s8 = inlined_call_operand.vmem [shape: f32[64,256], index: 8, kind: input, shape index: {}]
  %s9 = inlined_call_operand.vmem [shape: f32[9,64,64], index: 9, kind: input, shape index: {}]
  %s10 = inlined_call_operand.vmem [shape: f32[2,64,8], index: 10, kind: output, shape index: {}]
  %s11 = sld [smem:[#allocation0]]
  $region73: #{forward.1} parent=0
    _
  %s13 = ssub.s32 1, %s11
  %s14 = scalar_select 0, %s13, %s11
  loop: start=0, step=1, limit=4
  $region2: #{forward.1} parent=0 // loop_pre_header
    _
  $region3: #{forward.1} parent=0 // loop_header
    %s16 = sphi 0, %s20
    %p17 = scmp.ge.s32.totalorder %s16, 4
    %s26 = sphi 0, %s28
    %s29 = sphi 0, %s26
    %s30 = sphi 0, %s29
    %s46 = sphi 0, %s30
    %s50 = sphi 0, %s50
    %s52 = sphi 0, %s50
    %s53 = sphi 0, %s52
    %s67 = sphi 0, %s53
    %s71 = sphi 0, %s71
    %s73 = sphi 0, %s71
    %s74 = sphi 0, %s73
    %s88 = sphi 0, %s74
    %s92 = sphi 0, %s92
    %s94 = sphi 0, %s92
    %s95 = sphi 0, %s94
    %s109 = sphi 0, %s95
    %s113 = sphi 0, %s113
    %s115 = sphi 0, %s113
    %s116 = sphi 0, %s115
    %s130 = sphi 0, %s116
    %s134 = sphi 0, %s134
    %s136 = sphi 0, %s134
    %s137 = sphi 0, %s136
    %s151 = sphi 0, %s137
    %s155 = sphi 0, %s155
    %s157 = sphi 0, %s155
    %s158 = sphi 0, %s157
    %s172 = sphi 0, %s158
    %s176 = sphi 0, %s176
    %s178 = sphi 0, %s176
    %s179 = sphi 0, %s178
    %s193 = sphi 0, %s179
    %s197 = sphi 0, %s197
    %s199 = sphi 0, %s197
    %s200 = sphi 0, %s199
    %s214 = sphi 0, %s200
    %s218 = sphi 0, %s218
    %s220 = sphi 0, %s218
    %s221 = sphi 0, %s220
    %s235 = sphi 0, %s221
    %s241 = sphi 0, %s243
    %s244 = sphi 0, %s241
    %s245 = sphi 0, %s244
    %s261 = sphi 0, %s245
  $region4: #{forward.1} parent=0 // loop_header_branch
    %19 = sbr.rel (%p17) target = $region8
  $region5: #{forward.1} parent=0 // loop_body
    %s21 = ssub.s32 %s16, 1
    %s22 = ssub.s32 %s16, 2
    %s23 = sadd.s32 %s16, 1
    %s24 = ssub.s32 %s16, %s23
    %p25 = scmp.eq.s32.totalorder %s24, 0
    %s27 = sadd.s32 %s26, 1
    %s28 = scalar_select %p25, %s26, %s27
    %p31 = pneg %p25
    %p32 = scmp.eq.s32.totalorder %s16, 1
    %p33 = por %p31, %p32
    %p34 = scmp.ne.s32.totalorder %s26, %s29
    %p35 = scmp.eq.s32.totalorder %s16, 0
    %p36 = por %p34, %p35
    %p37 = scmp.ne.s32.totalorder %s26, %s29
    %p38 = scmp.eq.s32.totalorder %s21, 1
    %p39 = por %p37, %p38
    %p40 = scmp.ne.s32.totalorder %s29, %s30
    %p41 = scmp.eq.s32.totalorder %s21, 0
    %p42 = por %p40, %p41
    %p43 = scmp.ne.s32.totalorder %s29, %s30
    %p44 = scmp.eq.s32.totalorder %s22, 1
    %p45 = por %p43, %p44
    %p47 = scmp.ne.s32.totalorder %s30, %s46
    %p48 = scmp.eq.s32.totalorder %s22, 0
    %p49 = por %p47, %p48
    %s51 = sadd.s32 %s50, 1
    %p54 = scmp.eq.s32.totalorder %s16, 1
    %p55 = scmp.ne.s32.totalorder %s50, %s52
    %p56 = scmp.eq.s32.totalorder %s16, 0
    %p57 = por %p55, %p56
    %p58 = scmp.ne.s32.totalorder %s50, %s52
    %p59 = scmp.eq.s32.totalorder %s21, 1
    %p60 = por %p58, %p59
    %p61 = scmp.ne.s32.totalorder %s52, %s53
    %p62 = scmp.eq.s32.totalorder %s21, 0
    %p63 = por %p61, %p62
    %p64 = scmp.ne.s32.totalorder %s52, %s53
    %p65 = scmp.eq.s32.totalorder %s22, 1
    %p66 = por %p64, %p65
    %p68 = scmp.ne.s32.totalorder %s53, %s67
    %p69 = scmp.eq.s32.totalorder %s22, 0
    %p70 = por %p68, %p69
    %s72 = sadd.s32 %s71, 1
    %p75 = scmp.eq.s32.totalorder %s16, 1
    %p76 = scmp.ne.s32.totalorder %s71, %s73
    %p77 = scmp.eq.s32.totalorder %s16, 0
    %p78 = por %p76, %p77
    %p79 = scmp.ne.s32.totalorder %s71, %s73
    %p80 = scmp.eq.s32.totalorder %s21, 1
    %p81 = por %p79, %p80
    %p82 = scmp.ne.s32.totalorder %s73, %s74
    %p83 = scmp.eq.s32.totalorder %s21, 0
    %p84 = por %p82, %p83
    %p85 = scmp.ne.s32.totalorder %s73, %s74
    %p86 = scmp.eq.s32.totalorder %s22, 1
    %p87 = por %p85, %p86
    %p89 = scmp.ne.s32.totalorder %s74, %s88
    %p90 = scmp.eq.s32.totalorder %s22, 0
    %p91 = por %p89, %p90
    %s93 = sadd.s32 %s92, 1
    %p96 = scmp.eq.s32.totalorder %s16, 1
    %p97 = scmp.ne.s32.totalorder %s92, %s94
    %p98 = scmp.eq.s32.totalorder %s16, 0
    %p99 = por %p97, %p98
    %p100 = scmp.ne.s32.totalorder %s92, %s94
    %p101 = scmp.eq.s32.totalorder %s21, 1
    %p102 = por %p100, %p101
    %p103 = scmp.ne.s32.totalorder %s94, %s95
    %p104 = scmp.eq.s32.totalorder %s21, 0
    %p105 = por %p103, %p104
    %p106 = scmp.ne.s32.totalorder %s94, %s95
    %p107 = scmp.eq.s32.totalorder %s22, 1
    %p108 = por %p106, %p107
    %p110 = scmp.ne.s32.totalorder %s95, %s109
    %p111 = scmp.eq.s32.totalorder %s22, 0
    %p112 = por %p110, %p111
    %s114 = sadd.s32 %s113, 1
    %p117 = scmp.eq.s32.totalorder %s16, 1
    %p118 = scmp.ne.s32.totalorder %s113, %s115
    %p119 = scmp.eq.s32.totalorder %s16, 0
    %p120 = por %p118, %p119
    %p121 = scmp.ne.s32.totalorder %s113, %s115
    %p122 = scmp.eq.s32.totalorder %s21, 1
    %p123 = por %p121, %p122
    %p124 = scmp.ne.s32.totalorder %s115, %s116
    %p125 = scmp.eq.s32.totalorder %s21, 0
    %p126 = por %p124, %p125
    %p127 = scmp.ne.s32.totalorder %s115, %s116
    %p128 = scmp.eq.s32.totalorder %s22, 1
    %p129 = por %p127, %p128
    %p131 = scmp.ne.s32.totalorder %s116, %s130
    %p132 = scmp.eq.s32.totalorder %s22, 0
    %p133 = por %p131, %p132
    %s135 = sadd.s32 %s134, 1
    %p138 = scmp.eq.s32.totalorder %s16, 1
    %p139 = scmp.ne.s32.totalorder %s134, %s136
    %p140 = scmp.eq.s32.totalorder %s16, 0
    %p141 = por %p139, %p140
    %p142 = scmp.ne.s32.totalorder %s134, %s136
    %p143 = scmp.eq.s32.totalorder %s21, 1
    %p144 = por %p142, %p143
    %p145 = scmp.ne.s32.totalorder %s136, %s137
    %p146 = scmp.eq.s32.totalorder %s21, 0
    %p147 = por %p145, %p146
    %p148 = scmp.ne.s32.totalorder %s136, %s137
    %p149 = scmp.eq.s32.totalorder %s22, 1
    %p150 = por %p148, %p149
    %p152 = scmp.ne.s32.totalorder %s137, %s151
    %p153 = scmp.eq.s32.totalorder %s22, 0
    %p154 = por %p152, %p153
    %s156 = sadd.s32 %s155, 1
    %p159 = scmp.eq.s32.totalorder %s16, 1
    %p160 = scmp.ne.s32.totalorder %s155, %s157
    %p161 = scmp.eq.s32.totalorder %s16, 0
    %p162 = por %p160, %p161
    %p163 = scmp.ne.s32.totalorder %s155, %s157
    %p164 = scmp.eq.s32.totalorder %s21, 1
    %p165 = por %p163, %p164
    %p166 = scmp.ne.s32.totalorder %s157, %s158
    %p167 = scmp.eq.s32.totalorder %s21, 0
    %p168 = por %p166, %p167
    %p169 = scmp.ne.s32.totalorder %s157, %s158
    %p170 = scmp.eq.s32.totalorder %s22, 1
    %p171 = por %p169, %p170
    %p173 = scmp.ne.s32.totalorder %s158, %s172
    %p174 = scmp.eq.s32.totalorder %s22, 0
    %p175 = por %p173, %p174
    %s177 = sadd.s32 %s176, 1
    %p180 = scmp.eq.s32.totalorder %s16, 1
    %p181 = scmp.ne.s32.totalorder %s176, %s178
    %p182 = scmp.eq.s32.totalorder %s16, 0
    %p183 = por %p181, %p182
    %p184 = scmp.ne.s32.totalorder %s176, %s178
    %p185 = scmp.eq.s32.totalorder %s21, 1
    %p186 = por %p184, %p185
    %p187 = scmp.ne.s32.totalorder %s178, %s179
    %p188 = scmp.eq.s32.totalorder %s21, 0
    %p189 = por %p187, %p188
    %p190 = scmp.ne.s32.totalorder %s178, %s179
    %p191 = scmp.eq.s32.totalorder %s22, 1
    %p192 = por %p190, %p191
    %p194 = scmp.ne.s32.totalorder %s179, %s193
    %p195 = scmp.eq.s32.totalorder %s22, 0
    %p196 = por %p194, %p195
    %s198 = sadd.s32 %s197, 1
    %p201 = scmp.eq.s32.totalorder %s16, 1
    %p202 = scmp.ne.s32.totalorder %s197, %s199
    %p203 = scmp.eq.s32.totalorder %s16, 0
    %p204 = por %p202, %p203
    %p205 = scmp.ne.s32.totalorder %s197, %s199
    %p206 = scmp.eq.s32.totalorder %s21, 1
    %p207 = por %p205, %p206
    %p208 = scmp.ne.s32.totalorder %s199, %s200
    %p209 = scmp.eq.s32.totalorder %s21, 0
    %p210 = por %p208, %p209
    %p211 = scmp.ne.s32.totalorder %s199, %s200
    %p212 = scmp.eq.s32.totalorder %s22, 1
    %p213 = por %p211, %p212
    %p215 = scmp.ne.s32.totalorder %s200, %s214
    %p216 = scmp.eq.s32.totalorder %s22, 0
    %p217 = por %p215, %p216
    %s219 = sadd.s32 %s218, 1
    %p222 = scmp.eq.s32.totalorder %s16, 1
    %p223 = scmp.ne.s32.totalorder %s218, %s220
    %p224 = scmp.eq.s32.totalorder %s16, 0
    %p225 = por %p223, %p224
    %p226 = scmp.ne.s32.totalorder %s218, %s220
    %p227 = scmp.eq.s32.totalorder %s21, 1
    %p228 = por %p226, %p227
    %p229 = scmp.ne.s32.totalorder %s220, %s221
    %p230 = scmp.eq.s32.totalorder %s21, 0
    %p231 = por %p229, %p230
    %p232 = scmp.ne.s32.totalorder %s220, %s221
    %p233 = scmp.eq.s32.totalorder %s22, 1
    %p234 = por %p232, %p233
    %p236 = scmp.ne.s32.totalorder %s221, %s235
    %p237 = scmp.eq.s32.totalorder %s22, 0
    %p238 = por %p236, %p237
    %s239 = ssub.s32 %s16, %s23
    %p240 = scmp.eq.s32.totalorder %s239, 0
    %s242 = sadd.s32 %s241, 1
    %s243 = scalar_select %p240, %s241, %s242
    %p246 = pneg %p240
    %p247 = scmp.eq.s32.totalorder %s16, 1
    %p248 = por %p246, %p247
    %p249 = scmp.ne.s32.totalorder %s241, %s244
    %p250 = scmp.eq.s32.totalorder %s16, 0
    %p251 = por %p249, %p250
    %p252 = scmp.ne.s32.totalorder %s241, %s244
    %p253 = scmp.eq.s32.totalorder %s21, 1
    %p254 = por %p252, %p253
    %p255 = scmp.ne.s32.totalorder %s244, %s245
    %p256 = scmp.eq.s32.totalorder %s21, 0
    %p257 = por %p255, %p256
    %p258 = scmp.ne.s32.totalorder %s244, %s245
    %p259 = scmp.eq.s32.totalorder %s22, 1
    %p260 = por %p258, %p259
    %p262 = scmp.ne.s32.totalorder %s245, %s261
    %p263 = scmp.eq.s32.totalorder %s22, 0
    %p264 = por %p262, %p263
    %p265 = scmp.le.s32.totalorder 1, %s16
    %p266 = scmp.lt.s32.totalorder %s16, 3
    %p267 = pnand %p265, %p266
    %p268 = pneg %p267
    // Predicated region
    $region9: #{forward.1} parent=5 // pred_check
      _
    $region10: #{forward.1} parent=5 // pred_check_branch
      %270 = sbr.rel (%p267) target = $region12
    $region11: #{forward.1} parent=5 // pred_region
      %s271 = ssub.s32 %s16, 1
      // Predicated region
      $region13: #{forward.1} parent=11 // pred_check
        %p272 = pneg %p63
      $region14: #{forward.1} parent=11 // pred_check_branch
        %274 = sbr.rel (%p272) target = $region16
      $region15: #{forward.1} parent=11 // pred_region
        _
      $region16: #{forward.1} parent=11 // pred_fallthru
        _
      // Predicated region
      $region17: #{forward.1} parent=11 // pred_check
        %p275 = pneg %p84
      $region18: #{forward.1} parent=11 // pred_check_branch
        %277 = sbr.rel (%p275) target = $region20
      $region19: #{forward.1} parent=11 // pred_region
        _
      $region20: #{forward.1} parent=11 // pred_fallthru
        _
      // Predicated region
      $region21: #{forward.1} parent=11 // pred_check
        %p278 = pneg %p105
      $region22: #{forward.1} parent=11 // pred_check_branch
        %280 = sbr.rel (%p278) target = $region24
      $region23: #{forward.1} parent=11 // pred_region
        _
      $region24: #{forward.1} parent=11 // pred_fallthru
        _
      // Predicated region
      $region25: #{forward.1} parent=11 // pred_check
        %p281 = pneg %p126
      $region26: #{forward.1} parent=11 // pred_check_branch
        %283 = sbr.rel (%p281) target = $region28
      $region27: #{forward.1} parent=11 // pred_region
        _
      $region28: #{forward.1} parent=11 // pred_fallthru
        _
      // Predicated region
      $region29: #{forward.1} parent=11 // pred_check
        %p284 = pneg %p147
      $region30: #{forward.1} parent=11 // pred_check_branch
        %286 = sbr.rel (%p284) target = $region32
      $region31: #{forward.1} parent=11 // pred_region
        _
      $region32: #{forward.1} parent=11 // pred_fallthru
        _
      // Predicated region
      $region33: #{forward.1} parent=11 // pred_check
        %p287 = pneg %p168
      $region34: #{forward.1} parent=11 // pred_check_branch
        %289 = sbr.rel (%p287) target = $region36
      $region35: #{forward.1} parent=11 // pred_region
        _
      $region36: #{forward.1} parent=11 // pred_fallthru
        _
      // Predicated region
      $region37: #{forward.1} parent=11 // pred_check
        %p290 = pneg %p189
      $region38: #{forward.1} parent=11 // pred_check_branch
        %292 = sbr.rel (%p290) target = $region40
      $region39: #{forward.1} parent=11 // pred_region
        _
      $region40: #{forward.1} parent=11 // pred_fallthru
        _
      // Predicated region
      $region41: #{forward.1} parent=11 // pred_check
        %p293 = pneg %p210
      $region42: #{forward.1} parent=11 // pred_check_branch
        %295 = sbr.rel (%p293) target = $region44
      $region43: #{forward.1} parent=11 // pred_region
        _
      $region44: #{forward.1} parent=11 // pred_fallthru
        _
      // Predicated region
      $region45: #{forward.1} parent=11 // pred_check
        %p296 = pneg %p231
      $region46: #{forward.1} parent=11 // pred_check_branch
        %298 = sbr.rel (%p296) target = $region48
      $region47: #{forward.1} parent=11 // pred_region
        _
      $region48: #{forward.1} parent=11 // pred_fallthru
        _
    $region12: #{forward.1} parent=5 // pred_fallthru
      _
    %p299 = scmp.lt.s32.totalorder %s16, 2
    // Predicated region
    $region49: #{forward.1} parent=5 // pred_check
      %p300 = pneg %p299
    $region50: #{forward.1} parent=5 // pred_check_branch
      %302 = sbr.rel (%p300) target = $region52
    $region51: #{forward.1} parent=5 // pred_region
      // Predicated region
      $region53: #{forward.1} parent=51 // pred_check
        %p303 = pneg %p36
      $region54: #{forward.1} parent=51 // pred_check_branch
        %305 = sbr.rel (%p303) target = $region56
      $region55: #{forward.1} parent=51 // pred_region
        %p306 = scmp.lt.s32.totalorder %s16, 1
        %s307 = scalar_select %p306, %s16, 1
        %s308 = smul.addr %s307, 54
        %s309 = smul.addr %s308, 8
        %s310 = scalar_lea.vmem %s0, %s309
      $region56: #{forward.1} parent=51 // pred_fallthru
        _
    $region52: #{forward.1} parent=5 // pred_fallthru
      _
    %p311 = scmp.le.s32.totalorder 1, %s16
    %p312 = scmp.lt.s32.totalorder %s16, 3
    %p313 = pnand %p311, %p312
    %p314 = pneg %p313
    // Predicated region
    $region57: #{forward.1} parent=5 // pred_check
      _
    $region58: #{forward.1} parent=5 // pred_check_branch
      %316 = sbr.rel (%p313) target = $region60
    $region59: #{forward.1} parent=5 // pred_region
      %s317 = ssub.s32 %s16, 1
      %p318 = scmp.lt.s32.totalorder %s21, 1
      %s319 = scalar_select %p318, %s21, 1
      %s320 = smul.addr %s319, 54
      %s321 = smul.addr %s320, 8
      %s322 = scalar_lea.vmem %s0, %s321
      %p323 = pneg %p42
      %p324 = pneg %p39
      %p325 = pneg %p63
      %p326 = pneg %p60
      %p327 = pneg %p84
      %p328 = pneg %p81
      %p329 = pneg %p105
      %p330 = pneg %p102
      %p331 = pneg %p126
      %p332 = pneg %p123
      %p333 = pneg %p147
      %p334 = pneg %p144
      %p335 = pneg %p168
      %p336 = pneg %p165
      %p337 = pneg %p189
      %p338 = pneg %p186
      %p339 = pneg %p210
      %p340 = pneg %p207
      %p341 = pneg %p231
      %p342 = pneg %p228
      %p343 = pneg %p257
      %p344 = pneg %p254
      %p345 = scmp.lt.s32.totalorder %s21, 1
      %s346 = scalar_select %p345, %s21, 1
      %s347 = smul.addr %s346, 8
      %s348 = smul.addr %s347, 8
      %s349 = scalar_lea.vmem %s10, %s348
      %p350 = scmp.lt.s32.totalorder %s21, 1
      %s351 = scalar_select %p350, %s21, 1
      %s352 = smul.addr %s351, 54
      %s353 = smul.addr %s352, 8
      %s354 = scalar_lea.vmem %s0, %s353
      %p355 = scmp.lt.s32.totalorder %s21, 1
      %s356 = scalar_select %p355, %s21, 1
      %s357 = smul.addr %s356, 8
      %s358 = smul.addr %s357, 8
      %s359 = scalar_lea.vmem %s10, %s358
      %v360 = vld [vmem:[%s354] sm:$0xff]
      %v361 = vld [vmem:[%s354 + $0x8] sm:$0xff]
      %v362 = vld [vmem:[%s354 + $0x18] sm:$0xff]
      %v363 = vld [vmem:[%s354 + $0x20] sm:$0xff]
      %v364 = vld [vmem:[%s354 + $0x30] sm:$0xff]
      %v365 = vld [vmem:[%s354 + $0x38] sm:$0xff]
      %v366 = vld [vmem:[%s354 + $0x48] sm:$0xff]
      %v367 = vld [vmem:[%s354 + $0x50] sm:$0xff]
      %v368 = vld [vmem:[%s354 + $0x60] sm:$0xff]
      %v369 = vld [vmem:[%s354 + $0x68] sm:$0xff]
      %v370 = vld [vmem:[%s354 + $0x78] sm:$0xff]
      %v371 = vld [vmem:[%s354 + $0x80] sm:$0xff]
      %v372 = vld [vmem:[%s354 + $0x90] sm:$0xff]
      %v373 = vld [vmem:[%s354 + $0x98] sm:$0xff]
      %v374 = vld [vmem:[%s354 + $0xa8] sm:$0xff]
      %v375 = vld [vmem:[%s354 + $0xb0] sm:$0xff]
      %v376 = vld [vmem:[%s354 + $0xc0] sm:$0xff]
      %v377 = vld [vmem:[%s354 + $0xc8] sm:$0xff]
      %v378 = vld [vmem:[%s354 + $0xd8] sm:$0xff]
      %v379 = vld [vmem:[%s354 + $0xe0] sm:$0xff]
      %v380 = vld [vmem:[%s354 + $0xf0] sm:$0xff]
      %v381 = vld [vmem:[%s354 + $0xf8] sm:$0xff]
      %v382 = vld [vmem:[%s354 + $0x108] sm:$0xff]
      %v383 = vld [vmem:[%s354 + $0x110] sm:$0xff]
      %v384 = vld [vmem:[%s354 + $0x120] sm:$0xff]
      %v385 = vld [vmem:[%s354 + $0x128] sm:$0xff]
      %v386 = vld [vmem:[%s354 + $0x138] sm:$0xff]
      %v387 = vld [vmem:[%s354 + $0x140] sm:$0xff]
      %v388 = vld [vmem:[%s354 + $0x150] sm:$0xff]
      %v389 = vld [vmem:[%s354 + $0x158] sm:$0xff]
      %v390 = vld [vmem:[%s354 + $0x168] sm:$0xff]
      %v391 = vld [vmem:[%s354 + $0x170] sm:$0xff]
      %vm392 = vcmask 31744
      %393 = vst.msk [vmem:[#allocation2] sm:$0xff] %vm392, %v360
      %394 = vst.msk [vmem:[#allocation2 + $0x8] sm:$0xff] %vm392, %v361
      %395 = vst.msk [vmem:[#allocation2 + $0x10] sm:$0xff] %vm392, %v362
      %396 = vst.msk [vmem:[#allocation2 + $0x18] sm:$0xff] %vm392, %v363
      %397 = vst.msk [vmem:[#allocation2 + $0x20] sm:$0xff] %vm392, %v364
      %398 = vst.msk [vmem:[#allocation2 + $0x28] sm:$0xff] %vm392, %v365
      %399 = vst.msk [vmem:[#allocation2 + $0x30] sm:$0xff] %vm392, %v366
      %400 = vst.msk [vmem:[#allocation2 + $0x38] sm:$0xff] %vm392, %v367
      %401 = vst.msk [vmem:[#allocation2 + $0x40] sm:$0xff] %vm392, %v368
      %402 = vst.msk [vmem:[#allocation2 + $0x48] sm:$0xff] %vm392, %v369
      %403 = vst.msk [vmem:[#allocation2 + $0x50] sm:$0xff] %vm392, %v370
      %404 = vst.msk [vmem:[#allocation2 + $0x58] sm:$0xff] %vm392, %v371
      %405 = vst.msk [vmem:[#allocation2 + $0x60] sm:$0xff] %vm392, %v372
      %406 = vst.msk [vmem:[#allocation2 + $0x68] sm:$0xff] %vm392, %v373
      %407 = vst.msk [vmem:[#allocation2 + $0x70] sm:$0xff] %vm392, %v374
      %408 = vst.msk [vmem:[#allocation2 + $0x78] sm:$0xff] %vm392, %v375
      %409 = vst.msk [vmem:[#allocation2 + $0x80] sm:$0xff] %vm392, %v376
      %410 = vst.msk [vmem:[#allocation2 + $0x88] sm:$0xff] %vm392, %v377
      %411 = vst.msk [vmem:[#allocation2 + $0x90] sm:$0xff] %vm392, %v378
      %412 = vst.msk [vmem:[#allocation2 + $0x98] sm:$0xff] %vm392, %v379
      %413 = vst.msk [vmem:[#allocation2 + $0xa0] sm:$0xff] %vm392, %v380
      %414 = vst.msk [vmem:[#allocation2 + $0xa8] sm:$0xff] %vm392, %v381
      %415 = vst.msk [vmem:[#allocation2 + $0xb0] sm:$0xff] %vm392, %v382
      %416 = vst.msk [vmem:[#allocation2 + $0xb8] sm:$0xff] %vm392, %v383
      %417 = vst.msk [vmem:[#allocation2 + $0xc0] sm:$0xff] %vm392, %v384
      %418 = vst.msk [vmem:[#allocation2 + $0xc8] sm:$0xff] %vm392, %v385
      %419 = vst.msk [vmem:[#allocation2 + $0xd0] sm:$0xff] %vm392, %v386
      %420 = vst.msk [vmem:[#allocation2 + $0xd8] sm:$0xff] %vm392, %v387
      %421 = vst.msk [vmem:[#allocation2 + $0xe0] sm:$0xff] %vm392, %v388
      %422 = vst.msk [vmem:[#allocation2 + $0xe8] sm:$0xff] %vm392, %v389
      %423 = vst.msk [vmem:[#allocation2 + $0xf0] sm:$0xff] %vm392, %v390
      %424 = vst.msk [vmem:[#allocation2 + $0xf8] sm:$0xff] %vm392, %v391
      %v425 = vld [vmem:[%s354 + $0x1] sm:$0xff]
      %v426 = vld [vmem:[%s354 + $0x9] sm:$0xff]
      %v427 = vld [vmem:[%s354 + $0x19] sm:$0xff]
      %v428 = vld [vmem:[%s354 + $0x21] sm:$0xff]
      %v429 = vld [vmem:[%s354 + $0x31] sm:$0xff]
      %v430 = vld [vmem:[%s354 + $0x39] sm:$0xff]
      %v431 = vld [vmem:[%s354 + $0x49] sm:$0xff]
      %v432 = vld [vmem:[%s354 + $0x51] sm:$0xff]
      %v433 = vld [vmem:[%s354 + $0x61] sm:$0xff]
      %v434 = vld [vmem:[%s354 + $0x69] sm:$0xff]
      %v435 = vld [vmem:[%s354 + $0x79] sm:$0xff]
      %v436 = vld [vmem:[%s354 + $0x81] sm:$0xff]
      %v437 = vld [vmem:[%s354 + $0x91] sm:$0xff]
      %v438 = vld [vmem:[%s354 + $0x99] sm:$0xff]
      %v439 = vld [vmem:[%s354 + $0xa9] sm:$0xff]
      %v440 = vld [vmem:[%s354 + $0xb1] sm:$0xff]
      %v441 = vld [vmem:[%s354 + $0xc1] sm:$0xff]
      %v442 = vld [vmem:[%s354 + $0xc9] sm:$0xff]
      %v443 = vld [vmem:[%s354 + $0xd9] sm:$0xff]
      %v444 = vld [vmem:[%s354 + $0xe1] sm:$0xff]
      %v445 = vld [vmem:[%s354 + $0xf1] sm:$0xff]
      %v446 = vld [vmem:[%s354 + $0xf9] sm:$0xff]
      %v447 = vld [vmem:[%s354 + $0x109] sm:$0xff]
      %v448 = vld [vmem:[%s354 + $0x111] sm:$0xff]
      %v449 = vld [vmem:[%s354 + $0x121] sm:$0xff]
      %v450 = vld [vmem:[%s354 + $0x129] sm:$0xff]
      %v451 = vld [vmem:[%s354 + $0x139] sm:$0xff]
      %v452 = vld [vmem:[%s354 + $0x141] sm:$0xff]
      %v453 = vld [vmem:[%s354 + $0x151] sm:$0xff]
      %v454 = vld [vmem:[%s354 + $0x159] sm:$0xff]
      %v455 = vld [vmem:[%s354 + $0x169] sm:$0xff]
      %v456 = vld [vmem:[%s354 + $0x171] sm:$0xff]
      %489 = vrot.lane.b32.xlu0 %v425, 4
      %v490 = vpop.permute.xlu0 %489
      %491 = vrot.lane.b32.xlu0 %v426, 4
      %v492 = vpop.permute.xlu0 %491
      %493 = vrot.lane.b32.xlu0 %v427, 4
      %v494 = vpop.permute.xlu0 %493
      %495 = vrot.lane.b32.xlu0 %v428, 4
      %v496 = vpop.permute.xlu0 %495
      %497 = vrot.lane.b32.xlu0 %v429, 4
      %v498 = vpop.permute.xlu0 %497
      %499 = vrot.lane.b32.xlu0 %v430, 4
      %v500 = vpop.permute.xlu0 %499
      %501 = vrot.lane.b32.xlu0 %v431, 4
      %v502 = vpop.permute.xlu0 %501
      %503 = vrot.lane.b32.xlu0 %v432, 4
      %v504 = vpop.permute.xlu0 %503
      %505 = vrot.lane.b32.xlu0 %v433, 4
      %v506 = vpop.permute.xlu0 %505
      %507 = vrot.lane.b32.xlu0 %v434, 4
      %v508 = vpop.permute.xlu0 %507
      %509 = vrot.lane.b32.xlu0 %v435, 4
      %v510 = vpop.permute.xlu0 %509
      %511 = vrot.lane.b32.xlu0 %v436, 4
      %v512 = vpop.permute.xlu0 %511
      %513 = vrot.lane.b32.xlu0 %v437, 4
      %v514 = vpop.permute.xlu0 %513
      %515 = vrot.lane.b32.xlu0 %v438, 4
      %v516 = vpop.permute.xlu0 %515
      %517 = vrot.lane.b32.xlu0 %v439, 4
      %v518 = vpop.permute.xlu0 %517
      %519 = vrot.lane.b32.xlu0 %v440, 4
      %v520 = vpop.permute.xlu0 %519
      %521 = vrot.lane.b32.xlu0 %v441, 4
      %v522 = vpop.permute.xlu0 %521
      %523 = vrot.lane.b32.xlu0 %v442, 4
      %v524 = vpop.permute.xlu0 %523
      %525 = vrot.lane.b32.xlu0 %v443, 4
      %v526 = vpop.permute.xlu0 %525
      %527 = vrot.lane.b32.xlu0 %v444, 4
      %v528 = vpop.permute.xlu0 %527
      %529 = vrot.lane.b32.xlu0 %v445, 4
      %v530 = vpop.permute.xlu0 %529
      %531 = vrot.lane.b32.xlu0 %v446, 4
      %v532 = vpop.permute.xlu0 %531
      %533 = vrot.lane.b32.xlu0 %v447, 4
      %v534 = vpop.permute.xlu0 %533
      %535 = vrot.lane.b32.xlu0 %v448, 4
      %v536 = vpop.permute.xlu0 %535
      %537 = vrot.lane.b32.xlu0 %v449, 4
      %v538 = vpop.permute.xlu0 %537
      %539 = vrot.lane.b32.xlu0 %v450, 4
      %v540 = vpop.permute.xlu0 %539
      %541 = vrot.lane.b32.xlu0 %v451, 4
      %v542 = vpop.permute.xlu0 %541
      %543 = vrot.lane.b32.xlu0 %v452, 4
      %v544 = vpop.permute.xlu0 %543
      %545 = vrot.lane.b32.xlu0 %v453, 4
      %v546 = vpop.permute.xlu0 %545
      %547 = vrot.lane.b32.xlu0 %v454, 4
      %v548 = vpop.permute.xlu0 %547
      %549 = vrot.lane.b32.xlu0 %v455, 4
      %v550 = vpop.permute.xlu0 %549
      %551 = vrot.lane.b32.xlu0 %v456, 4
      %v552 = vpop.permute.xlu0 %551
      %vm585 = vcmask 64544
      %586 = vst.msk [vmem:[#allocation2] sm:$0xff] %vm585, %v490
      %587 = vst.msk [vmem:[#allocation2 + $0x8] sm:$0xff] %vm585, %v492
      %588 = vst.msk [vmem:[#allocation2 + $0x10] sm:$0xff] %vm585, %v494
      %589 = vst.msk [vmem:[#allocation2 + $0x18] sm:$0xff] %vm585, %v496
      %590 = vst.msk [vmem:[#allocation2 + $0x20] sm:$0xff] %vm585, %v498
      %591 = vst.msk [vmem:[#allocation2 + $0x28] sm:$0xff] %vm585, %v500
      %592 = vst.msk [vmem:[#allocation2 + $0x30] sm:$0xff] %vm585, %v502
      %593 = vst.msk [vmem:[#allocation2 + $0x38] sm:$0xff] %vm585, %v504
      %594 = vst.msk [vmem:[#allocation2 + $0x40] sm:$0xff] %vm585, %v506
      %595 = vst.msk [vmem:[#allocation2 + $0x48] sm:$0xff] %vm585, %v508
      %596 = vst.msk [vmem:[#allocation2 + $0x50] sm:$0xff] %vm585, %v510
      %597 = vst.msk [vmem:[#allocation2 + $0x58] sm:$0xff] %vm585, %v512
      %598 = vst.msk [vmem:[#allocation2 + $0x60] sm:$0xff] %vm585, %v514
      %599 = vst.msk [vmem:[#allocation2 + $0x68] sm:$0xff] %vm585, %v516
      %600 = vst.msk [vmem:[#allocation2 + $0x70] sm:$0xff] %vm585, %v518
      %601 = vst.msk [vmem:[#allocation2 + $0x78] sm:$0xff] %vm585, %v520
      %602 = vst.msk [vmem:[#allocation2 + $0x80] sm:$0xff] %vm585, %v522
      %603 = vst.msk [vmem:[#allocation2 + $0x88] sm:$0xff] %vm585, %v524
      %604 = vst.msk [vmem:[#allocation2 + $0x90] sm:$0xff] %vm585, %v526
      %605 = vst.msk [vmem:[#allocation2 + $0x98] sm:$0xff] %vm585, %v528
      %606 = vst.msk [vmem:[#allocation2 + $0xa0] sm:$0xff] %vm585, %v530
      %607 = vst.msk [vmem:[#allocation2 + $0xa8] sm:$0xff] %vm585, %v532
      %608 = vst.msk [vmem:[#allocation2 + $0xb0] sm:$0xff] %vm585, %v534
      %609 = vst.msk [vmem:[#allocation2 + $0xb8] sm:$0xff] %vm585, %v536
      %610 = vst.msk [vmem:[#allocation2 + $0xc0] sm:$0xff] %vm585, %v538
      %611 = vst.msk [vmem:[#allocation2 + $0xc8] sm:$0xff] %vm585, %v540
      %612 = vst.msk [vmem:[#allocation2 + $0xd0] sm:$0xff] %vm585, %v542
      %613 = vst.msk [vmem:[#allocation2 + $0xd8] sm:$0xff] %vm585, %v544
      %614 = vst.msk [vmem:[#allocation2 + $0xe0] sm:$0xff] %vm585, %v546
      %615 = vst.msk [vmem:[#allocation2 + $0xe8] sm:$0xff] %vm585, %v548
      %616 = vst.msk [vmem:[#allocation2 + $0xf0] sm:$0xff] %vm585, %v550
      %617 = vst.msk [vmem:[#allocation2 + $0xf8] sm:$0xff] %vm585, %v552
      %v618 = vld [vmem:[%s354 + $0x2] sm:$0xff]
      %v619 = vld [vmem:[%s354 + $0xa] sm:$0xff]
      %v620 = vld [vmem:[%s354 + $0x1a] sm:$0xff]
      %v621 = vld [vmem:[%s354 + $0x22] sm:$0xff]
      %v622 = vld [vmem:[%s354 + $0x32] sm:$0xff]
      %v623 = vld [vmem:[%s354 + $0x3a] sm:$0xff]
      %v624 = vld [vmem:[%s354 + $0x4a] sm:$0xff]
      %v625 = vld [vmem:[%s354 + $0x52] sm:$0xff]
      %v626 = vld [vmem:[%s354 + $0x62] sm:$0xff]
      %v627 = vld [vmem:[%s354 + $0x6a] sm:$0xff]
      %v628 = vld [vmem:[%s354 + $0x7a] sm:$0xff]
      %v629 = vld [vmem:[%s354 + $0x82] sm:$0xff]
      %v630 = vld [vmem:[%s354 + $0x92] sm:$0xff]
      %v631 = vld [vmem:[%s354 + $0x9a] sm:$0xff]
      %v632 = vld [vmem:[%s354 + $0xaa] sm:$0xff]
      %v633 = vld [vmem:[%s354 + $0xb2] sm:$0xff]
      %v634 = vld [vmem:[%s354 + $0xc2] sm:$0xff]
      %v635 = vld [vmem:[%s354 + $0xca] sm:$0xff]
      %v636 = vld [vmem:[%s354 + $0xda] sm:$0xff]
      %v637 = vld [vmem:[%s354 + $0xe2] sm:$0xff]
      %v638 = vld [vmem:[%s354 + $0xf2] sm:$0xff]
      %v639 = vld [vmem:[%s354 + $0xfa] sm:$0xff]
      %v640 = vld [vmem:[%s354 + $0x10a] sm:$0xff]
      %v641 = vld [vmem:[%s354 + $0x112] sm:$0xff]
      %v642 = vld [vmem:[%s354 + $0x122] sm:$0xff]
      %v643 = vld [vmem:[%s354 + $0x12a] sm:$0xff]
      %v644 = vld [vmem:[%s354 + $0x13a] sm:$0xff]
      %v645 = vld [vmem:[%s354 + $0x142] sm:$0xff]
      %v646 = vld [vmem:[%s354 + $0x152] sm:$0xff]
      %v647 = vld [vmem:[%s354 + $0x15a] sm:$0xff]
      %v648 = vld [vmem:[%s354 + $0x16a] sm:$0xff]
      %v649 = vld [vmem:[%s354 + $0x172] sm:$0xff]
      %682 = vrot.lane.b32.xlu0 %v618, 8
      %v683 = vpop.permute.xlu0 %682
      %684 = vrot.lane.b32.xlu0 %v619, 8
      %v685 = vpop.permute.xlu0 %684
      %686 = vrot.lane.b32.xlu0 %v620, 8
      %v687 = vpop.permute.xlu0 %686
      %688 = vrot.lane.b32.xlu0 %v621, 8
      %v689 = vpop.permute.xlu0 %688
      %690 = vrot.lane.b32.xlu0 %v622, 8
      %v691 = vpop.permute.xlu0 %690
      %692 = vrot.lane.b32.xlu0 %v623, 8
      %v693 = vpop.permute.xlu0 %692
      %694 = vrot.lane.b32.xlu0 %v624, 8
      %v695 = vpop.permute.xlu0 %694
      %696 = vrot.lane.b32.xlu0 %v625, 8
      %v697 = vpop.permute.xlu0 %696
      %698 = vrot.lane.b32.xlu0 %v626, 8
      %v699 = vpop.permute.xlu0 %698
      %700 = vrot.lane.b32.xlu0 %v627, 8
      %v701 = vpop.permute.xlu0 %700
      %702 = vrot.lane.b32.xlu0 %v628, 8
      %v703 = vpop.permute.xlu0 %702
      %704 = vrot.lane.b32.xlu0 %v629, 8
      %v705 = vpop.permute.xlu0 %704
      %706 = vrot.lane.b32.xlu0 %v630, 8
      %v707 = vpop.permute.xlu0 %706
      %708 = vrot.lane.b32.xlu0 %v631, 8
      %v709 = vpop.permute.xlu0 %708
      %710 = vrot.lane.b32.xlu0 %v632, 8
      %v711 = vpop.permute.xlu0 %710
      %712 = vrot.lane.b32.xlu0 %v633, 8
      %v713 = vpop.permute.xlu0 %712
      %714 = vrot.lane.b32.xlu0 %v634, 8
      %v715 = vpop.permute.xlu0 %714
      %716 = vrot.lane.b32.xlu0 %v635, 8
      %v717 = vpop.permute.xlu0 %716
      %718 = vrot.lane.b32.xlu0 %v636, 8
      %v719 = vpop.permute.xlu0 %718
      %720 = vrot.lane.b32.xlu0 %v637, 8
      %v721 = vpop.permute.xlu0 %720
      %722 = vrot.lane.b32.xlu0 %v638, 8
      %v723 = vpop.permute.xlu0 %722
      %724 = vrot.lane.b32.xlu0 %v639, 8
      %v725 = vpop.permute.xlu0 %724
      %726 = vrot.lane.b32.xlu0 %v640, 8
      %v727 = vpop.permute.xlu0 %726
      %728 = vrot.lane.b32.xlu0 %v641, 8
      %v729 = vpop.permute.xlu0 %728
      %730 = vrot.lane.b32.xlu0 %v642, 8
      %v731 = vpop.permute.xlu0 %730
      %732 = vrot.lane.b32.xlu0 %v643, 8
      %v733 = vpop.permute.xlu0 %732
      %734 = vrot.lane.b32.xlu0 %v644, 8
      %v735 = vpop.permute.xlu0 %734
      %736 = vrot.lane.b32.xlu0 %v645, 8
      %v737 = vpop.permute.xlu0 %736
      %738 = vrot.lane.b32.xlu0 %v646, 8
      %v739 = vpop.permute.xlu0 %738
      %740 = vrot.lane.b32.xlu0 %v647, 8
      %v741 = vpop.permute.xlu0 %740
      %742 = vrot.lane.b32.xlu0 %v648, 8
      %v743 = vpop.permute.xlu0 %742
      %744 = vrot.lane.b32.xlu0 %v649, 8
      %v745 = vpop.permute.xlu0 %744
      %vm778 = vcmask 97344
      %779 = vst.msk [vmem:[#allocation2] sm:$0xff] %vm778, %v683
      %780 = vst.msk [vmem:[#allocation2 + $0x8] sm:$0xff] %vm778, %v685
      %781 = vst.msk [vmem:[#allocation2 + $0x10] sm:$0xff] %vm778, %v687
      %782 = vst.msk [vmem:[#allocation2 + $0x18] sm:$0xff] %vm778, %v689
      %783 = vst.msk [vmem:[#allocation2 + $0x20] sm:$0xff] %vm778, %v691
      %784 = vst.msk [vmem:[#allocation2 + $0x28] sm:$0xff] %vm778, %v693
      %785 = vst.msk [vmem:[#allocation2 + $0x30] sm:$0xff] %vm778, %v695
      %786 = vst.msk [vmem:[#allocation2 + $0x38] sm:$0xff] %vm778, %v697
      %787 = vst.msk [vmem:[#allocation2 + $0x40] sm:$0xff] %vm778, %v699
      %788 = vst.msk [vmem:[#allocation2 + $0x48] sm:$0xff] %vm778, %v701
      %789 = vst.msk [vmem:[#allocation2 + $0x50] sm:$0xff] %vm778, %v703
      %790 = vst.msk [vmem:[#allocation2 + $0x58] sm:$0xff] %vm778, %v705
      %791 = vst.msk [vmem:[#allocation2 + $0x60] sm:$0xff] %vm778, %v707
      %792 = vst.msk [vmem:[#allocation2 + $0x68] sm:$0xff] %vm778, %v709
      %793 = vst.msk [vmem:[#allocation2 + $0x70] sm:$0xff] %vm778, %v711
      %794 = vst.msk [vmem:[#allocation2 + $0x78] sm:$0xff] %vm778, %v713
      %795 = vst.msk [vmem:[#allocation2 + $0x80] sm:$0xff] %vm778, %v715
      %796 = vst.msk [vmem:[#allocation2 + $0x88] sm:$0xff] %vm778, %v717
      %797 = vst.msk [vmem:[#allocation2 + $0x90] sm:$0xff] %vm778, %v719
      %798 = vst.msk [vmem:[#allocation2 + $0x98] sm:$0xff] %vm778, %v721
      %799 = vst.msk [vmem:[#allocation2 + $0xa0] sm:$0xff] %vm778, %v723
      %800 = vst.msk [vmem:[#allocation2 + $0xa8] sm:$0xff] %vm778, %v725
      %801 = vst.msk [vmem:[#allocation2 + $0xb0] sm:$0xff] %vm778, %v727
      %802 = vst.msk [vmem:[#allocation2 + $0xb8] sm:$0xff] %vm778, %v729
      %803 = vst.msk [vmem:[#allocation2 + $0xc0] sm:$0xff] %vm778, %v731
      %804 = vst.msk [vmem:[#allocation2 + $0xc8] sm:$0xff] %vm778, %v733
      %805 = vst.msk [vmem:[#allocation2 + $0xd0] sm:$0xff] %vm778, %v735
      %806 = vst.msk [vmem:[#allocation2 + $0xd8] sm:$0xff] %vm778, %v737
      %807 = vst.msk [vmem:[#allocation2 + $0xe0] sm:$0xff] %vm778, %v739
      %808 = vst.msk [vmem:[#allocation2 + $0xe8] sm:$0xff] %vm778, %v741
      %809 = vst.msk [vmem:[#allocation2 + $0xf0] sm:$0xff] %vm778, %v743
      %810 = vst.msk [vmem:[#allocation2 + $0xf8] sm:$0xff] %vm778, %v745
      %s811 = scalar_lea.vmem %s354, 24
      %v812 = vld [vmem:[%s811] sm:$0xff]
      %v813 = vld [vmem:[%s811 + $0x8] sm:$0xff]
      %v814 = vld [vmem:[%s811 + $0x18] sm:$0xff]
      %v815 = vld [vmem:[%s811 + $0x20] sm:$0xff]
      %v816 = vld [vmem:[%s811 + $0x30] sm:$0xff]
      %v817 = vld [vmem:[%s811 + $0x38] sm:$0xff]
      %v818 = vld [vmem:[%s811 + $0x48] sm:$0xff]
      %v819 = vld [vmem:[%s811 + $0x50] sm:$0xff]
      %v820 = vld [vmem:[%s811 + $0x60] sm:$0xff]
      %v821 = vld [vmem:[%s811 + $0x68] sm:$0xff]
      %v822 = vld [vmem:[%s811 + $0x78] sm:$0xff]
      %v823 = vld [vmem:[%s811 + $0x80] sm:$0xff]
      %v824 = vld [vmem:[%s811 + $0x90] sm:$0xff]
      %v825 = vld [vmem:[%s811 + $0x98] sm:$0xff]
      %v826 = vld [vmem:[%s811 + $0xa8] sm:$0xff]
      %v827 = vld [vmem:[%s811 + $0xb0] sm:$0xff]
      %v828 = vld [vmem:[%s811 + $0xc0] sm:$0xff]
      %v829 = vld [vmem:[%s811 + $0xc8] sm:$0xff]
      %v830 = vld [vmem:[%s811 + $0xd8] sm:$0xff]
      %v831 = vld [vmem:[%s811 + $0xe0] sm:$0xff]
      %v832 = vld [vmem:[%s811 + $0xf0] sm:$0xff]
      %v833 = vld [vmem:[%s811 + $0xf8] sm:$0xff]
      %v834 = vld [vmem:[%s811 + $0x108] sm:$0xff]
      %v835 = vld [vmem:[%s811 + $0x110] sm:$0xff]
      %v836 = vld [vmem:[%s811 + $0x120] sm:$0xff]
      %v837 = vld [vmem:[%s811 + $0x128] sm:$0xff]
      %v838 = vld [vmem:[%s811 + $0x138] sm:$0xff]
      %v839 = vld [vmem:[%s811 + $0x140] sm:$0xff]
      %v840 = vld [vmem:[%s811 + $0x150] sm:$0xff]
      %v841 = vld [vmem:[%s811 + $0x158] sm:$0xff]
      %v842 = vld [vmem:[%s811 + $0x168] sm:$0xff]
      %v843 = vld [vmem:[%s811 + $0x170] sm:$0xff]
      %876 = vrot.lane.b32.xlu0 %v812, 12
      %v877 = vpop.permute.xlu0 %876
      %878 = vrot.lane.b32.xlu0 %v813, 12
      %v879 = vpop.permute.xlu0 %878
      %880 = vrot.lane.b32.xlu0 %v814, 12
      %v881 = vpop.permute.xlu0 %880
      %882 = vrot.lane.b32.xlu0 %v815, 12
      %v883 = vpop.permute.xlu0 %882
      %884 = vrot.lane.b32.xlu0 %v816, 12
      %v885 = vpop.permute.xlu0 %884
      %886 = vrot.lane.b32.xlu0 %v817, 12
      %v887 = vpop.permute.xlu0 %886
      %888 = vrot.lane.b32.xlu0 %v818, 12
      %v889 = vpop.permute.xlu0 %888
      %890 = vrot.lane.b32.xlu0 %v819, 12
      %v891 = vpop.permute.xlu0 %890
      %892 = vrot.lane.b32.xlu0 %v820, 12
      %v893 = vpop.permute.xlu0 %892
      %894 = vrot.lane.b32.xlu0 %v821, 12
      %v895 = vpop.permute.xlu0 %894
      %896 = vrot.lane.b32.xlu0 %v822, 12
      %v897 = vpop.permute.xlu0 %896
      %898 = vrot.lane.b32.xlu0 %v823, 12
      %v899 = vpop.permute.xlu0 %898
      %900 = vrot.lane.b32.xlu0 %v824, 12
      %v901 = vpop.permute.xlu0 %900
      %902 = vrot.lane.b32.xlu0 %v825, 12
      %v903 = vpop.permute.xlu0 %902
      %904 = vrot.lane.b32.xlu0 %v826, 12
      %v905 = vpop.permute.xlu0 %904
      %906 = vrot.lane.b32.xlu0 %v827, 12
      %v907 = vpop.permute.xlu0 %906
      %908 = vrot.lane.b32.xlu0 %v828, 12
      %v909 = vpop.permute.xlu0 %908
      %910 = vrot.lane.b32.xlu0 %v829, 12
      %v911 = vpop.permute.xlu0 %910
      %912 = vrot.lane.b32.xlu0 %v830, 12
      %v913 = vpop.permute.xlu0 %912
      %914 = vrot.lane.b32.xlu0 %v831, 12
      %v915 = vpop.permute.xlu0 %914
      %916 = vrot.lane.b32.xlu0 %v832, 12
      %v917 = vpop.permute.xlu0 %916
      %918 = vrot.lane.b32.xlu0 %v833, 12
      %v919 = vpop.permute.xlu0 %918
      %920 = vrot.lane.b32.xlu0 %v834, 12
      %v921 = vpop.permute.xlu0 %920
      %922 = vrot.lane.b32.xlu0 %v835, 12
      %v923 = vpop.permute.xlu0 %922
      %924 = vrot.lane.b32.xlu0 %v836, 12
      %v925 = vpop.permute.xlu0 %924
      %926 = vrot.lane.b32.xlu0 %v837, 12
      %v927 = vpop.permute.xlu0 %926
      %928 = vrot.lane.b32.xlu0 %v838, 12
      %v929 = vpop.permute.xlu0 %928
      %930 = vrot.lane.b32.xlu0 %v839, 12
      %v931 = vpop.permute.xlu0 %930
      %932 = vrot.lane.b32.xlu0 %v840, 12
      %v933 = vpop.permute.xlu0 %932
      %934 = vrot.lane.b32.xlu0 %v841, 12
      %v935 = vpop.permute.xlu0 %934
      %936 = vrot.lane.b32.xlu0 %v842, 12
      %v937 = vpop.permute.xlu0 %936
      %938 = vrot.lane.b32.xlu0 %v843, 12
      %v939 = vpop.permute.xlu0 %938
      %vm972 = vcmask 130144
      %973 = vst.msk [vmem:[#allocation2] sm:$0xff] %vm972, %v877
      %974 = vst.msk [vmem:[#allocation2 + $0x8] sm:$0xff] %vm972, %v879
      %975 = vst.msk [vmem:[#allocation2 + $0x10] sm:$0xff] %vm972, %v881
      %976 = vst.msk [vmem:[#allocation2 + $0x18] sm:$0xff] %vm972, %v883
      %977 = vst.msk [vmem:[#allocation2 + $0x20] sm:$0xff] %vm972, %v885
      %978 = vst.msk [vmem:[#allocation2 + $0x28] sm:$0xff] %vm972, %v887
      %979 = vst.msk [vmem:[#allocation2 + $0x30] sm:$0xff] %vm972, %v889
      %980 = vst.msk [vmem:[#allocation2 + $0x38] sm:$0xff] %vm972, %v891
      %981 = vst.msk [vmem:[#allocation2 + $0x40] sm:$0xff] %vm972, %v893
      %982 = vst.msk [vmem:[#allocation2 + $0x48] sm:$0xff] %vm972, %v895
      %983 = vst.msk [vmem:[#allocation2 + $0x50] sm:$0xff] %vm972, %v897
      %984 = vst.msk [vmem:[#allocation2 + $0x58] sm:$0xff] %vm972, %v899
      %985 = vst.msk [vmem:[#allocation2 + $0x60] sm:$0xff] %vm972, %v901
      %986 = vst.msk [vmem:[#allocation2 + $0x68] sm:$0xff] %vm972, %v903
      %987 = vst.msk [vmem:[#allocation2 + $0x70] sm:$0xff] %vm972, %v905
      %988 = vst.msk [vmem:[#allocation2 + $0x78] sm:$0xff] %vm972, %v907
      %989 = vst.msk [vmem:[#allocation2 + $0x80] sm:$0xff] %vm972, %v909
      %990 = vst.msk [vmem:[#allocation2 + $0x88] sm:$0xff] %vm972, %v911
      %991 = vst.msk [vmem:[#allocation2 + $0x90] sm:$0xff] %vm972, %v913
      %992 = vst.msk [vmem:[#allocation2 + $0x98] sm:$0xff] %vm972, %v915
      %993 = vst.msk [vmem:[#allocation2 + $0xa0] sm:$0xff] %vm972, %v917
      %994 = vst.msk [vmem:[#allocation2 + $0xa8] sm:$0xff] %vm972, %v919
      %995 = vst.msk [vmem:[#allocation2 + $0xb0] sm:$0xff] %vm972, %v921
      %996 = vst.msk [vmem:[#allocation2 + $0xb8] sm:$0xff] %vm972, %v923
      %997 = vst.msk [vmem:[#allocation2 + $0xc0] sm:$0xff] %vm972, %v925
      %998 = vst.msk [vmem:[#allocation2 + $0xc8] sm:$0xff] %vm972, %v927
      %999 = vst.msk [vmem:[#allocation2 + $0xd0] sm:$0xff] %vm972, %v929
      %1000 = vst.msk [vmem:[#allocation2 + $0xd8] sm:$0xff] %vm972, %v931
      %1001 = vst.msk [vmem:[#allocation2 + $0xe0] sm:$0xff] %vm972, %v933
      %1002 = vst.msk [vmem:[#allocation2 + $0xe8] sm:$0xff] %vm972, %v935
      %1003 = vst.msk [vmem:[#allocation2 + $0xf0] sm:$0xff] %vm972, %v937
      %1004 = vst.msk [vmem:[#allocation2 + $0xf8] sm:$0xff] %vm972, %v939
      %v1005 = vld [vmem:[%s811 + $0x1] sm:$0xff]
      %v1006 = vld [vmem:[%s811 + $0x9] sm:$0xff]
      %v1007 = vld [vmem:[%s811 + $0x19] sm:$0xff]
      %v1008 = vld [vmem:[%s811 + $0x21] sm:$0xff]
      %v1009 = vld [vmem:[%s811 + $0x31] sm:$0xff]
      %v1010 = vld [vmem:[%s811 + $0x39] sm:$0xff]
      %v1011 = vld [vmem:[%s811 + $0x49] sm:$0xff]
      %v1012 = vld [vmem:[%s811 + $0x51] sm:$0xff]
      %v1013 = vld [vmem:[%s811 + $0x61] sm:$0xff]
      %v1014 = vld [vmem:[%s811 + $0x69] sm:$0xff]
      %v1015 = vld [vmem:[%s811 + $0x79] sm:$0xff]
      %v1016 = vld [vmem:[%s811 + $0x81] sm:$0xff]
      %v1017 = vld [vmem:[%s811 + $0x91] sm:$0xff]
      %v1018 = vld [vmem:[%s811 + $0x99] sm:$0xff]
      %v1019 = vld [vmem:[%s811 + $0xa9] sm:$0xff]
      %v1020 = vld [vmem:[%s811 + $0xb1] sm:$0xff]
      %v1021 = vld [vmem:[%s811 + $0xc1] sm:$0xff]
      %v1022 = vld [vmem:[%s811 + $0xc9] sm:$0xff]
      %v1023 = vld [vmem:[%s811 + $0xd9] sm:$0xff]
      %v1024 = vld [vmem:[%s811 + $0xe1] sm:$0xff]
      %v1025 = vld [vmem:[%s811 + $0xf1] sm:$0xff]
      %v1026 = vld [vmem:[%s811 + $0xf9] sm:$0xff]
      %v1027 = vld [vmem:[%s811 + $0x109] sm:$0xff]
      %v1028 = vld [vmem:[%s811 + $0x111] sm:$0xff]
      %v1029 = vld [vmem:[%s811 + $0x121] sm:$0xff]
      %v1030 = vld [vmem:[%s811 + $0x129] sm:$0xff]
      %v1031 = vld [vmem:[%s811 + $0x139] sm:$0xff]
      %v1032 = vld [vmem:[%s811 + $0x141] sm:$0xff]
      %v1033 = vld [vmem:[%s811 + $0x151] sm:$0xff]
      %v1034 = vld [vmem:[%s811 + $0x159] sm:$0xff]
      %v1035 = vld [vmem:[%s811 + $0x169] sm:$0xff]
      %v1036 = vld [vmem:[%s811 + $0x171] sm:$0xff]
      %1069 = vrot.lane.b32.xlu0 %v1005, 16
      %v1070 = vpop.permute.xlu0 %1069
      %1071 = vrot.lane.b32.xlu0 %v1006, 16
      %v1072 = vpop.permute.xlu0 %1071
      %1073 = vrot.lane.b32.xlu0 %v1007, 16
      %v1074 = vpop.permute.xlu0 %1073
      %1075 = vrot.lane.b32.xlu0 %v1008, 16
      %v1076 = vpop.permute.xlu0 %1075
      %1077 = vrot.lane.b32.xlu0 %v1009, 16
      %v1078 = vpop.permute.xlu0 %1077
      %1079 = vrot.lane.b32.xlu0 %v1010, 16
      %v1080 = vpop.permute.xlu0 %1079
      %1081 = vrot.lane.b32.xlu0 %v1011, 16
      %v1082 = vpop.permute.xlu0 %1081
      %1083 = vrot.lane.b32.xlu0 %v1012, 16
      %v1084 = vpop.permute.xlu0 %1083
      %1085 = vrot.lane.b32.xlu0 %v1013, 16
      %v1086 = vpop.permute.xlu0 %1085
      %1087 = vrot.lane.b32.xlu0 %v1014, 16
      %v1088 = vpop.permute.xlu0 %1087
      %1089 = vrot.lane.b32.xlu0 %v1015, 16
      %v1090 = vpop.permute.xlu0 %1089
      %1091 = vrot.lane.b32.xlu0 %v1016, 16
      %v1092 = vpop.permute.xlu0 %1091
      %1093 = vrot.lane.b32.xlu0 %v1017, 16
      %v1094 = vpop.permute.xlu0 %1093
      %1095 = vrot.lane.b32.xlu0 %v1018, 16
      %v1096 = vpop.permute.xlu0 %1095
      %1097 = vrot.lane.b32.xlu0 %v1019, 16
      %v1098 = vpop.permute.xlu0 %1097
      %1099 = vrot.lane.b32.xlu0 %v1020, 16
      %v1100 = vpop.permute.xlu0 %1099
      %1101 = vrot.lane.b32.xlu0 %v1021, 16
      %v1102 = vpop.permute.xlu0 %1101
      %1103 = vrot.lane.b32.xlu0 %v1022, 16
      %v1104 = vpop.permute.xlu0 %1103
      %1105 = vrot.lane.b32.xlu0 %v1023, 16
      %v1106 = vpop.permute.xlu0 %1105
      %1107 = vrot.lane.b32.xlu0 %v1024, 16
      %v1108 = vpop.permute.xlu0 %1107
      %1109 = vrot.lane.b32.xlu0 %v1025, 16
      %v1110 = vpop.permute.xlu0 %1109
      %1111 = vrot.lane.b32.xlu0 %v1026, 16
      %v1112 = vpop.permute.xlu0 %1111
      %1113 = vrot.lane.b32.xlu0 %v1027, 16
      %v1114 = vpop.permute.xlu0 %1113
      %1115 = vrot.lane.b32.xlu0 %v1028, 16
      %v1116 = vpop.permute.xlu0 %1115
      %1117 = vrot.lane.b32.xlu0 %v1029, 16
      %v1118 = vpop.permute.xlu0 %1117
      %1119 = vrot.lane.b32.xlu0 %v1030, 16
      %v1120 = vpop.permute.xlu0 %1119
      %1121 = vrot.lane.b32.xlu0 %v1031, 16
      %v1122 = vpop.permute.xlu0 %1121
      %1123 = vrot.lane.b32.xlu0 %v1032, 16
      %v1124 = vpop.permute.xlu0 %1123
      %1125 = vrot.lane.b32.xlu0 %v1033, 16
      %v1126 = vpop.permute.xlu0 %1125
      %1127 = vrot.lane.b32.xlu0 %v1034, 16
      %v1128 = vpop.permute.xlu0 %1127
      %1129 = vrot.lane.b32.xlu0 %v1035, 16
      %v1130 = vpop.permute.xlu0 %1129
      %1131 = vrot.lane.b32.xlu0 %v1036, 16
      %v1132 = vpop.permute.xlu0 %1131
      %vm1165 = vcmask 162944
      %1166 = vst.msk [vmem:[#allocation2] sm:$0xff] %vm1165, %v1070
      %1167 = vst.msk [vmem:[#allocation2 + $0x8] sm:$0xff] %vm1165, %v1072
      %1168 = vst.msk [vmem:[#allocation2 + $0x10] sm:$0xff] %vm1165, %v1074
      %1169 = vst.msk [vmem:[#allocation2 + $0x18] sm:$0xff] %vm1165, %v1076
      %1170 = vst.msk [vmem:[#allocation2 + $0x20] sm:$0xff] %vm1165, %v1078
      %1171 = vst.msk [vmem:[#allocation2 + $0x28] sm:$0xff] %vm1165, %v1080
      %1172 = vst.msk [vmem:[#allocation2 + $0x30] sm:$0xff] %vm1165, %v1082
      %1173 = vst.msk [vmem:[#allocation2 + $0x38] sm:$0xff] %vm1165, %v1084
      %1174 = vst.msk [vmem:[#allocation2 + $0x40] sm:$0xff] %vm1165, %v1086
      %1175 = vst.msk [vmem:[#allocation2 + $0x48] sm:$0xff] %vm1165, %v1088
      %1176 = vst.msk [vmem:[#allocation2 + $0x50] sm:$0xff] %vm1165, %v1090
      %1177 = vst.msk [vmem:[#allocation2 + $0x58] sm:$0xff] %vm1165, %v1092
      %1178 = vst.msk [vmem:[#allocation2 + $0x60] sm:$0xff] %vm1165, %v1094
      %1179 = vst.msk [vmem:[#allocation2 + $0x68] sm:$0xff] %vm1165, %v1096
      %1180 = vst.msk [vmem:[#allocation2 + $0x70] sm:$0xff] %vm1165, %v1098
      %1181 = vst.msk [vmem:[#allocation2 + $0x78] sm:$0xff] %vm1165, %v1100
      %1182 = vst.msk [vmem:[#allocation2 + $0x80] sm:$0xff] %vm1165, %v1102
      %1183 = vst.msk [vmem:[#allocation2 + $0x88] sm:$0xff] %vm1165, %v1104
      %1184 = vst.msk [vmem:[#allocation2 + $0x90] sm:$0xff] %vm1165, %v1106
      %1185 = vst.msk [vmem:[#allocation2 + $0x98] sm:$0xff] %vm1165, %v1108
      %1186 = vst.msk [vmem:[#allocation2 + $0xa0] sm:$0xff] %vm1165, %v1110
      %1187 = vst.msk [vmem:[#allocation2 + $0xa8] sm:$0xff] %vm1165, %v1112
      %1188 = vst.msk [vmem:[#allocation2 + $0xb0] sm:$0xff] %vm1165, %v1114
      %1189 = vst.msk [vmem:[#allocation2 + $0xb8] sm:$0xff] %vm1165, %v1116
      %1190 = vst.msk [vmem:[#allocation2 + $0xc0] sm:$0xff] %vm1165, %v1118
      %1191 = vst.msk [vmem:[#allocation2 + $0xc8] sm:$0xff] %vm1165, %v1120
      %1192 = vst.msk [vmem:[#allocation2 + $0xd0] sm:$0xff] %vm1165, %v1122
      %1193 = vst.msk [vmem:[#allocation2 + $0xd8] sm:$0xff] %vm1165, %v1124
      %1194 = vst.msk [vmem:[#allocation2 + $0xe0] sm:$0xff] %vm1165, %v1126
      %1195 = vst.msk [vmem:[#allocation2 + $0xe8] sm:$0xff] %vm1165, %v1128
      %1196 = vst.msk [vmem:[#allocation2 + $0xf0] sm:$0xff] %vm1165, %v1130
      %1197 = vst.msk [vmem:[#allocation2 + $0xf8] sm:$0xff] %vm1165, %v1132
      %v1198 = vld [vmem:[%s811 + $0x2] sm:$0xff]
      %v1199 = vld [vmem:[%s811 + $0xa] sm:$0xff]
      %v1200 = vld [vmem:[%s811 + $0x1a] sm:$0xff]
      %v1201 = vld [vmem:[%s811 + $0x22] sm:$0xff]
      %v1202 = vld [vmem:[%s811 + $0x32] sm:$0xff]
      %v1203 = vld [vmem:[%s811 + $0x3a] sm:$0xff]
      %v1204 = vld [vmem:[%s811 + $0x4a] sm:$0xff]
      %v1205 = vld [vmem:[%s811 + $0x52] sm:$0xff]
      %v1206 = vld [vmem:[%s811 + $0x62] sm:$0xff]
      %v1207 = vld [vmem:[%s811 + $0x6a] sm:$0xff]
      %v1208 = vld [vmem:[%s811 + $0x7a] sm:$0xff]
      %v1209 = vld [vmem:[%s811 + $0x82] sm:$0xff]
      %v1210 = vld [vmem:[%s811 + $0x92] sm:$0xff]
      %v1211 = vld [vmem:[%s811 + $0x9a] sm:$0xff]
      %v1212 = vld [vmem:[%s811 + $0xaa] sm:$0xff]
      %v1213 = vld [vmem:[%s811 + $0xb2] sm:$0xff]
      %v1214 = vld [vmem:[%s811 + $0xc2] sm:$0xff]
      %v1215 = vld [vmem:[%s811 + $0xca] sm:$0xff]
      %v1216 = vld [vmem:[%s811 + $0xda] sm:$0xff]
      %v1217 = vld [vmem:[%s811 + $0xe2] sm:$0xff]
      %v1218 = vld [vmem:[%s811 + $0xf2] sm:$0xff]
      %v1219 = vld [vmem:[%s811 + $0xfa] sm:$0xff]
      %v1220 = vld [vmem:[%s811 + $0x10a] sm:$0xff]
      %v1221 = vld [vmem:[%s811 + $0x112] sm:$0xff]
      %v1222 = vld [vmem:[%s811 + $0x122] sm:$0xff]
      %v1223 = vld [vmem:[%s811 + $0x12a] sm:$0xff]
      %v1224 = vld [vmem:[%s811 + $0x13a] sm:$0xff]
      %v1225 = vld [vmem:[%s811 + $0x142] sm:$0xff]
      %v1226 = vld [vmem:[%s811 + $0x152] sm:$0xff]
      %v1227 = vld [vmem:[%s811 + $0x15a] sm:$0xff]
      %v1228 = vld [vmem:[%s811 + $0x16a] sm:$0xff]
      %v1229 = vld [vmem:[%s811 + $0x172] sm:$0xff]
      %1262 = vrot.lane.b32.xlu0 %v1198, 20
      %v1263 = vpop.permute.xlu0 %1262
      %1264 = vrot.lane.b32.xlu0 %v1199, 20
      %v1265 = vpop.permute.xlu0 %1264
      %1266 = vrot.lane.b32.xlu0 %v1200, 20
      %v1267 = vpop.permute.xlu0 %1266
      %1268 = vrot.lane.b32.xlu0 %v1201, 20
      %v1269 = vpop.permute.xlu0 %1268
      %1270 = vrot.lane.b32.xlu0 %v1202, 20
      %v1271 = vpop.permute.xlu0 %1270
      %1272 = vrot.lane.b32.xlu0 %v1203, 20
      %v1273 = vpop.permute.xlu0 %1272
      %1274 = vrot.lane.b32.xlu0 %v1204, 20
      %v1275 = vpop.permute.xlu0 %1274
      %1276 = vrot.lane.b32.xlu0 %v1205, 20
      %v1277 = vpop.permute.xlu0 %1276
      %1278 = vrot.lane.b32.xlu0 %v1206, 20
      %v1279 = vpop.permute.xlu0 %1278
      %1280 = vrot.lane.b32.xlu0 %v1207, 20
      %v1281 = vpop.permute.xlu0 %1280
      %1282 = vrot.lane.b32.xlu0 %v1208, 20
      %v1283 = vpop.permute.xlu0 %1282
      %1284 = vrot.lane.b32.xlu0 %v1209, 20
      %v1285 = vpop.permute.xlu0 %1284
      %1286 = vrot.lane.b32.xlu0 %v1210, 20
      %v1287 = vpop.permute.xlu0 %1286
      %1288 = vrot.lane.b32.xlu0 %v1211, 20
      %v1289 = vpop.permute.xlu0 %1288
      %1290 = vrot.lane.b32.xlu0 %v1212, 20
      %v1291 = vpop.permute.xlu0 %1290
      %1292 = vrot.lane.b32.xlu0 %v1213, 20
      %v1293 = vpop.permute.xlu0 %1292
      %1294 = vrot.lane.b32.xlu0 %v1214, 20
      %v1295 = vpop.permute.xlu0 %1294
      %1296 = vrot.lane.b32.xlu0 %v1215, 20
      %v1297 = vpop.permute.xlu0 %1296
      %1298 = vrot.lane.b32.xlu0 %v1216, 20
      %v1299 = vpop.permute.xlu0 %1298
      %1300 = vrot.lane.b32.xlu0 %v1217, 20
      %v1301 = vpop.permute.xlu0 %1300
      %1302 = vrot.lane.b32.xlu0 %v1218, 20
      %v1303 = vpop.permute.xlu0 %1302
      %1304 = vrot.lane.b32.xlu0 %v1219, 20
      %v1305 = vpop.permute.xlu0 %1304
      %1306 = vrot.lane.b32.xlu0 %v1220, 20
      %v1307 = vpop.permute.xlu0 %1306
      %1308 = vrot.lane.b32.xlu0 %v1221, 20
      %v1309 = vpop.permute.xlu0 %1308
      %1310 = vrot.lane.b32.xlu0 %v1222, 20
      %v1311 = vpop.permute.xlu0 %1310
      %1312 = vrot.lane.b32.xlu0 %v1223, 20
      %v1313 = vpop.permute.xlu0 %1312
      %1314 = vrot.lane.b32.xlu0 %v1224, 20
      %v1315 = vpop.permute.xlu0 %1314
      %1316 = vrot.lane.b32.xlu0 %v1225, 20
      %v1317 = vpop.permute.xlu0 %1316
      %1318 = vrot.lane.b32.xlu0 %v1226, 20
      %v1319 = vpop.permute.xlu0 %1318
      %1320 = vrot.lane.b32.xlu0 %v1227, 20
      %v1321 = vpop.permute.xlu0 %1320
      %1322 = vrot.lane.b32.xlu0 %v1228, 20
      %v1323 = vpop.permute.xlu0 %1322
      %1324 = vrot.lane.b32.xlu0 %v1229, 20
      %v1325 = vpop.permute.xlu0 %1324
      %vm1358 = vcmask 195744
      %1359 = vst.msk [vmem:[#allocation2] sm:$0xff] %vm1358, %v1263
      %1360 = vst.msk [vmem:[#allocation2 + $0x8] sm:$0xff] %vm1358, %v1265
      %1361 = vst.msk [vmem:[#allocation2 + $0x10] sm:$0xff] %vm1358, %v1267
      %1362 = vst.msk [vmem:[#allocation2 + $0x18] sm:$0xff] %vm1358, %v1269
      %1363 = vst.msk [vmem:[#allocation2 + $0x20] sm:$0xff] %vm1358, %v1271
      %1364 = vst.msk [vmem:[#allocation2 + $0x28] sm:$0xff] %vm1358, %v1273
      %1365 = vst.msk [vmem:[#allocation2 + $0x30] sm:$0xff] %vm1358, %v1275
      %1366 = vst.msk [vmem:[#allocation2 + $0x38] sm:$0xff] %vm1358, %v1277
      %1367 = vst.msk [vmem:[#allocation2 + $0x40] sm:$0xff] %vm1358, %v1279
      %1368 = vst.msk [vmem:[#allocation2 + $0x48] sm:$0xff] %vm1358, %v1281
      %1369 = vst.msk [vmem:[#allocation2 + $0x50] sm:$0xff] %vm1358, %v1283
      %1370 = vst.msk [vmem:[#allocation2 + $0x58] sm:$0xff] %vm1358, %v1285
      %1371 = vst.msk [vmem:[#allocation2 + $0x60] sm:$0xff] %vm1358, %v1287
      %1372 = vst.msk [vmem:[#allocation2 + $0x68] sm:$0xff] %vm1358, %v1289
      %1373 = vst.msk [vmem:[#allocation2 + $0x70] sm:$0xff] %vm1358, %v1291
      %1374 = vst.msk [vmem:[#allocation2 + $0x78] sm:$0xff] %vm1358, %v1293
      %1375 = vst.msk [vmem:[#allocation2 + $0x80] sm:$0xff] %vm1358, %v1295
      %1376 = vst.msk [vmem:[#allocation2 + $0x88] sm:$0xff] %vm1358, %v1297
      %1377 = vst.msk [vmem:[#allocation2 + $0x90] sm:$0xff] %vm1358, %v1299
      %1378 = vst.msk [vmem:[#allocation2 + $0x98] sm:$0xff] %vm1358, %v1301
      %1379 = vst.msk [vmem:[#allocation2 + $0xa0] sm:$0xff] %vm1358, %v1303
      %1380 = vst.msk [vmem:[#allocation2 + $0xa8] sm:$0xff] %vm1358, %v1305
      %1381 = vst.msk [vmem:[#allocation2 + $0xb0] sm:$0xff] %vm1358, %v1307
      %1382 = vst.msk [vmem:[#allocation2 + $0xb8] sm:$0xff] %vm1358, %v1309
      %1383 = vst.msk [vmem:[#allocation2 + $0xc0] sm:$0xff] %vm1358, %v1311
      %1384 = vst.msk [vmem:[#allocation2 + $0xc8] sm:$0xff] %vm1358, %v1313
      %1385 = vst.msk [vmem:[#allocation2 + $0xd0] sm:$0xff] %vm1358, %v1315
      %1386 = vst.msk [vmem:[#allocation2 + $0xd8] sm:$0xff] %vm1358, %v1317
      %1387 = vst.msk [vmem:[#allocation2 + $0xe0] sm:$0xff] %vm1358, %v1319
      %1388 = vst.msk [vmem:[#allocation2 + $0xe8] sm:$0xff] %vm1358, %v1321
      %1389 = vst.msk [vmem:[#allocation2 + $0xf0] sm:$0xff] %vm1358, %v1323
      %1390 = vst.msk [vmem:[#allocation2 + $0xf8] sm:$0xff] %vm1358, %v1325
      %s1391 = scalar_lea.vmem %s354, 48
      %v1392 = vld [vmem:[%s1391] sm:$0xff]
      %v1393 = vld [vmem:[%s1391 + $0x8] sm:$0xff]
      %v1394 = vld [vmem:[%s1391 + $0x18] sm:$0xff]
      %v1395 = vld [vmem:[%s1391 + $0x20] sm:$0xff]
      %v1396 = vld [vmem:[%s1391 + $0x30] sm:$0xff]
      %v1397 = vld [vmem:[%s1391 + $0x38] sm:$0xff]
      %v1398 = vld [vmem:[%s1391 + $0x48] sm:$0xff]
      %v1399 = vld [vmem:[%s1391 + $0x50] sm:$0xff]
      %v1400 = vld [vmem:[%s1391 + $0x60] sm:$0xff]
      %v1401 = vld [vmem:[%s1391 + $0x68] sm:$0xff]
      %v1402 = vld [vmem:[%s1391 + $0x78] sm:$0xff]
      %v1403 = vld [vmem:[%s1391 + $0x80] sm:$0xff]
      %v1404 = vld [vmem:[%s1391 + $0x90] sm:$0xff]
      %v1405 = vld [vmem:[%s1391 + $0x98] sm:$0xff]
      %v1406 = vld [vmem:[%s1391 + $0xa8] sm:$0xff]
      %v1407 = vld [vmem:[%s1391 + $0xb0] sm:$0xff]
      %v1408 = vld [vmem:[%s1391 + $0xc0] sm:$0xff]
      %v1409 = vld [vmem:[%s1391 + $0xc8] sm:$0xff]
      %v1410 = vld [vmem:[%s1391 + $0xd8] sm:$0xff]
      %v1411 = vld [vmem:[%s1391 + $0xe0] sm:$0xff]
      %v1412 = vld [vmem:[%s1391 + $0xf0] sm:$0xff]
      %v1413 = vld [vmem:[%s1391 + $0xf8] sm:$0xff]
      %v1414 = vld [vmem:[%s1391 + $0x108] sm:$0xff]
      %v1415 = vld [vmem:[%s1391 + $0x110] sm:$0xff]
      %v1416 = vld [vmem:[%s1391 + $0x120] sm:$0xff]
      %v1417 = vld [vmem:[%s1391 + $0x128] sm:$0xff]
      %v1418 = vld [vmem:[%s1391 + $0x138] sm:$0xff]
      %v1419 = vld [vmem:[%s1391 + $0x140] sm:$0xff]
      %v1420 = vld [vmem:[%s1391 + $0x150] sm:$0xff]
      %v1421 = vld [vmem:[%s1391 + $0x158] sm:$0xff]
      %v1422 = vld [vmem:[%s1391 + $0x168] sm:$0xff]
      %v1423 = vld [vmem:[%s1391 + $0x170] sm:$0xff]
      %1456 = vrot.lane.b32.xlu0 %v1392, 24
      %v1457 = vpop.permute.xlu0 %1456
      %1458 = vrot.lane.b32.xlu0 %v1393, 24
      %v1459 = vpop.permute.xlu0 %1458
      %1460 = vrot.lane.b32.xlu0 %v1394, 24
      %v1461 = vpop.permute.xlu0 %1460
      %1462 = vrot.lane.b32.xlu0 %v1395, 24
      %v1463 = vpop.permute.xlu0 %1462
      %1464 = vrot.lane.b32.xlu0 %v1396, 24
      %v1465 = vpop.permute.xlu0 %1464
      %1466 = vrot.lane.b32.xlu0 %v1397, 24
      %v1467 = vpop.permute.xlu0 %1466
      %1468 = vrot.lane.b32.xlu0 %v1398, 24
      %v1469 = vpop.permute.xlu0 %1468
      %1470 = vrot.lane.b32.xlu0 %v1399, 24
      %v1471 = vpop.permute.xlu0 %1470
      %1472 = vrot.lane.b32.xlu0 %v1400, 24
      %v1473 = vpop.permute.xlu0 %1472
      %1474 = vrot.lane.b32.xlu0 %v1401, 24
      %v1475 = vpop.permute.xlu0 %1474
      %1476 = vrot.lane.b32.xlu0 %v1402, 24
      %v1477 = vpop.permute.xlu0 %1476
      %1478 = vrot.lane.b32.xlu0 %v1403, 24
      %v1479 = vpop.permute.xlu0 %1478
      %1480 = vrot.lane.b32.xlu0 %v1404, 24
      %v1481 = vpop.permute.xlu0 %1480
      %1482 = vrot.lane.b32.xlu0 %v1405, 24
      %v1483 = vpop.permute.xlu0 %1482
      %1484 = vrot.lane.b32.xlu0 %v1406, 24
      %v1485 = vpop.permute.xlu0 %1484
      %1486 = vrot.lane.b32.xlu0 %v1407, 24
      %v1487 = vpop.permute.xlu0 %1486
      %1488 = vrot.lane.b32.xlu0 %v1408, 24
      %v1489 = vpop.permute.xlu0 %1488
      %1490 = vrot.lane.b32.xlu0 %v1409, 24
      %v1491 = vpop.permute.xlu0 %1490
      %1492 = vrot.lane.b32.xlu0 %v1410, 24
      %v1493 = vpop.permute.xlu0 %1492
      %1494 = vrot.lane.b32.xlu0 %v1411, 24
      %v1495 = vpop.permute.xlu0 %1494
      %1496 = vrot.lane.b32.xlu0 %v1412, 24
      %v1497 = vpop.permute.xlu0 %1496
      %1498 = vrot.lane.b32.xlu0 %v1413, 24
      %v1499 = vpop.permute.xlu0 %1498
      %1500 = vrot.lane.b32.xlu0 %v1414, 24
      %v1501 = vpop.permute.xlu0 %1500
      %1502 = vrot.lane.b32.xlu0 %v1415, 24
      %v1503 = vpop.permute.xlu0 %1502
      %1504 = vrot.lane.b32.xlu0 %v1416, 24
      %v1505 = vpop.permute.xlu0 %1504
      %1506 = vrot.lane.b32.xlu0 %v1417, 24
      %v1507 = vpop.permute.xlu0 %1506
      %1508 = vrot.lane.b32.xlu0 %v1418, 24
      %v1509 = vpop.permute.xlu0 %1508
      %1510 = vrot.lane.b32.xlu0 %v1419, 24
      %v1511 = vpop.permute.xlu0 %1510
      %1512 = vrot.lane.b32.xlu0 %v1420, 24
      %v1513 = vpop.permute.xlu0 %1512
      %1514 = vrot.lane.b32.xlu0 %v1421, 24
      %v1515 = vpop.permute.xlu0 %1514
      %1516 = vrot.lane.b32.xlu0 %v1422, 24
      %v1517 = vpop.permute.xlu0 %1516
      %1518 = vrot.lane.b32.xlu0 %v1423, 24
      %v1519 = vpop.permute.xlu0 %1518
      %vm1552 = vcmask 228544
      %1553 = vst.msk [vmem:[#allocation2] sm:$0xff] %vm1552, %v1457
      %1554 = vst.msk [vmem:[#allocation2 + $0x8] sm:$0xff] %vm1552, %v1459
      %1555 = vst.msk [vmem:[#allocation2 + $0x10] sm:$0xff] %vm1552, %v1461
      %1556 = vst.msk [vmem:[#allocation2 + $0x18] sm:$0xff] %vm1552, %v1463
      %1557 = vst.msk [vmem:[#allocation2 + $0x20] sm:$0xff] %vm1552, %v1465
      %1558 = vst.msk [vmem:[#allocation2 + $0x28] sm:$0xff] %vm1552, %v1467
      %1559 = vst.msk [vmem:[#allocation2 + $0x30] sm:$0xff] %vm1552, %v1469
      %1560 = vst.msk [vmem:[#allocation2 + $0x38] sm:$0xff] %vm1552, %v1471
      %1561 = vst.msk [vmem:[#allocation2 + $0x40] sm:$0xff] %vm1552, %v1473
      %1562 = vst.msk [vmem:[#allocation2 + $0x48] sm:$0xff] %vm1552, %v1475
      %1563 = vst.msk [vmem:[#allocation2 + $0x50] sm:$0xff] %vm1552, %v1477
      %1564 = vst.msk [vmem:[#allocation2 + $0x58] sm:$0xff] %vm1552, %v1479
      %1565 = vst.msk [vmem:[#allocation2 + $0x60] sm:$0xff] %vm1552, %v1481
      %1566 = vst.msk [vmem:[#allocation2 + $0x68] sm:$0xff] %vm1552, %v1483
      %1567 = vst.msk [vmem:[#allocation2 + $0x70] sm:$0xff] %vm1552, %v1485
      %1568 = vst.msk [vmem:[#allocation2 + $0x78] sm:$0xff] %vm1552, %v1487
      %1569 = vst.msk [vmem:[#allocation2 + $0x80] sm:$0xff] %vm1552, %v1489
      %1570 = vst.msk [vmem:[#allocation2 + $0x88] sm:$0xff] %vm1552, %v1491
      %1571 = vst.msk [vmem:[#allocation2 + $0x90] sm:$0xff] %vm1552, %v1493
      %1572 = vst.msk [vmem:[#allocation2 + $0x98] sm:$0xff] %vm1552, %v1495
      %1573 = vst.msk [vmem:[#allocation2 + $0xa0] sm:$0xff] %vm1552, %v1497
      %1574 = vst.msk [vmem:[#allocation2 + $0xa8] sm:$0xff] %vm1552, %v1499
      %1575 = vst.msk [vmem:[#allocation2 + $0xb0] sm:$0xff] %vm1552, %v1501
      %1576 = vst.msk [vmem:[#allocation2 + $0xb8] sm:$0xff] %vm1552, %v1503
      %1577 = vst.msk [vmem:[#allocation2 + $0xc0] sm:$0xff] %vm1552, %v1505
      %1578 = vst.msk [vmem:[#allocation2 + $0xc8] sm:$0xff] %vm1552, %v1507
      %1579 = vst.msk [vmem:[#allocation2 + $0xd0] sm:$0xff] %vm1552, %v1509
      %1580 = vst.msk [vmem:[#allocation2 + $0xd8] sm:$0xff] %vm1552, %v1511
      %1581 = vst.msk [vmem:[#allocation2 + $0xe0] sm:$0xff] %vm1552, %v1513
      %1582 = vst.msk [vmem:[#allocation2 + $0xe8] sm:$0xff] %vm1552, %v1515
      %1583 = vst.msk [vmem:[#allocation2 + $0xf0] sm:$0xff] %vm1552, %v1517
      %1584 = vst.msk [vmem:[#allocation2 + $0xf8] sm:$0xff] %vm1552, %v1519
      %v1585 = vld [vmem:[%s1391 + $0x1] sm:$0xff]
      %v1586 = vld [vmem:[%s1391 + $0x9] sm:$0xff]
      %v1587 = vld [vmem:[%s1391 + $0x19] sm:$0xff]
      %v1588 = vld [vmem:[%s1391 + $0x21] sm:$0xff]
      %v1589 = vld [vmem:[%s1391 + $0x31] sm:$0xff]
      %v1590 = vld [vmem:[%s1391 + $0x39] sm:$0xff]
      %v1591 = vld [vmem:[%s1391 + $0x49] sm:$0xff]
      %v1592 = vld [vmem:[%s1391 + $0x51] sm:$0xff]
      %v1593 = vld [vmem:[%s1391 + $0x61] sm:$0xff]
      %v1594 = vld [vmem:[%s1391 + $0x69] sm:$0xff]
      %v1595 = vld [vmem:[%s1391 + $0x79] sm:$0xff]
      %v1596 = vld [vmem:[%s1391 + $0x81] sm:$0xff]
      %v1597 = vld [vmem:[%s1391 + $0x91] sm:$0xff]
      %v1598 = vld [vmem:[%s1391 + $0x99] sm:$0xff]
      %v1599 = vld [vmem:[%s1391 + $0xa9] sm:$0xff]
      %v1600 = vld [vmem:[%s1391 + $0xb1] sm:$0xff]
      %v1601 = vld [vmem:[%s1391 + $0xc1] sm:$0xff]
      %v1602 = vld [vmem:[%s1391 + $0xc9] sm:$0xff]
      %v1603 = vld [vmem:[%s1391 + $0xd9] sm:$0xff]
      %v1604 = vld [vmem:[%s1391 + $0xe1] sm:$0xff]
      %v1605 = vld [vmem:[%s1391 + $0xf1] sm:$0xff]
      %v1606 = vld [vmem:[%s1391 + $0xf9] sm:$0xff]
      %v1607 = vld [vmem:[%s1391 + $0x109] sm:$0xff]
      %v1608 = vld [vmem:[%s1391 + $0x111] sm:$0xff]
      %v1609 = vld [vmem:[%s1391 + $0x121] sm:$0xff]
      %v1610 = vld [vmem:[%s1391 + $0x129] sm:$0xff]
      %v1611 = vld [vmem:[%s1391 + $0x139] sm:$0xff]
      %v1612 = vld [vmem:[%s1391 + $0x141] sm:$0xff]
      %v1613 = vld [vmem:[%s1391 + $0x151] sm:$0xff]
      %v1614 = vld [vmem:[%s1391 + $0x159] sm:$0xff]
      %v1615 = vld [vmem:[%s1391 + $0x169] sm:$0xff]
      %v1616 = vld [vmem:[%s1391 + $0x171] sm:$0xff]
      %1649 = vrot.lane.b32.xlu0 %v1585, 28
      %v1650 = vpop.permute.xlu0 %1649
      %1651 = vrot.lane.b32.xlu0 %v1586, 28
      %v1652 = vpop.permute.xlu0 %1651
      %1653 = vrot.lane.b32.xlu0 %v1587, 28
      %v1654 = vpop.permute.xlu0 %1653
      %1655 = vrot.lane.b32.xlu0 %v1588, 28
      %v1656 = vpop.permute.xlu0 %1655
      %1657 = vrot.lane.b32.xlu0 %v1589, 28
      %v1658 = vpop.permute.xlu0 %1657
      %1659 = vrot.lane.b32.xlu0 %v1590, 28
      %v1660 = vpop.permute.xlu0 %1659
      %1661 = vrot.lane.b32.xlu0 %v1591, 28
      %v1662 = vpop.permute.xlu0 %1661
      %1663 = vrot.lane.b32.xlu0 %v1592, 28
      %v1664 = vpop.permute.xlu0 %1663
      %1665 = vrot.lane.b32.xlu0 %v1593, 28
      %v1666 = vpop.permute.xlu0 %1665
      %1667 = vrot.lane.b32.xlu0 %v1594, 28
      %v1668 = vpop.permute.xlu0 %1667
      %1669 = vrot.lane.b32.xlu0 %v1595, 28
      %v1670 = vpop.permute.xlu0 %1669
      %1671 = vrot.lane.b32.xlu0 %v1596, 28
      %v1672 = vpop.permute.xlu0 %1671
      %1673 = vrot.lane.b32.xlu0 %v1597, 28
      %v1674 = vpop.permute.xlu0 %1673
      %1675 = vrot.lane.b32.xlu0 %v1598, 28
      %v1676 = vpop.permute.xlu0 %1675
      %1677 = vrot.lane.b32.xlu0 %v1599, 28
      %v1678 = vpop.permute.xlu0 %1677
      %1679 = vrot.lane.b32.xlu0 %v1600, 28
      %v1680 = vpop.permute.xlu0 %1679
      %1681 = vrot.lane.b32.xlu0 %v1601, 28
      %v1682 = vpop.permute.xlu0 %1681
      %1683 = vrot.lane.b32.xlu0 %v1602, 28
      %v1684 = vpop.permute.xlu0 %1683
      %1685 = vrot.lane.b32.xlu0 %v1603, 28
      %v1686 = vpop.permute.xlu0 %1685
      %1687 = vrot.lane.b32.xlu0 %v1604, 28
      %v1688 = vpop.permute.xlu0 %1687
      %1689 = vrot.lane.b32.xlu0 %v1605, 28
      %v1690 = vpop.permute.xlu0 %1689
      %1691 = vrot.lane.b32.xlu0 %v1606, 28
      %v1692 = vpop.permute.xlu0 %1691
      %1693 = vrot.lane.b32.xlu0 %v1607, 28
      %v1694 = vpop.permute.xlu0 %1693
      %1695 = vrot.lane.b32.xlu0 %v1608, 28
      %v1696 = vpop.permute.xlu0 %1695
      %1697 = vrot.lane.b32.xlu0 %v1609, 28
      %v1698 = vpop.permute.xlu0 %1697
      %1699 = vrot.lane.b32.xlu0 %v1610, 28
      %v1700 = vpop.permute.xlu0 %1699
      %1701 = vrot.lane.b32.xlu0 %v1611, 28
      %v1702 = vpop.permute.xlu0 %1701
      %1703 = vrot.lane.b32.xlu0 %v1612, 28
      %v1704 = vpop.permute.xlu0 %1703
      %1705 = vrot.lane.b32.xlu0 %v1613, 28
      %v1706 = vpop.permute.xlu0 %1705
      %1707 = vrot.lane.b32.xlu0 %v1614, 28
      %v1708 = vpop.permute.xlu0 %1707
      %1709 = vrot.lane.b32.xlu0 %v1615, 28
      %v1710 = vpop.permute.xlu0 %1709
      %1711 = vrot.lane.b32.xlu0 %v1616, 28
      %v1712 = vpop.permute.xlu0 %1711
      %vm1745 = vcmask 261344
      %1746 = vst.msk [vmem:[#allocation2] sm:$0xff] %vm1745, %v1650
      %1747 = vst.msk [vmem:[#allocation2 + $0x8] sm:$0xff] %vm1745, %v1652
      %1748 = vst.msk [vmem:[#allocation2 + $0x10] sm:$0xff] %vm1745, %v1654
      %1749 = vst.msk [vmem:[#allocation2 + $0x18] sm:$0xff] %vm1745, %v1656
      %1750 = vst.msk [vmem:[#allocation2 + $0x20] sm:$0xff] %vm1745, %v1658
      %1751 = vst.msk [vmem:[#allocation2 + $0x28] sm:$0xff] %vm1745, %v1660
      %1752 = vst.msk [vmem:[#allocation2 + $0x30] sm:$0xff] %vm1745, %v1662
      %1753 = vst.msk [vmem:[#allocation2 + $0x38] sm:$0xff] %vm1745, %v1664
      %1754 = vst.msk [vmem:[#allocation2 + $0x40] sm:$0xff] %vm1745, %v1666
      %1755 = vst.msk [vmem:[#allocation2 + $0x48] sm:$0xff] %vm1745, %v1668
      %1756 = vst.msk [vmem:[#allocation2 + $0x50] sm:$0xff] %vm1745, %v1670
      %1757 = vst.msk [vmem:[#allocation2 + $0x58] sm:$0xff] %vm1745, %v1672
      %1758 = vst.msk [vmem:[#allocation2 + $0x60] sm:$0xff] %vm1745, %v1674
      %1759 = vst.msk [vmem:[#allocation2 + $0x68] sm:$0xff] %vm1745, %v1676
      %1760 = vst.msk [vmem:[#allocation2 + $0x70] sm:$0xff] %vm1745, %v1678
      %1761 = vst.msk [vmem:[#allocation2 + $0x78] sm:$0xff] %vm1745, %v1680
      %1762 = vst.msk [vmem:[#allocation2 + $0x80] sm:$0xff] %vm1745, %v1682
      %1763 = vst.msk [vmem:[#allocation2 + $0x88] sm:$0xff] %vm1745, %v1684
      %1764 = vst.msk [vmem:[#allocation2 + $0x90] sm:$0xff] %vm1745, %v1686
      %1765 = vst.msk [vmem:[#allocation2 + $0x98] sm:$0xff] %vm1745, %v1688
      %1766 = vst.msk [vmem:[#allocation2 + $0xa0] sm:$0xff] %vm1745, %v1690
      %1767 = vst.msk [vmem:[#allocation2 + $0xa8] sm:$0xff] %vm1745, %v1692
      %1768 = vst.msk [vmem:[#allocation2 + $0xb0] sm:$0xff] %vm1745, %v1694
      %1769 = vst.msk [vmem:[#allocation2 + $0xb8] sm:$0xff] %vm1745, %v1696
      %1770 = vst.msk [vmem:[#allocation2 + $0xc0] sm:$0xff] %vm1745, %v1698
      %1771 = vst.msk [vmem:[#allocation2 + $0xc8] sm:$0xff] %vm1745, %v1700
      %1772 = vst.msk [vmem:[#allocation2 + $0xd0] sm:$0xff] %vm1745, %v1702
      %1773 = vst.msk [vmem:[#allocation2 + $0xd8] sm:$0xff] %vm1745, %v1704
      %1774 = vst.msk [vmem:[#allocation2 + $0xe0] sm:$0xff] %vm1745, %v1706
      %1775 = vst.msk [vmem:[#allocation2 + $0xe8] sm:$0xff] %vm1745, %v1708
      %1776 = vst.msk [vmem:[#allocation2 + $0xf0] sm:$0xff] %vm1745, %v1710
      %1777 = vst.msk [vmem:[#allocation2 + $0xf8] sm:$0xff] %vm1745, %v1712
      %v1778 = vld [vmem:[%s1391 + $0x2] sm:$0xff]
      %v1779 = vld [vmem:[%s1391 + $0xa] sm:$0xff]
      %v1780 = vld [vmem:[%s1391 + $0x1a] sm:$0xff]
      %v1781 = vld [vmem:[%s1391 + $0x22] sm:$0xff]
      %v1782 = vld [vmem:[%s1391 + $0x32] sm:$0xff]
      %v1783 = vld [vmem:[%s1391 + $0x3a] sm:$0xff]
      %v1784 = vld [vmem:[%s1391 + $0x4a] sm:$0xff]
      %v1785 = vld [vmem:[%s1391 + $0x52] sm:$0xff]
      %v1786 = vld [vmem:[%s1391 + $0x62] sm:$0xff]
      %v1787 = vld [vmem:[%s1391 + $0x6a] sm:$0xff]
      %v1788 = vld [vmem:[%s1391 + $0x7a] sm:$0xff]
      %v1789 = vld [vmem:[%s1391 + $0x82] sm:$0xff]
      %v1790 = vld [vmem:[%s1391 + $0x92] sm:$0xff]
      %v1791 = vld [vmem:[%s1391 + $0x9a] sm:$0xff]
      %v1792 = vld [vmem:[%s1391 + $0xaa] sm:$0xff]
      %v1793 = vld [vmem:[%s1391 + $0xb2] sm:$0xff]
      %v1794 = vld [vmem:[%s1391 + $0xc2] sm:$0xff]
      %v1795 = vld [vmem:[%s1391 + $0xca] sm:$0xff]
      %v1796 = vld [vmem:[%s1391 + $0xda] sm:$0xff]
      %v1797 = vld [vmem:[%s1391 + $0xe2] sm:$0xff]
      %v1798 = vld [vmem:[%s1391 + $0xf2] sm:$0xff]
      %v1799 = vld [vmem:[%s1391 + $0xfa] sm:$0xff]
      %v1800 = vld [vmem:[%s1391 + $0x10a] sm:$0xff]
      %v1801 = vld [vmem:[%s1391 + $0x112] sm:$0xff]
      %v1802 = vld [vmem:[%s1391 + $0x122] sm:$0xff]
      %v1803 = vld [vmem:[%s1391 + $0x12a] sm:$0xff]
      %v1804 = vld [vmem:[%s1391 + $0x13a] sm:$0xff]
      %v1805 = vld [vmem:[%s1391 + $0x142] sm:$0xff]
      %v1806 = vld [vmem:[%s1391 + $0x152] sm:$0xff]
      %v1807 = vld [vmem:[%s1391 + $0x15a] sm:$0xff]
      %v1808 = vld [vmem:[%s1391 + $0x16a] sm:$0xff]
      %v1809 = vld [vmem:[%s1391 + $0x172] sm:$0xff]
      %1842 = vrot.lane.b32.xlu0 %v1778, 32
      %v1843 = vpop.permute.xlu0 %1842
      %1844 = vrot.lane.b32.xlu0 %v1779, 32
      %v1845 = vpop.permute.xlu0 %1844
      %1846 = vrot.lane.b32.xlu0 %v1780, 32
      %v1847 = vpop.permute.xlu0 %1846
      %1848 = vrot.lane.b32.xlu0 %v1781, 32
      %v1849 = vpop.permute.xlu0 %1848
      %1850 = vrot.lane.b32.xlu0 %v1782, 32
      %v1851 = vpop.permute.xlu0 %1850
      %1852 = vrot.lane.b32.xlu0 %v1783, 32
      %v1853 = vpop.permute.xlu0 %1852
      %1854 = vrot.lane.b32.xlu0 %v1784, 32
      %v1855 = vpop.permute.xlu0 %1854
      %1856 = vrot.lane.b32.xlu0 %v1785, 32
      %v1857 = vpop.permute.xlu0 %1856
      %1858 = vrot.lane.b32.xlu0 %v1786, 32
      %v1859 = vpop.permute.xlu0 %1858
      %1860 = vrot.lane.b32.xlu0 %v1787, 32
      %v1861 = vpop.permute.xlu0 %1860
      %1862 = vrot.lane.b32.xlu0 %v1788, 32
      %v1863 = vpop.permute.xlu0 %1862
      %1864 = vrot.lane.b32.xlu0 %v1789, 32
      %v1865 = vpop.permute.xlu0 %1864
      %1866 = vrot.lane.b32.xlu0 %v1790, 32
      %v1867 = vpop.permute.xlu0 %1866
      %1868 = vrot.lane.b32.xlu0 %v1791, 32
      %v1869 = vpop.permute.xlu0 %1868
      %1870 = vrot.lane.b32.xlu0 %v1792, 32
      %v1871 = vpop.permute.xlu0 %1870
      %1872 = vrot.lane.b32.xlu0 %v1793, 32
      %v1873 = vpop.permute.xlu0 %1872
      %1874 = vrot.lane.b32.xlu0 %v1794, 32
      %v1875 = vpop.permute.xlu0 %1874
      %1876 = vrot.lane.b32.xlu0 %v1795, 32
      %v1877 = vpop.permute.xlu0 %1876
      %1878 = vrot.lane.b32.xlu0 %v1796, 32
      %v1879 = vpop.permute.xlu0 %1878
      %1880 = vrot.lane.b32.xlu0 %v1797, 32
      %v1881 = vpop.permute.xlu0 %1880
      %1882 = vrot.lane.b32.xlu0 %v1798, 32
      %v1883 = vpop.permute.xlu0 %1882
      %1884 = vrot.lane.b32.xlu0 %v1799, 32
      %v1885 = vpop.permute.xlu0 %1884
      %1886 = vrot.lane.b32.xlu0 %v1800, 32
      %v1887 = vpop.permute.xlu0 %1886
      %1888 = vrot.lane.b32.xlu0 %v1801, 32
      %v1889 = vpop.permute.xlu0 %1888
      %1890 = vrot.lane.b32.xlu0 %v1802, 32
      %v1891 = vpop.permute.xlu0 %1890
      %1892 = vrot.lane.b32.xlu0 %v1803, 32
      %v1893 = vpop.permute.xlu0 %1892
      %1894 = vrot.lane.b32.xlu0 %v1804, 32
      %v1895 = vpop.permute.xlu0 %1894
      %1896 = vrot.lane.b32.xlu0 %v1805, 32
      %v1897 = vpop.permute.xlu0 %1896
      %1898 = vrot.lane.b32.xlu0 %v1806, 32
      %v1899 = vpop.permute.xlu0 %1898
      %1900 = vrot.lane.b32.xlu0 %v1807, 32
      %v1901 = vpop.permute.xlu0 %1900
      %1902 = vrot.lane.b32.xlu0 %v1808, 32
      %v1903 = vpop.permute.xlu0 %1902
      %1904 = vrot.lane.b32.xlu0 %v1809, 32
      %v1905 = vpop.permute.xlu0 %1904
      %vm1938 = vcmask 294144
      %1939 = vst.msk [vmem:[#allocation2] sm:$0xff] %vm1938, %v1843
      %1940 = vst.msk [vmem:[#allocation2 + $0x8] sm:$0xff] %vm1938, %v1845
      %1941 = vst.msk [vmem:[#allocation2 + $0x10] sm:$0xff] %vm1938, %v1847
      %1942 = vst.msk [vmem:[#allocation2 + $0x18] sm:$0xff] %vm1938, %v1849
      %1943 = vst.msk [vmem:[#allocation2 + $0x20] sm:$0xff] %vm1938, %v1851
      %1944 = vst.msk [vmem:[#allocation2 + $0x28] sm:$0xff] %vm1938, %v1853
      %1945 = vst.msk [vmem:[#allocation2 + $0x30] sm:$0xff] %vm1938, %v1855
      %1946 = vst.msk [vmem:[#allocation2 + $0x38] sm:$0xff] %vm1938, %v1857
      %1947 = vst.msk [vmem:[#allocation2 + $0x40] sm:$0xff] %vm1938, %v1859
      %1948 = vst.msk [vmem:[#allocation2 + $0x48] sm:$0xff] %vm1938, %v1861
      %1949 = vst.msk [vmem:[#allocation2 + $0x50] sm:$0xff] %vm1938, %v1863
      %1950 = vst.msk [vmem:[#allocation2 + $0x58] sm:$0xff] %vm1938, %v1865
      %1951 = vst.msk [vmem:[#allocation2 + $0x60] sm:$0xff] %vm1938, %v1867
      %1952 = vst.msk [vmem:[#allocation2 + $0x68] sm:$0xff] %vm1938, %v1869
      %1953 = vst.msk [vmem:[#allocation2 + $0x70] sm:$0xff] %vm1938, %v1871
      %1954 = vst.msk [vmem:[#allocation2 + $0x78] sm:$0xff] %vm1938, %v1873
      %1955 = vst.msk [vmem:[#allocation2 + $0x80] sm:$0xff] %vm1938, %v1875
      %1956 = vst.msk [vmem:[#allocation2 + $0x88] sm:$0xff] %vm1938, %v1877
      %1957 = vst.msk [vmem:[#allocation2 + $0x90] sm:$0xff] %vm1938, %v1879
      %1958 = vst.msk [vmem:[#allocation2 + $0x98] sm:$0xff] %vm1938, %v1881
      %1959 = vst.msk [vmem:[#allocation2 + $0xa0] sm:$0xff] %vm1938, %v1883
      %1960 = vst.msk [vmem:[#allocation2 + $0xa8] sm:$0xff] %vm1938, %v1885
      %1961 = vst.msk [vmem:[#allocation2 + $0xb0] sm:$0xff] %vm1938, %v1887
      %1962 = vst.msk [vmem:[#allocation2 + $0xb8] sm:$0xff] %vm1938, %v1889
      %1963 = vst.msk [vmem:[#allocation2 + $0xc0] sm:$0xff] %vm1938, %v1891
      %1964 = vst.msk [vmem:[#allocation2 + $0xc8] sm:$0xff] %vm1938, %v1893
      %1965 = vst.msk [vmem:[#allocation2 + $0xd0] sm:$0xff] %vm1938, %v1895
      %1966 = vst.msk [vmem:[#allocation2 + $0xd8] sm:$0xff] %vm1938, %v1897
      %1967 = vst.msk [vmem:[#allocation2 + $0xe0] sm:$0xff] %vm1938, %v1899
      %1968 = vst.msk [vmem:[#allocation2 + $0xe8] sm:$0xff] %vm1938, %v1901
      %1969 = vst.msk [vmem:[#allocation2 + $0xf0] sm:$0xff] %vm1938, %v1903
      %1970 = vst.msk [vmem:[#allocation2 + $0xf8] sm:$0xff] %vm1938, %v1905
      %v1971 = vld [vmem:[#allocation2] sm:$0xff]
      %v1972 = vld [vmem:[#allocation2 + $0x8] sm:$0xff]
      %v1973 = vld [vmem:[#allocation2 + $0x10] sm:$0xff]
      %v1974 = vld [vmem:[#allocation2 + $0x18] sm:$0xff]
      %v1975 = vld [vmem:[#allocation2 + $0x20] sm:$0xff]
      %v1976 = vld [vmem:[#allocation2 + $0x28] sm:$0xff]
      %v1977 = vld [vmem:[#allocation2 + $0x30] sm:$0xff]
      %v1978 = vld [vmem:[#allocation2 + $0x38] sm:$0xff]
      %v1979 = vld [vmem:[#allocation2 + $0x40] sm:$0xff]
      %v1980 = vld [vmem:[#allocation2 + $0x48] sm:$0xff]
      %v1981 = vld [vmem:[#allocation2 + $0x50] sm:$0xff]
      %v1982 = vld [vmem:[#allocation2 + $0x58] sm:$0xff]
      %v1983 = vld [vmem:[#allocation2 + $0x60] sm:$0xff]
      %v1984 = vld [vmem:[#allocation2 + $0x68] sm:$0xff]
      %v1985 = vld [vmem:[#allocation2 + $0x70] sm:$0xff]
      %v1986 = vld [vmem:[#allocation2 + $0x78] sm:$0xff]
      %v1987 = vld [vmem:[#allocation2 + $0x80] sm:$0xff]
      %v1988 = vld [vmem:[#allocation2 + $0x88] sm:$0xff]
      %v1989 = vld [vmem:[#allocation2 + $0x90] sm:$0xff]
      %v1990 = vld [vmem:[#allocation2 + $0x98] sm:$0xff]
      %v1991 = vld [vmem:[#allocation2 + $0xa0] sm:$0xff]
      %v1992 = vld [vmem:[#allocation2 + $0xa8] sm:$0xff]
      %v1993 = vld [vmem:[#allocation2 + $0xb0] sm:$0xff]
      %v1994 = vld [vmem:[#allocation2 + $0xb8] sm:$0xff]
      %v1995 = vld [vmem:[#allocation2 + $0xc0] sm:$0xff]
      %v1996 = vld [vmem:[#allocation2 + $0xc8] sm:$0xff]
      %v1997 = vld [vmem:[#allocation2 + $0xd0] sm:$0xff]
      %v1998 = vld [vmem:[#allocation2 + $0xd8] sm:$0xff]
      %v1999 = vld [vmem:[#allocation2 + $0xe0] sm:$0xff]
      %v2000 = vld [vmem:[#allocation2 + $0xe8] sm:$0xff]
      %v2001 = vld [vmem:[#allocation2 + $0xf0] sm:$0xff]
      %v2002 = vld [vmem:[#allocation2 + $0xf8] sm:$0xff]
      %v2003 = vld [vmem:[%s1] sm:$0xff]
      %v2004 = vld [vmem:[%s1 + $0x8] sm:$0xff]
      %v2005 = vld [vmem:[%s1 + $0x10] sm:$0xff]
      %v2006 = vld [vmem:[%s1 + $0x18] sm:$0xff]
      %v2007 = vld [vmem:[%s1 + $0x20] sm:$0xf]
      %v2008 = vld [vmem:[%s4] sm:$0x1]
      %v2010 = vlaneseq
      %v2011 = vshrl.u32 %v2010, 7
      %v2012 = vsub.s32 0, %v2011
      %v2013 = vrot.slane %v2008, %v2012
      %vm2015 = vcmask 293888
      %v2017 = vsel %vm2015, %v1971, 0
      %v2020 = vsel %vm2015, %v1972, 0
      %v2023 = vsel %vm2015, %v1973, 0
      %v2026 = vsel %vm2015, %v1974, 0
      %v2029 = vsel %vm2015, %v1975, 0
      %v2032 = vsel %vm2015, %v1976, 0
      %v2035 = vsel %vm2015, %v1977, 0
      %v2038 = vsel %vm2015, %v1978, 0
      %v2041 = vsel %vm2015, %v1979, 0
      %v2044 = vsel %vm2015, %v1980, 0
      %v2047 = vsel %vm2015, %v1981, 0
      %v2050 = vsel %vm2015, %v1982, 0
      %v2053 = vsel %vm2015, %v1983, 0
      %v2056 = vsel %vm2015, %v1984, 0
      %v2059 = vsel %vm2015, %v1985, 0
      %v2062 = vsel %vm2015, %v1986, 0
      %v2065 = vsel %vm2015, %v1987, 0
      %v2068 = vsel %vm2015, %v1988, 0
      %v2071 = vsel %vm2015, %v1989, 0
      %v2074 = vsel %vm2015, %v1990, 0
      %v2077 = vsel %vm2015, %v1991, 0
      %v2080 = vsel %vm2015, %v1992, 0
      %v2083 = vsel %vm2015, %v1993, 0
      %v2086 = vsel %vm2015, %v1994, 0
      %v2089 = vsel %vm2015, %v1995, 0
      %v2092 = vsel %vm2015, %v1996, 0
      %v2095 = vsel %vm2015, %v1997, 0
      %v2098 = vsel %vm2015, %v1998, 0
      %v2101 = vsel %vm2015, %v1999, 0
      %v2104 = vsel %vm2015, %v2000, 0
      %v2107 = vsel %vm2015, %v2001, 0
      %v2110 = vsel %vm2015, %v2002, 0
      %vm2112 = vcmask 1043456
      %v2114 = vsel %vm2112, %v2007, 0
      %2116 = vmatprep.subr.mxu0 0.0
      %2117 = vmatpush1.msra.mxu0 %v2003
      %2118 = vmatprep.subr.mxu0 0.0
      %2119 = vmatpush1.msra.mxu0 %v2004
      %2120 = vmatprep.subr.mxu0 0.0
      %2121 = vmatpush1.msra.mxu0 %v2005
      %2122 = vmatprep.subr.mxu0 0.0
      %2123 = vmatpush1.msra.mxu0 %v2006
      %2124 = vmatprep.subr.mxu0 0.0
      %2125 = vmatpush1.msra.mxu0 %v2114
      %2126 = vmatprep.subr.mxu0 0.0
      %2127 = vmatpush1.msra.mxu0 0.0
      %2128 = vmatprep.subr.mxu0 0.0
      %2129 = vmatpush1.msra.mxu0 0.0
      %2130 = vmatprep.subr.mxu0 0.0
      %2131 = vmatpush1.msra.mxu0 0.0
      %2132 = vmatprep.subr.mxu0 0.0
      %2133 = vmatpush1.msra.mxu0 0.0
      %2134 = vmatprep.subr.mxu0 0.0
      %2135 = vmatpush1.msra.mxu0 0.0
      %2136 = vmatprep.subr.mxu0 0.0
      %2137 = vmatpush1.msra.mxu0 0.0
      %2138 = vmatprep.subr.mxu0 0.0
      %2139 = vmatpush1.msra.mxu0 0.0
      %2140 = vmatprep.subr.mxu0 0.0
      %2141 = vmatpush1.msra.mxu0 0.0
      %2142 = vmatprep.subr.mxu0 0.0
      %2143 = vmatpush1.msra.mxu0 0.0
      %2144 = vmatprep.subr.mxu0 0.0
      %2145 = vmatpush1.msra.mxu0 0.0
      %2146 = vmatprep.subr.mxu0 0.0
      %2147 = vmatpush1.msra.mxu0 0.0
      %2148 = vmatprep.subr.mxu0 0.0
      %2149 = vmatpush1.msra.mxu0 0.0
      %2150 = vmatprep.subr.mxu0 0.0
      %2151 = vmatpush1.msra.mxu0 0.0
      %2152 = vmatprep.subr.mxu0 0.0
      %2153 = vmatpush1.msra.mxu0 0.0
      %2154 = vmatprep.subr.mxu0 0.0
      %2155 = vmatpush1.msra.mxu0 0.0
      %2156 = vmatprep.subr.mxu0 0.0
      %2157 = vmatpush1.msra.mxu0 0.0
      %2158 = vmatprep.subr.mxu0 0.0
      %2159 = vmatpush1.msra.mxu0 0.0
      %2160 = vmatprep.subr.mxu0 0.0
      %2161 = vmatpush1.msra.mxu0 0.0
      %2162 = vmatprep.subr.mxu0 0.0
      %2163 = vmatpush1.msra.mxu0 0.0
      %2164 = vmatprep.subr.mxu0 0.0
      %2165 = vmatpush1.msra.mxu0 0.0
      %2166 = vmatprep.subr.mxu0 0.0
      %2167 = vmatpush1.msra.mxu0 0.0
      %2168 = vmatprep.subr.mxu0 0.0
      %2169 = vmatpush1.msra.mxu0 0.0
      %2170 = vmatprep.subr.mxu0 0.0
      %2171 = vmatpush1.msra.mxu0 0.0
      %2172 = vmatprep.subr.mxu0 0.0
      %2173 = vmatpush1.msra.mxu0 0.0
      %2174 = vmatprep.subr.mxu0 0.0
      %2175 = vmatpush1.msra.mxu0 0.0
      %2176 = vmatprep.subr.mxu0 0.0
      %2177 = vmatpush1.msra.mxu0 0.0
      %2178 = vmatprep.subr.mxu0 0.0
      %2179 = vmatpush1.msra.mxu0 0.0
      %2180 = vmatprep.mubr.f32.mxu0 0.0
      %2181 = vmatmul.mubr.f32.gmra.mrb[0].mxu0 %v2017
      %v2182 = vpop.f32.mrb[0].mxu0
      %v2183 = vadd.f32 %v2013, %v2182
      %v2184 = vpop.f32.mrb[0].mxu0
      %2185 = vmatprep.mubr.f32.mxu0 0.0
      %2186 = vmatmul.mubr.f32.gmra.mrb[0].mxu0 %v2020
      %v2187 = vpop.f32.mrb[0].mxu0
      %v2188 = vadd.f32 %v2013, %v2187
      %v2189 = vpop.f32.mrb[0].mxu0
      %2190 = vmatprep.mubr.f32.mxu0 0.0
      %2191 = vmatmul.mubr.f32.gmra.mrb[0].mxu0 %v2023
      %v2192 = vpop.f32.mrb[0].mxu0
      %v2193 = vadd.f32 %v2013, %v2192
      %v2194 = vpop.f32.mrb[0].mxu0
      %2195 = vmatprep.mubr.f32.mxu0 0.0
      %2196 = vmatmul.mubr.f32.gmra.mrb[0].mxu0 %v2026
      %v2197 = vpop.f32.mrb[0].mxu0
      %v2198 = vadd.f32 %v2013, %v2197
      %v2199 = vpop.f32.mrb[0].mxu0
      %2200 = vmatprep.mubr.f32.mxu0 0.0
      %2201 = vmatmul.mubr.f32.gmra.mrb[0].mxu0 %v2029
      %v2202 = vpop.f32.mrb[0].mxu0
      %v2203 = vadd.f32 %v2013, %v2202
      %v2204 = vpop.f32.mrb[0].mxu0
      %2205 = vmatprep.mubr.f32.mxu0 0.0
      %2206 = vmatmul.mubr.f32.gmra.mrb[0].mxu0 %v2032
      %v2207 = vpop.f32.mrb[0].mxu0
      %v2208 = vadd.f32 %v2013, %v2207
      %v2209 = vpop.f32.mrb[0].mxu0
      %2210 = vmatprep.mubr.f32.mxu0 0.0
      %2211 = vmatmul.mubr.f32.gmra.mrb[0].mxu0 %v2035
      %v2212 = vpop.f32.mrb[0].mxu0
      %v2213 = vadd.f32 %v2013, %v2212
      %v2214 = vpop.f32.mrb[0].mxu0
      %2215 = vmatprep.mubr.f32.mxu0 0.0
      %2216 = vmatmul.mubr.f32.gmra.mrb[0].mxu0 %v2038
      %v2217 = vpop.f32.mrb[0].mxu0
      %v2218 = vadd.f32 %v2013, %v2217
      %v2219 = vpop.f32.mrb[0].mxu0
      %2220 = vmatprep.mubr.f32.mxu0 0.0
      %2221 = vmatmul.mubr.f32.gmra.mrb[0].mxu0 %v2041
      %v2222 = vpop.f32.mrb[0].mxu0
      %v2223 = vadd.f32 %v2013, %v2222
      %v2224 = vpop.f32.mrb[0].mxu0
      %2225 = vmatprep.mubr.f32.mxu0 0.0
      %2226 = vmatmul.mubr.f32.gmra.mrb[0].mxu0 %v2044
      %v2227 = vpop.f32.mrb[0].mxu0
      %v2228 = vadd.f32 %v2013, %v2227
      %v2229 = vpop.f32.mrb[0].mxu0
      %2230 = vmatprep.mubr.f32.mxu0 0.0
      %2231 = vmatmul.mubr.f32.gmra.mrb[0].mxu0 %v2047
      %v2232 = vpop.f32.mrb[0].mxu0
      %v2233 = vadd.f32 %v2013, %v2232
      %v2234 = vpop.f32.mrb[0].mxu0
      %2235 = vmatprep.mubr.f32.mxu0 0.0
      %2236 = vmatmul.mubr.f32.gmra.mrb[0].mxu0 %v2050
      %v2237 = vpop.f32.mrb[0].mxu0
      %v2238 = vadd.f32 %v2013, %v2237
      %v2239 = vpop.f32.mrb[0].mxu0
      %2240 = vmatprep.mubr.f32.mxu0 0.0
      %2241 = vmatmul.mubr.f32.gmra.mrb[0].mxu0 %v2053
      %v2242 = vpop.f32.mrb[0].mxu0
      %v2243 = vadd.f32 %v2013, %v2242
      %v2244 = vpop.f32.mrb[0].mxu0
      %2245 = vmatprep.mubr.f32.mxu0 0.0
      %2246 = vmatmul.mubr.f32.gmra.mrb[0].mxu0 %v2056
      %v2247 = vpop.f32.mrb[0].mxu0
      %v2248 = vadd.f32 %v2013, %v2247
      %v2249 = vpop.f32.mrb[0].mxu0
      %2250 = vmatprep.mubr.f32.mxu0 0.0
      %2251 = vmatmul.mubr.f32.gmra.mrb[0].mxu0 %v2059
      %v2252 = vpop.f32.mrb[0].mxu0
      %v2253 = vadd.f32 %v2013, %v2252
      %v2254 = vpop.f32.mrb[0].mxu0
      %2255 = vmatprep.mubr.f32.mxu0 0.0
      %2256 = vmatmul.mubr.f32.gmra.mrb[0].mxu0 %v2062
      %v2257 = vpop.f32.mrb[0].mxu0
      %v2258 = vadd.f32 %v2013, %v2257
      %v2259 = vpop.f32.mrb[0].mxu0
      %2260 = vmatprep.mubr.f32.mxu0 0.0
      %2261 = vmatmul.mubr.f32.gmra.mrb[0].mxu0 %v2065
      %v2262 = vpop.f32.mrb[0].mxu0
      %v2263 = vadd.f32 %v2013, %v2262
      %v2264 = vpop.f32.mrb[0].mxu0
      %2265 = vmatprep.mubr.f32.mxu0 0.0
      %2266 = vmatmul.mubr.f32.gmra.mrb[0].mxu0 %v2068
      %v2267 = vpop.f32.mrb[0].mxu0
      %v2268 = vadd.f32 %v2013, %v2267
      %v2269 = vpop.f32.mrb[0].mxu0
      %2270 = vmatprep.mubr.f32.mxu0 0.0
      %2271 = vmatmul.mubr.f32.gmra.mrb[0].mxu0 %v2071
      %v2272 = vpop.f32.mrb[0].mxu0
      %v2273 = vadd.f32 %v2013, %v2272
      %v2274 = vpop.f32.mrb[0].mxu0
      %2275 = vmatprep.mubr.f32.mxu0 0.0
      %2276 = vmatmul.mubr.f32.gmra.mrb[0].mxu0 %v2074
      %v2277 = vpop.f32.mrb[0].mxu0
      %v2278 = vadd.f32 %v2013, %v2277
      %v2279 = vpop.f32.mrb[0].mxu0
      %2280 = vmatprep.mubr.f32.mxu0 0.0
      %2281 = vmatmul.mubr.f32.gmra.mrb[0].mxu0 %v2077
      %v2282 = vpop.f32.mrb[0].mxu0
      %v2283 = vadd.f32 %v2013, %v2282
      %v2284 = vpop.f32.mrb[0].mxu0
      %2285 = vmatprep.mubr.f32.mxu0 0.0
      %2286 = vmatmul.mubr.f32.gmra.mrb[0].mxu0 %v2080
      %v2287 = vpop.f32.mrb[0].mxu0
      %v2288 = vadd.f32 %v2013, %v2287
      %v2289 = vpop.f32.mrb[0].mxu0
      %2290 = vmatprep.mubr.f32.mxu0 0.0
      %2291 = vmatmul.mubr.f32.gmra.mrb[0].mxu0 %v2083
      %v2292 = vpop.f32.mrb[0].mxu0
      %v2293 = vadd.f32 %v2013, %v2292
      %v2294 = vpop.f32.mrb[0].mxu0
      %2295 = vmatprep.mubr.f32.mxu0 0.0
      %2296 = vmatmul.mubr.f32.gmra.mrb[0].mxu0 %v2086
      %v2297 = vpop.f32.mrb[0].mxu0
      %v2298 = vadd.f32 %v2013, %v2297
      %v2299 = vpop.f32.mrb[0].mxu0
      %2300 = vmatprep.mubr.f32.mxu0 0.0
      %2301 = vmatmul.mubr.f32.gmra.mrb[0].mxu0 %v2089
      %v2302 = vpop.f32.mrb[0].mxu0
      %v2303 = vadd.f32 %v2013, %v2302
      %v2304 = vpop.f32.mrb[0].mxu0
      %2305 = vmatprep.mubr.f32.mxu0 0.0
      %2306 = vmatmul.mubr.f32.gmra.mrb[0].mxu0 %v2092
      %v2307 = vpop.f32.mrb[0].mxu0
      %v2308 = vadd.f32 %v2013, %v2307
      %v2309 = vpop.f32.mrb[0].mxu0
      %2310 = vmatprep.mubr.f32.mxu0 0.0
      %2311 = vmatmul.mubr.f32.gmra.mrb[0].mxu0 %v2095
      %v2312 = vpop.f32.mrb[0].mxu0
      %v2313 = vadd.f32 %v2013, %v2312
      %v2314 = vpop.f32.mrb[0].mxu0
      %2315 = vmatprep.mubr.f32.mxu0 0.0
      %2316 = vmatmul.mubr.f32.gmra.mrb[0].mxu0 %v2098
      %v2317 = vpop.f32.mrb[0].mxu0
      %v2318 = vadd.f32 %v2013, %v2317
      %v2319 = vpop.f32.mrb[0].mxu0
      %2320 = vmatprep.mubr.f32.mxu0 0.0
      %2321 = vmatmul.mubr.f32.gmra.mrb[0].mxu0 %v2101
      %v2322 = vpop.f32.mrb[0].mxu0
      %v2323 = vadd.f32 %v2013, %v2322
      %v2324 = vpop.f32.mrb[0].mxu0
      %2325 = vmatprep.mubr.f32.mxu0 0.0
      %2326 = vmatmul.mubr.f32.gmra.mrb[0].mxu0 %v2104
      %v2327 = vpop.f32.mrb[0].mxu0
      %v2328 = vadd.f32 %v2013, %v2327
      %v2329 = vpop.f32.mrb[0].mxu0
      %2330 = vmatprep.mubr.f32.mxu0 0.0
      %2331 = vmatmul.mubr.f32.gmra.mrb[0].mxu0 %v2107
      %v2332 = vpop.f32.mrb[0].mxu0
      %v2333 = vadd.f32 %v2013, %v2332
      %v2334 = vpop.f32.mrb[0].mxu0
      %2335 = vmatprep.mubr.f32.mxu0 0.0
      %2336 = vmatmul.mubr.f32.gmra.mrb[0].mxu0 %v2110
      %v2337 = vpop.f32.mrb[0].mxu0
      %v2338 = vadd.f32 %v2013, %v2337
      %v2339 = vpop.f32.mrb[0].mxu0
      %2340 = vdwg.mxu0
      %vm2341 = vcmp.ge.f32.partialorder %v2183, 0.0
      %vm2342 = vcmp.ge.f32.partialorder %v2188, 0.0
      %vm2343 = vcmp.ge.f32.partialorder %v2193, 0.0
      %vm2344 = vcmp.ge.f32.partialorder %v2198, 0.0
      %vm2345 = vcmp.ge.f32.partialorder %v2203, 0.0
      %vm2346 = vcmp.ge.f32.partialorder %v2208, 0.0
      %vm2347 = vcmp.ge.f32.partialorder %v2213, 0.0
      %vm2348 = vcmp.ge.f32.partialorder %v2218, 0.0
      %vm2349 = vcmp.ge.f32.partialorder %v2223, 0.0
      %vm2350 = vcmp.ge.f32.partialorder %v2228, 0.0
      %vm2351 = vcmp.ge.f32.partialorder %v2233, 0.0
      %vm2352 = vcmp.ge.f32.partialorder %v2238, 0.0
      %vm2353 = vcmp.ge.f32.partialorder %v2243, 0.0
      %vm2354 = vcmp.ge.f32.partialorder %v2248, 0.0
      %vm2355 = vcmp.ge.f32.partialorder %v2253, 0.0
      %vm2356 = vcmp.ge.f32.partialorder %v2258, 0.0
      %vm2357 = vcmp.ge.f32.partialorder %v2263, 0.0
      %vm2358 = vcmp.ge.f32.partialorder %v2268, 0.0
      %vm2359 = vcmp.ge.f32.partialorder %v2273, 0.0
      %vm2360 = vcmp.ge.f32.partialorder %v2278, 0.0
      %vm2361 = vcmp.ge.f32.partialorder %v2283, 0.0
      %vm2362 = vcmp.ge.f32.partialorder %v2288, 0.0
      %vm2363 = vcmp.ge.f32.partialorder %v2293, 0.0
      %vm2364 = vcmp.ge.f32.partialorder %v2298, 0.0
      %vm2365 = vcmp.ge.f32.partialorder %v2303, 0.0
      %vm2366 = vcmp.ge.f32.partialorder %v2308, 0.0
      %vm2367 = vcmp.ge.f32.partialorder %v2313, 0.0
      %vm2368 = vcmp.ge.f32.partialorder %v2318, 0.0
      %vm2369 = vcmp.ge.f32.partialorder %v2323, 0.0
      %vm2370 = vcmp.ge.f32.partialorder %v2328, 0.0
      %vm2371 = vcmp.ge.f32.partialorder %v2333, 0.0
      %vm2372 = vcmp.ge.f32.partialorder %v2338, 0.0
      %v2373 = vmul.f32 %v2183, 0.01
      %v2374 = vmul.f32 %v2188, 0.01
      %v2375 = vmul.f32 %v2193, 0.01
      %v2376 = vmul.f32 %v2198, 0.01
      %v2377 = vmul.f32 %v2203, 0.01
      %v2378 = vmul.f32 %v2208, 0.01
      %v2379 = vmul.f32 %v2213, 0.01
      %v2380 = vmul.f32 %v2218, 0.01
      %v2381 = vmul.f32 %v2223, 0.01
      %v2382 = vmul.f32 %v2228, 0.01
      %v2383 = vmul.f32 %v2233, 0.01
      %v2384 = vmul.f32 %v2238, 0.01
      %v2385 = vmul.f32 %v2243, 0.01
      %v2386 = vmul.f32 %v2248, 0.01
      %v2387 = vmul.f32 %v2253, 0.01
      %v2388 = vmul.f32 %v2258, 0.01
      %v2389 = vmul.f32 %v2263, 0.01
      %v2390 = vmul.f32 %v2268, 0.01
      %v2391 = vmul.f32 %v2273, 0.01
      %v2392 = vmul.f32 %v2278, 0.01
      %v2393 = vmul.f32 %v2283, 0.01
      %v2394 = vmul.f32 %v2288, 0.01
      %v2395 = vmul.f32 %v2293, 0.01
      %v2396 = vmul.f32 %v2298, 0.01
      %v2397 = vmul.f32 %v2303, 0.01
      %v2398 = vmul.f32 %v2308, 0.01
      %v2399 = vmul.f32 %v2313, 0.01
      %v2400 = vmul.f32 %v2318, 0.01
      %v2401 = vmul.f32 %v2323, 0.01
      %v2402 = vmul.f32 %v2328, 0.01
      %v2403 = vmul.f32 %v2333, 0.01
      %v2404 = vmul.f32 %v2338, 0.01
      %v2405 = vsel %vm2341, %v2183, %v2373
      %v2406 = vsel %vm2342, %v2188, %v2374
      %v2407 = vsel %vm2343, %v2193, %v2375
      %v2408 = vsel %vm2344, %v2198, %v2376
      %v2409 = vsel %vm2345, %v2203, %v2377
      %v2410 = vsel %vm2346, %v2208, %v2378
      %v2411 = vsel %vm2347, %v2213, %v2379
      %v2412 = vsel %vm2348, %v2218, %v2380
      %v2413 = vsel %vm2349, %v2223, %v2381
      %v2414 = vsel %vm2350, %v2228, %v2382
      %v2415 = vsel %vm2351, %v2233, %v2383
      %v2416 = vsel %vm2352, %v2238, %v2384
      %v2417 = vsel %vm2353, %v2243, %v2385
      %v2418 = vsel %vm2354, %v2248, %v2386
      %v2419 = vsel %vm2355, %v2253, %v2387
      %v2420 = vsel %vm2356, %v2258, %v2388
      %v2421 = vsel %vm2357, %v2263, %v2389
      %v2422 = vsel %vm2358, %v2268, %v2390
      %v2423 = vsel %vm2359, %v2273, %v2391
      %v2424 = vsel %vm2360, %v2278, %v2392
      %v2425 = vsel %vm2361, %v2283, %v2393
      %v2426 = vsel %vm2362, %v2288, %v2394
      %v2427 = vsel %vm2363, %v2293, %v2395
      %v2428 = vsel %vm2364, %v2298, %v2396
      %v2429 = vsel %vm2365, %v2303, %v2397
      %v2430 = vsel %vm2366, %v2308, %v2398
      %v2431 = vsel %vm2367, %v2313, %v2399
      %v2432 = vsel %vm2368, %v2318, %v2400
      %v2433 = vsel %vm2369, %v2323, %v2401
      %v2434 = vsel %vm2370, %v2328, %v2402
      %v2435 = vsel %vm2371, %v2333, %v2403
      %v2436 = vsel %vm2372, %v2338, %v2404
      %v2437 = vld [vmem:[%s7] sm:$0xff]
      %v2438 = vld [vmem:[%s7 + $0x8] sm:$0xff]
      %v2439 = vld [vmem:[%s7 + $0x10] sm:$0xff]
      %v2440 = vld [vmem:[%s7 + $0x18] sm:$0xff]
      %v2441 = vld [vmem:[%s7 + $0x20] sm:$0xff]
      %v2442 = vld [vmem:[%s7 + $0x28] sm:$0xff]
      %v2443 = vld [vmem:[%s7 + $0x30] sm:$0xff]
      %v2444 = vld [vmem:[%s7 + $0x38] sm:$0xff]
      %v2445 = vld [vmem:[%s7 + $0x40] sm:$0xff]
      %v2446 = vld [vmem:[%s7 + $0x48] sm:$0xff]
      %v2447 = vld [vmem:[%s7 + $0x50] sm:$0xff]
      %v2448 = vld [vmem:[%s7 + $0x58] sm:$0xff]
      %v2449 = vld [vmem:[%s7 + $0x60] sm:$0xff]
      %v2450 = vld [vmem:[%s7 + $0x68] sm:$0xff]
      %v2451 = vld [vmem:[%s7 + $0x70] sm:$0xff]
      %v2452 = vld [vmem:[%s7 + $0x78] sm:$0xff]
      %2453 = vmatprep.subr.mxu0 0.0
      %2454 = vmatpush1.msra.mxu0 %v2405
      %2455 = vmatprep.subr.mxu0 0.0
      %2456 = vmatpush1.msra.mxu0 %v2406
      %2457 = vmatprep.subr.mxu0 0.0
      %2458 = vmatpush1.msra.mxu0 %v2407
      %2459 = vmatprep.subr.mxu0 0.0
      %2460 = vmatpush1.msra.mxu0 %v2408
      %2461 = vmatprep.subr.mxu0 0.0
      %2462 = vmatpush1.msra.mxu0 %v2409
      %2463 = vmatprep.subr.mxu0 0.0
      %2464 = vmatpush1.msra.mxu0 %v2410
      %2465 = vmatprep.subr.mxu0 0.0
      %2466 = vmatpush1.msra.mxu0 %v2411
      %2467 = vmatprep.subr.mxu0 0.0
      %2468 = vmatpush1.msra.mxu0 %v2412
      %2469 = vmatprep.subr.mxu0 0.0
      %2470 = vmatpush1.msra.mxu0 %v2413
      %2471 = vmatprep.subr.mxu0 0.0
      %2472 = vmatpush1.msra.mxu0 %v2414
      %2473 = vmatprep.subr.mxu0 0.0
      %2474 = vmatpush1.msra.mxu0 %v2415
      %2475 = vmatprep.subr.mxu0 0.0
      %2476 = vmatpush1.msra.mxu0 %v2416
      %2477 = vmatprep.subr.mxu0 0.0
      %2478 = vmatpush1.msra.mxu0 %v2417
      %2479 = vmatprep.subr.mxu0 0.0
      %2480 = vmatpush1.msra.mxu0 %v2418
      %2481 = vmatprep.subr.mxu0 0.0
      %2482 = vmatpush1.msra.mxu0 %v2419
      %2483 = vmatprep.subr.mxu0 0.0
      %2484 = vmatpush1.msra.mxu0 %v2420
      %2485 = vmatprep.subr.mxu0 0.0
      %2486 = vmatpush1.msra.mxu0 %v2421
      %2487 = vmatprep.subr.mxu0 0.0
      %2488 = vmatpush1.msra.mxu0 %v2422
      %2489 = vmatprep.subr.mxu0 0.0
      %2490 = vmatpush1.msra.mxu0 %v2423
      %2491 = vmatprep.subr.mxu0 0.0
      %2492 = vmatpush1.msra.mxu0 %v2424
      %2493 = vmatprep.subr.mxu0 0.0
      %2494 = vmatpush1.msra.mxu0 %v2425
      %2495 = vmatprep.subr.mxu0 0.0
      %2496 = vmatpush1.msra.mxu0 %v2426
      %2497 = vmatprep.subr.mxu0 0.0
      %2498 = vmatpush1.msra.mxu0 %v2427
      %2499 = vmatprep.subr.mxu0 0.0
      %2500 = vmatpush1.msra.mxu0 %v2428
      %2501 = vmatprep.subr.mxu0 0.0
      %2502 = vmatpush1.msra.mxu0 %v2429
      %2503 = vmatprep.subr.mxu0 0.0
      %2504 = vmatpush1.msra.mxu0 %v2430
      %2505 = vmatprep.subr.mxu0 0.0
      %2506 = vmatpush1.msra.mxu0 %v2431
      %2507 = vmatprep.subr.mxu0 0.0
      %2508 = vmatpush1.msra.mxu0 %v2432
      %2509 = vmatprep.subr.mxu0 0.0
      %2510 = vmatpush1.msra.mxu0 %v2433
      %2511 = vmatprep.subr.mxu0 0.0
      %2512 = vmatpush1.msra.mxu0 %v2434
      %2513 = vmatprep.subr.mxu0 0.0
      %2514 = vmatpush1.msra.mxu0 %v2435
      %2515 = vmatprep.subr.mxu0 0.0
      %2516 = vmatpush1.msra.mxu0 %v2436
      %2517 = vmatprep.mubr.f32.mxu0 %v2438
      %2518 = vmatmul.mubr.f32.gmra.mrb[0].mxu0 %v2437
      %v2519 = vpop.f32.mrb[0].mxu0
      %v2520 = vadd.f32 0.0, %v2519
      %v2521 = vpop.f32.mrb[0].mxu0
      %2522 = vmatprep.mubr.f32.mxu0 %v2440
      %2523 = vmatmul.mubr.f32.gmra.mrb[0].mxu0 %v2439
      %v2524 = vpop.f32.mrb[0].mxu0
      %v2525 = vadd.f32 0.0, %v2524
      %v2526 = vpop.f32.mrb[0].mxu0
      %2527 = vmatprep.mubr.f32.mxu0 %v2442
      %2528 = vmatmul.mubr.f32.gmra.mrb[0].mxu0 %v2441
      %v2529 = vpop.f32.mrb[0].mxu0
      %v2530 = vadd.f32 0.0, %v2529
      %v2531 = vpop.f32.mrb[0].mxu0
      %2532 = vmatprep.mubr.f32.mxu0 %v2444
      %2533 = vmatmul.mubr.f32.gmra.mrb[0].mxu0 %v2443
      %v2534 = vpop.f32.mrb[0].mxu0
      %v2535 = vadd.f32 0.0, %v2534
      %v2536 = vpop.f32.mrb[0].mxu0
      %2537 = vmatprep.mubr.f32.mxu0 %v2446
      %2538 = vmatmul.mubr.f32.gmra.mrb[0].mxu0 %v2445
      %v2539 = vpop.f32.mrb[0].mxu0
      %v2540 = vadd.f32 0.0, %v2539
      %v2541 = vpop.f32.mrb[0].mxu0
      %2542 = vmatprep.mubr.f32.mxu0 %v2448
      %2543 = vmatmul.mubr.f32.gmra.mrb[0].mxu0 %v2447
      %v2544 = vpop.f32.mrb[0].mxu0
      %v2545 = vadd.f32 0.0, %v2544
      %v2546 = vpop.f32.mrb[0].mxu0
      %2547 = vmatprep.mubr.f32.mxu0 %v2450
      %2548 = vmatmul.mubr.f32.gmra.mrb[0].mxu0 %v2449
      %v2549 = vpop.f32.mrb[0].mxu0
      %v2550 = vadd.f32 0.0, %v2549
      %v2551 = vpop.f32.mrb[0].mxu0
      %2552 = vmatprep.mubr.f32.mxu0 %v2452
      %2553 = vmatmul.mubr.f32.gmra.mrb[0].mxu0 %v2451
      %v2554 = vpop.f32.mrb[0].mxu0
      %v2555 = vadd.f32 0.0, %v2554
      %v2556 = vpop.f32.mrb[0].mxu0
      %2557 = vdwg.mxu0
      %v2558 = vld [vmem:[%s9] sm:$0xff]
      %v2559 = vld [vmem:[%s9 + $0x8] sm:$0xff]
      %v2560 = vld [vmem:[%s9 + $0x10] sm:$0xff]
      %v2561 = vld [vmem:[%s9 + $0x18] sm:$0xff]
      %v2562 = vld [vmem:[%s9 + $0x20] sm:$0xff]
      %v2563 = vld [vmem:[%s9 + $0x28] sm:$0xff]
      %v2564 = vld [vmem:[%s9 + $0x30] sm:$0xff]
      %v2565 = vld [vmem:[%s9 + $0x38] sm:$0xff]
      %v2566 = vld [vmem:[%s9 + $0x40] sm:$0xff]
      %v2567 = vld [vmem:[%s9 + $0x48] sm:$0xff]
      %v2568 = vld [vmem:[%s9 + $0x50] sm:$0xff]
      %v2569 = vld [vmem:[%s9 + $0x58] sm:$0xff]
      %v2570 = vld [vmem:[%s9 + $0x60] sm:$0xff]
      %v2571 = vld [vmem:[%s9 + $0x68] sm:$0xff]
      %v2572 = vld [vmem:[%s9 + $0x70] sm:$0xff]
      %v2573 = vld [vmem:[%s9 + $0x78] sm:$0xff]
      %v2574 = vld [vmem:[%s9 + $0x80] sm:$0xff]
      %v2575 = vld [vmem:[%s9 + $0x88] sm:$0xff]
      %v2576 = vld [vmem:[%s9 + $0x90] sm:$0xff]
      %v2577 = vld [vmem:[%s9 + $0x98] sm:$0xff]
      %v2578 = vld [vmem:[%s9 + $0xa0] sm:$0xff]
      %v2579 = vld [vmem:[%s9 + $0xa8] sm:$0xff]
      %v2580 = vld [vmem:[%s9 + $0xb0] sm:$0xff]
      %v2581 = vld [vmem:[%s9 + $0xb8] sm:$0xff]
      %v2582 = vld [vmem:[%s9 + $0xc0] sm:$0xff]
      %v2583 = vld [vmem:[%s9 + $0xc8] sm:$0xff]
      %v2584 = vld [vmem:[%s9 + $0xd0] sm:$0xff]
      %v2585 = vld [vmem:[%s9 + $0xd8] sm:$0xff]
      %v2586 = vld [vmem:[%s9 + $0xe0] sm:$0xff]
      %v2587 = vld [vmem:[%s9 + $0xe8] sm:$0xff]
      %v2588 = vld [vmem:[%s9 + $0xf0] sm:$0xff]
      %v2589 = vld [vmem:[%s9 + $0xf8] sm:$0xff]
      %v2590 = vld [vmem:[%s9 + $0x100] sm:$0xff]
      %v2591 = vld [vmem:[%s9 + $0x108] sm:$0xff]
      %v2592 = vld [vmem:[%s9 + $0x110] sm:$0xff]
      %v2593 = vld [vmem:[%s9 + $0x118] sm:$0xff]
      %v2594 = vld [vmem:[%s9 + $0x120] sm:$0xff]
      %v2595 = vld [vmem:[%s9 + $0x128] sm:$0xff]
      %v2596 = vld [vmem:[%s9 + $0x130] sm:$0xff]
      %v2597 = vld [vmem:[%s9 + $0x138] sm:$0xff]
      %v2598 = vld [vmem:[%s9 + $0x140] sm:$0xff]
      %v2599 = vld [vmem:[%s9 + $0x148] sm:$0xff]
      %v2600 = vld [vmem:[%s9 + $0x150] sm:$0xff]
      %v2601 = vld [vmem:[%s9 + $0x158] sm:$0xff]
      %v2602 = vld [vmem:[%s9 + $0x160] sm:$0xff]
      %v2603 = vld [vmem:[%s9 + $0x168] sm:$0xff]
      %v2604 = vld [vmem:[%s9 + $0x170] sm:$0xff]
      %v2605 = vld [vmem:[%s9 + $0x178] sm:$0xff]
      %v2606 = vld [vmem:[%s9 + $0x180] sm:$0xff]
      %v2607 = vld [vmem:[%s9 + $0x188] sm:$0xff]
      %v2608 = vld [vmem:[%s9 + $0x190] sm:$0xff]
      %v2609 = vld [vmem:[%s9 + $0x198] sm:$0xff]
      %v2610 = vld [vmem:[%s9 + $0x1a0] sm:$0xff]
      %v2611 = vld [vmem:[%s9 + $0x1a8] sm:$0xff]
      %v2612 = vld [vmem:[%s9 + $0x1b0] sm:$0xff]
      %v2613 = vld [vmem:[%s9 + $0x1b8] sm:$0xff]
      %v2614 = vld [vmem:[%s9 + $0x1c0] sm:$0xff]
      %v2615 = vld [vmem:[%s9 + $0x1c8] sm:$0xff]
      %v2616 = vld [vmem:[%s9 + $0x1d0] sm:$0xff]
      %v2617 = vld [vmem:[%s9 + $0x1d8] sm:$0xff]
      %v2618 = vld [vmem:[%s9 + $0x1e0] sm:$0xff]
      %v2619 = vld [vmem:[%s9 + $0x1e8] sm:$0xff]
      %v2620 = vld [vmem:[%s9 + $0x1f0] sm:$0xff]
      %v2621 = vld [vmem:[%s9 + $0x1f8] sm:$0xff]
      %v2622 = vld [vmem:[%s9 + $0x200] sm:$0xff]
      %v2623 = vld [vmem:[%s9 + $0x208] sm:$0xff]
      %v2624 = vld [vmem:[%s9 + $0x210] sm:$0xff]
      %v2625 = vld [vmem:[%s9 + $0x218] sm:$0xff]
      %v2626 = vld [vmem:[%s9 + $0x220] sm:$0xff]
      %v2627 = vld [vmem:[%s9 + $0x228] sm:$0xff]
      %v2628 = vld [vmem:[%s9 + $0x230] sm:$0xff]
      %v2629 = vld [vmem:[%s9 + $0x238] sm:$0xff]
      %vm2630 = vcmask 523264
      %v2632 = vsel %vm2630, %v2558, 0
      %v2635 = vsel %vm2630, %v2559, 0
      %v2638 = vsel %vm2630, %v2560, 0
      %v2641 = vsel %vm2630, %v2561, 0
      %v2644 = vsel %vm2630, %v2562, 0
      %v2647 = vsel %vm2630, %v2563, 0
      %v2650 = vsel %vm2630, %v2564, 0
      %v2653 = vsel %vm2630, %v2565, 0
      %2655 = vmatprep.subr.mxu0 0.0
      %2656 = vmatpush1.msra.mxu0 %v2520
      %2657 = vmatprep.subr.mxu0 0.0
      %2658 = vmatpush1.msra.mxu0 %v2525
      %2659 = vmatprep.subr.mxu0 0.0
      %2660 = vmatpush1.msra.mxu0 %v2530
      %2661 = vmatprep.subr.mxu0 0.0
      %2662 = vmatpush1.msra.mxu0 %v2535
      %2663 = vmatprep.subr.mxu0 0.0
      %2664 = vmatpush1.msra.mxu0 %v2540
      %2665 = vmatprep.subr.mxu0 0.0
      %2666 = vmatpush1.msra.mxu0 %v2545
      %2667 = vmatprep.subr.mxu0 0.0
      %2668 = vmatpush1.msra.mxu0 %v2550
      %2669 = vmatprep.subr.mxu0 0.0
      %2670 = vmatpush1.msra.mxu0 %v2555
      %2671 = vmatprep.subr.mxu0 0.0
      %2672 = vmatpush1.msra.mxu0 0.0
      %2673 = vmatprep.subr.mxu0 0.0
      %2674 = vmatpush1.msra.mxu0 0.0
      %2675 = vmatprep.subr.mxu0 0.0
      %2676 = vmatpush1.msra.mxu0 0.0
      %2677 = vmatprep.subr.mxu0 0.0
      %2678 = vmatpush1.msra.mxu0 0.0
      %2679 = vmatprep.subr.mxu0 0.0
      %2680 = vmatpush1.msra.mxu0 0.0
      %2681 = vmatprep.subr.mxu0 0.0
      %2682 = vmatpush1.msra.mxu0 0.0
      %2683 = vmatprep.subr.mxu0 0.0
      %2684 = vmatpush1.msra.mxu0 0.0
      %2685 = vmatprep.subr.mxu0 0.0
      %2686 = vmatpush1.msra.mxu0 0.0
      %2687 = vmatprep.subr.mxu0 0.0
      %2688 = vmatpush1.msra.mxu0 0.0
      %2689 = vmatprep.subr.mxu0 0.0
      %2690 = vmatpush1.msra.mxu0 0.0
      %2691 = vmatprep.subr.mxu0 0.0
      %2692 = vmatpush1.msra.mxu0 0.0
      %2693 = vmatprep.subr.mxu0 0.0
      %2694 = vmatpush1.msra.mxu0 0.0
      %2695 = vmatprep.subr.mxu0 0.0
      %2696 = vmatpush1.msra.mxu0 0.0
      %2697 = vmatprep.subr.mxu0 0.0
      %2698 = vmatpush1.msra.mxu0 0.0
      %2699 = vmatprep.subr.mxu0 0.0
      %2700 = vmatpush1.msra.mxu0 0.0
      %2701 = vmatprep.subr.mxu0 0.0
      %2702 = vmatpush1.msra.mxu0 0.0
      %2703 = vmatprep.subr.mxu0 0.0
      %2704 = vmatpush1.msra.mxu0 0.0
      %2705 = vmatprep.subr.mxu0 0.0
      %2706 = vmatpush1.msra.mxu0 0.0
      %2707 = vmatprep.subr.mxu0 0.0
      %2708 = vmatpush1.msra.mxu0 0.0
      %2709 = vmatprep.subr.mxu0 0.0
      %2710 = vmatpush1.msra.mxu0 0.0
      %2711 = vmatprep.subr.mxu0 0.0
      %2712 = vmatpush1.msra.mxu0 0.0
      %2713 = vmatprep.subr.mxu0 0.0
      %2714 = vmatpush1.msra.mxu0 0.0
      %2715 = vmatprep.subr.mxu0 0.0
      %2716 = vmatpush1.msra.mxu0 0.0
      %2717 = vmatprep.subr.mxu0 0.0
      %2718 = vmatpush1.msra.mxu0 0.0
      %2719 = vmatprep.mubr.f32.mxu0 0.0
      %2720 = vmatmul.mubr.f32.gmra.mrb[0].mxu0 %v2632
      %v2721 = vpop.f32.mrb[0].mxu0
      %v2722 = vadd.f32 0.0, %v2721
      %v2723 = vpop.f32.mrb[0].mxu0
      %2724 = vmatprep.mubr.f32.mxu0 0.0
      %2725 = vmatmul.mubr.f32.gmra.mrb[0].mxu0 %v2635
      %v2726 = vpop.f32.mrb[0].mxu0
      %v2727 = vadd.f32 0.0, %v2726
      %v2728 = vpop.f32.mrb[0].mxu0
      %2729 = vmatprep.mubr.f32.mxu0 0.0
      %2730 = vmatmul.mubr.f32.gmra.mrb[0].mxu0 %v2638
      %v2731 = vpop.f32.mrb[0].mxu0
      %v2732 = vadd.f32 0.0, %v2731
      %v2733 = vpop.f32.mrb[0].mxu0
      %2734 = vmatprep.mubr.f32.mxu0 0.0
      %2735 = vmatmul.mubr.f32.gmra.mrb[0].mxu0 %v2641
      %v2736 = vpop.f32.mrb[0].mxu0
      %v2737 = vadd.f32 0.0, %v2736
      %v2738 = vpop.f32.mrb[0].mxu0
      %2739 = vmatprep.mubr.f32.mxu0 0.0
      %2740 = vmatmul.mubr.f32.gmra.mrb[0].mxu0 %v2644
      %v2741 = vpop.f32.mrb[0].mxu0
      %v2742 = vadd.f32 0.0, %v2741
      %v2743 = vpop.f32.mrb[0].mxu0
      %2744 = vmatprep.mubr.f32.mxu0 0.0
      %2745 = vmatmul.mubr.f32.gmra.mrb[0].mxu0 %v2647
      %v2746 = vpop.f32.mrb[0].mxu0
      %v2747 = vadd.f32 0.0, %v2746
      %v2748 = vpop.f32.mrb[0].mxu0
      %2749 = vmatprep.mubr.f32.mxu0 0.0
      %2750 = vmatmul.mubr.f32.gmra.mrb[0].mxu0 %v2650
      %v2751 = vpop.f32.mrb[0].mxu0
      %v2752 = vadd.f32 0.0, %v2751
      %v2753 = vpop.f32.mrb[0].mxu0
      %2754 = vmatprep.mubr.f32.mxu0 0.0
      %2755 = vmatmul.mubr.f32.gmra.mrb[0].mxu0 %v2653
      %v2756 = vpop.f32.mrb[0].mxu0
      %v2757 = vadd.f32 0.0, %v2756
      %v2758 = vpop.f32.mrb[0].mxu0
      %2759 = vdwg.mxu0
      %vm2760 = vcmask 64512
      %2761 = vst.msk [vmem:[#allocation3] sm:$0xff] %vm2760, %v2722
      %2762 = vst.msk [vmem:[#allocation3 + $0x8] sm:$0xff] %vm2760, %v2727
      %2763 = vst.msk [vmem:[#allocation3 + $0x10] sm:$0xff] %vm2760, %v2732
      %2764 = vst.msk [vmem:[#allocation3 + $0x18] sm:$0xff] %vm2760, %v2737
      %2765 = vst.msk [vmem:[#allocation3 + $0x20] sm:$0xff] %vm2760, %v2742
      %2766 = vst.msk [vmem:[#allocation3 + $0x28] sm:$0xff] %vm2760, %v2747
      %2767 = vst.msk [vmem:[#allocation3 + $0x30] sm:$0xff] %vm2760, %v2752
      %2768 = vst.msk [vmem:[#allocation3 + $0x38] sm:$0xff] %vm2760, %v2757
      %v2770 = vsel %vm2630, %v2566, 0
      %v2773 = vsel %vm2630, %v2567, 0
      %v2776 = vsel %vm2630, %v2568, 0
      %v2779 = vsel %vm2630, %v2569, 0
      %v2782 = vsel %vm2630, %v2570, 0
      %v2785 = vsel %vm2630, %v2571, 0
      %v2788 = vsel %vm2630, %v2572, 0
      %v2791 = vsel %vm2630, %v2573, 0
      %2793 = vmatprep.subr.mxu0 0.0
      %2794 = vmatpush1.msra.mxu0 %v2520
      %2795 = vmatprep.subr.mxu0 0.0
      %2796 = vmatpush1.msra.mxu0 %v2525
      %2797 = vmatprep.subr.mxu0 0.0
      %2798 = vmatpush1.msra.mxu0 %v2530
      %2799 = vmatprep.subr.mxu0 0.0
      %2800 = vmatpush1.msra.mxu0 %v2535
      %2801 = vmatprep.subr.mxu0 0.0
      %2802 = vmatpush1.msra.mxu0 %v2540
      %2803 = vmatprep.subr.mxu0 0.0
      %2804 = vmatpush1.msra.mxu0 %v2545
      %2805 = vmatprep.subr.mxu0 0.0
      %2806 = vmatpush1.msra.mxu0 %v2550
      %2807 = vmatprep.subr.mxu0 0.0
      %2808 = vmatpush1.msra.mxu0 %v2555
      %2809 = vmatprep.subr.mxu0 0.0
      %2810 = vmatpush1.msra.mxu0 0.0
      %2811 = vmatprep.subr.mxu0 0.0
      %2812 = vmatpush1.msra.mxu0 0.0
      %2813 = vmatprep.subr.mxu0 0.0
      %2814 = vmatpush1.msra.mxu0 0.0
      %2815 = vmatprep.subr.mxu0 0.0
      %2816 = vmatpush1.msra.mxu0 0.0
      %2817 = vmatprep.subr.mxu0 0.0
      %2818 = vmatpush1.msra.mxu0 0.0
      %2819 = vmatprep.subr.mxu0 0.0
      %2820 = vmatpush1.msra.mxu0 0.0
      %2821 = vmatprep.subr.mxu0 0.0
      %2822 = vmatpush1.msra.mxu0 0.0
      %2823 = vmatprep.subr.mxu0 0.0
      %2824 = vmatpush1.msra.mxu0 0.0
      %2825 = vmatprep.subr.mxu0 0.0
      %2826 = vmatpush1.msra.mxu0 0.0
      %2827 = vmatprep.subr.mxu0 0.0
      %2828 = vmatpush1.msra.mxu0 0.0
      %2829 = vmatprep.subr.mxu0 0.0
      %2830 = vmatpush1.msra.mxu0 0.0
      %2831 = vmatprep.subr.mxu0 0.0
      %2832 = vmatpush1.msra.mxu0 0.0
      %2833 = vmatprep.subr.mxu0 0.0
      %2834 = vmatpush1.msra.mxu0 0.0
      %2835 = vmatprep.subr.mxu0 0.0
      %2836 = vmatpush1.msra.mxu0 0.0
      %2837 = vmatprep.subr.mxu0 0.0
      %2838 = vmatpush1.msra.mxu0 0.0
      %2839 = vmatprep.subr.mxu0 0.0
      %2840 = vmatpush1.msra.mxu0 0.0
      %2841 = vmatprep.subr.mxu0 0.0
      %2842 = vmatpush1.msra.mxu0 0.0
      %2843 = vmatprep.subr.mxu0 0.0
      %2844 = vmatpush1.msra.mxu0 0.0
      %2845 = vmatprep.subr.mxu0 0.0
      %2846 = vmatpush1.msra.mxu0 0.0
      %2847 = vmatprep.subr.mxu0 0.0
      %2848 = vmatpush1.msra.mxu0 0.0
      %2849 = vmatprep.subr.mxu0 0.0
      %2850 = vmatpush1.msra.mxu0 0.0
      %2851 = vmatprep.subr.mxu0 0.0
      %2852 = vmatpush1.msra.mxu0 0.0
      %2853 = vmatprep.subr.mxu0 0.0
      %2854 = vmatpush1.msra.mxu0 0.0
      %2855 = vmatprep.subr.mxu0 0.0
      %2856 = vmatpush1.msra.mxu0 0.0
      %2857 = vmatprep.mubr.f32.mxu0 0.0
      %2858 = vmatmul.mubr.f32.gmra.mrb[0].mxu0 %v2770
      %v2859 = vpop.f32.mrb[0].mxu0
      %v2860 = vadd.f32 0.0, %v2859
      %v2861 = vpop.f32.mrb[0].mxu0
      %2862 = vmatprep.mubr.f32.mxu0 0.0
      %2863 = vmatmul.mubr.f32.gmra.mrb[0].mxu0 %v2773
      %v2864 = vpop.f32.mrb[0].mxu0
      %v2865 = vadd.f32 0.0, %v2864
      %v2866 = vpop.f32.mrb[0].mxu0
      %2867 = vmatprep.mubr.f32.mxu0 0.0
      %2868 = vmatmul.mubr.f32.gmra.mrb[0].mxu0 %v2776
      %v2869 = vpop.f32.mrb[0].mxu0
      %v2870 = vadd.f32 0.0, %v2869
      %v2871 = vpop.f32.mrb[0].mxu0
      %2872 = vmatprep.mubr.f32.mxu0 0.0
      %2873 = vmatmul.mubr.f32.gmra.mrb[0].mxu0 %v2779
      %v2874 = vpop.f32.mrb[0].mxu0
      %v2875 = vadd.f32 0.0, %v2874
      %v2876 = vpop.f32.mrb[0].mxu0
      %2877 = vmatprep.mubr.f32.mxu0 0.0
      %2878 = vmatmul.mubr.f32.gmra.mrb[0].mxu0 %v2782
      %v2879 = vpop.f32.mrb[0].mxu0
      %v2880 = vadd.f32 0.0, %v2879
      %v2881 = vpop.f32.mrb[0].mxu0
      %2882 = vmatprep.mubr.f32.mxu0 0.0
      %2883 = vmatmul.mubr.f32.gmra.mrb[0].mxu0 %v2785
      %v2884 = vpop.f32.mrb[0].mxu0
      %v2885 = vadd.f32 0.0, %v2884
      %v2886 = vpop.f32.mrb[0].mxu0
      %2887 = vmatprep.mubr.f32.mxu0 0.0
      %2888 = vmatmul.mubr.f32.gmra.mrb[0].mxu0 %v2788
      %v2889 = vpop.f32.mrb[0].mxu0
      %v2890 = vadd.f32 0.0, %v2889
      %v2891 = vpop.f32.mrb[0].mxu0
      %2892 = vmatprep.mubr.f32.mxu0 0.0
      %2893 = vmatmul.mubr.f32.gmra.mrb[0].mxu0 %v2791
      %v2894 = vpop.f32.mrb[0].mxu0
      %v2895 = vadd.f32 0.0, %v2894
      %v2896 = vpop.f32.mrb[0].mxu0
      %2897 = vdwg.mxu0
      %2906 = vrot.lane.b32.xlu0 %v2860, 8
      %v2907 = vpop.permute.xlu0 %2906
      %2908 = vrot.lane.b32.xlu0 %v2865, 8
      %v2909 = vpop.permute.xlu0 %2908
      %2910 = vrot.lane.b32.xlu0 %v2870, 8
      %v2911 = vpop.permute.xlu0 %2910
      %2912 = vrot.lane.b32.xlu0 %v2875, 8
      %v2913 = vpop.permute.xlu0 %2912
      %2914 = vrot.lane.b32.xlu0 %v2880, 8
      %v2915 = vpop.permute.xlu0 %2914
      %2916 = vrot.lane.b32.xlu0 %v2885, 8
      %v2917 = vpop.permute.xlu0 %2916
      %2918 = vrot.lane.b32.xlu0 %v2890, 8
      %v2919 = vpop.permute.xlu0 %2918
      %2920 = vrot.lane.b32.xlu0 %v2895, 8
      %v2921 = vpop.permute.xlu0 %2920
      %vm2930 = vcmask 130112
      %2931 = vst.msk [vmem:[#allocation3] sm:$0xff] %vm2930, %v2907
      %2932 = vst.msk [vmem:[#allocation3 + $0x8] sm:$0xff] %vm2930, %v2909
      %2933 = vst.msk [vmem:[#allocation3 + $0x10] sm:$0xff] %vm2930, %v2911
      %2934 = vst.msk [vmem:[#allocation3 + $0x18] sm:$0xff] %vm2930, %v2913
      %2935 = vst.msk [vmem:[#allocation3 + $0x20] sm:$0xff] %vm2930, %v2915
      %2936 = vst.msk [vmem:[#allocation3 + $0x28] sm:$0xff] %vm2930, %v2917
      %2937 = vst.msk [vmem:[#allocation3 + $0x30] sm:$0xff] %vm2930, %v2919
      %2938 = vst.msk [vmem:[#allocation3 + $0x38] sm:$0xff] %vm2930, %v2921
      %v2940 = vsel %vm2630, %v2574, 0
      %v2943 = vsel %vm2630, %v2575, 0
      %v2946 = vsel %vm2630, %v2576, 0
      %v2949 = vsel %vm2630, %v2577, 0
      %v2952 = vsel %vm2630, %v2578, 0
      %v2955 = vsel %vm2630, %v2579, 0
      %v2958 = vsel %vm2630, %v2580, 0
      %v2961 = vsel %vm2630, %v2581, 0
      %2963 = vmatprep.subr.mxu0 0.0
      %2964 = vmatpush1.msra.mxu0 %v2520
      %2965 = vmatprep.subr.mxu0 0.0
      %2966 = vmatpush1.msra.mxu0 %v2525
      %2967 = vmatprep.subr.mxu0 0.0
      %2968 = vmatpush1.msra.mxu0 %v2530
      %2969 = vmatprep.subr.mxu0 0.0
      %2970 = vmatpush1.msra.mxu0 %v2535
      %2971 = vmatprep.subr.mxu0 0.0
      %2972 = vmatpush1.msra.mxu0 %v2540
      %2973 = vmatprep.subr.mxu0 0.0
      %2974 = vmatpush1.msra.mxu0 %v2545
      %2975 = vmatprep.subr.mxu0 0.0
      %2976 = vmatpush1.msra.mxu0 %v2550
      %2977 = vmatprep.subr.mxu0 0.0
      %2978 = vmatpush1.msra.mxu0 %v2555
      %2979 = vmatprep.subr.mxu0 0.0
      %2980 = vmatpush1.msra.mxu0 0.0
      %2981 = vmatprep.subr.mxu0 0.0
      %2982 = vmatpush1.msra.mxu0 0.0
      %2983 = vmatprep.subr.mxu0 0.0
      %2984 = vmatpush1.msra.mxu0 0.0
      %2985 = vmatprep.subr.mxu0 0.0
      %2986 = vmatpush1.msra.mxu0 0.0
      %2987 = vmatprep.subr.mxu0 0.0
      %2988 = vmatpush1.msra.mxu0 0.0
      %2989 = vmatprep.subr.mxu0 0.0
      %2990 = vmatpush1.msra.mxu0 0.0
      %2991 = vmatprep.subr.mxu0 0.0
      %2992 = vmatpush1.msra.mxu0 0.0
      %2993 = vmatprep.subr.mxu0 0.0
      %2994 = vmatpush1.msra.mxu0 0.0
      %2995 = vmatprep.subr.mxu0 0.0
      %2996 = vmatpush1.msra.mxu0 0.0
      %2997 = vmatprep.subr.mxu0 0.0
      %2998 = vmatpush1.msra.mxu0 0.0
      %2999 = vmatprep.subr.mxu0 0.0
      %3000 = vmatpush1.msra.mxu0 0.0
      %3001 = vmatprep.subr.mxu0 0.0
      %3002 = vmatpush1.msra.mxu0 0.0
      %3003 = vmatprep.subr.mxu0 0.0
      %3004 = vmatpush1.msra.mxu0 0.0
      %3005 = vmatprep.subr.mxu0 0.0
      %3006 = vmatpush1.msra.mxu0 0.0
      %3007 = vmatprep.subr.mxu0 0.0
      %3008 = vmatpush1.msra.mxu0 0.0
      %3009 = vmatprep.subr.mxu0 0.0
      %3010 = vmatpush1.msra.mxu0 0.0
      %3011 = vmatprep.subr.mxu0 0.0
      %3012 = vmatpush1.msra.mxu0 0.0
      %3013 = vmatprep.subr.mxu0 0.0
      %3014 = vmatpush1.msra.mxu0 0.0
      %3015 = vmatprep.subr.mxu0 0.0
      %3016 = vmatpush1.msra.mxu0 0.0
      %3017 = vmatprep.subr.mxu0 0.0
      %3018 = vmatpush1.msra.mxu0 0.0
      %3019 = vmatprep.subr.mxu0 0.0
      %3020 = vmatpush1.msra.mxu0 0.0
      %3021 = vmatprep.subr.mxu0 0.0
      %3022 = vmatpush1.msra.mxu0 0.0
      %3023 = vmatprep.subr.mxu0 0.0
      %3024 = vmatpush1.msra.mxu0 0.0
      %3025 = vmatprep.subr.mxu0 0.0
      %3026 = vmatpush1.msra.mxu0 0.0
      %3027 = vmatprep.mubr.f32.mxu0 0.0
      %3028 = vmatmul.mubr.f32.gmra.mrb[0].mxu0 %v2940
      %v3029 = vpop.f32.mrb[0].mxu0
      %v3030 = vadd.f32 0.0, %v3029
      %v3031 = vpop.f32.mrb[0].mxu0
      %3032 = vmatprep.mubr.f32.mxu0 0.0
      %3033 = vmatmul.mubr.f32.gmra.mrb[0].mxu0 %v2943
      %v3034 = vpop.f32.mrb[0].mxu0
      %v3035 = vadd.f32 0.0, %v3034
      %v3036 = vpop.f32.mrb[0].mxu0
      %3037 = vmatprep.mubr.f32.mxu0 0.0
      %3038 = vmatmul.mubr.f32.gmra.mrb[0].mxu0 %v2946
      %v3039 = vpop.f32.mrb[0].mxu0
      %v3040 = vadd.f32 0.0, %v3039
      %v3041 = vpop.f32.mrb[0].mxu0
      %3042 = vmatprep.mubr.f32.mxu0 0.0
      %3043 = vmatmul.mubr.f32.gmra.mrb[0].mxu0 %v2949
      %v3044 = vpop.f32.mrb[0].mxu0
      %v3045 = vadd.f32 0.0, %v3044
      %v3046 = vpop.f32.mrb[0].mxu0
      %3047 = vmatprep.mubr.f32.mxu0 0.0
      %3048 = vmatmul.mubr.f32.gmra.mrb[0].mxu0 %v2952
      %v3049 = vpop.f32.mrb[0].mxu0
      %v3050 = vadd.f32 0.0, %v3049
      %v3051 = vpop.f32.mrb[0].mxu0
      %3052 = vmatprep.mubr.f32.mxu0 0.0
      %3053 = vmatmul.mubr.f32.gmra.mrb[0].mxu0 %v2955
      %v3054 = vpop.f32.mrb[0].mxu0
      %v3055 = vadd.f32 0.0, %v3054
      %v3056 = vpop.f32.mrb[0].mxu0
      %3057 = vmatprep.mubr.f32.mxu0 0.0
      %3058 = vmatmul.mubr.f32.gmra.mrb[0].mxu0 %v2958
      %v3059 = vpop.f32.mrb[0].mxu0
      %v3060 = vadd.f32 0.0, %v3059
      %v3061 = vpop.f32.mrb[0].mxu0
      %3062 = vmatprep.mubr.f32.mxu0 0.0
      %3063 = vmatmul.mubr.f32.gmra.mrb[0].mxu0 %v2961
      %v3064 = vpop.f32.mrb[0].mxu0
      %v3065 = vadd.f32 0.0, %v3064
      %v3066 = vpop.f32.mrb[0].mxu0
      %3067 = vdwg.mxu0
      %3076 = vrot.lane.b32.xlu0 %v3030, 16
      %v3077 = vpop.permute.xlu0 %3076
      %3078 = vrot.lane.b32.xlu0 %v3035, 16
      %v3079 = vpop.permute.xlu0 %3078
      %3080 = vrot.lane.b32.xlu0 %v3040, 16
      %v3081 = vpop.permute.xlu0 %3080
      %3082 = vrot.lane.b32.xlu0 %v3045, 16
      %v3083 = vpop.permute.xlu0 %3082
      %3084 = vrot.lane.b32.xlu0 %v3050, 16
      %v3085 = vpop.permute.xlu0 %3084
      %3086 = vrot.lane.b32.xlu0 %v3055, 16
      %v3087 = vpop.permute.xlu0 %3086
      %3088 = vrot.lane.b32.xlu0 %v3060, 16
      %v3089 = vpop.permute.xlu0 %3088
      %3090 = vrot.lane.b32.xlu0 %v3065, 16
      %v3091 = vpop.permute.xlu0 %3090
      %vm3100 = vcmask 195712
      %3101 = vst.msk [vmem:[#allocation3] sm:$0xff] %vm3100, %v3077
      %3102 = vst.msk [vmem:[#allocation3 + $0x8] sm:$0xff] %vm3100, %v3079
      %3103 = vst.msk [vmem:[#allocation3 + $0x10] sm:$0xff] %vm3100, %v3081
      %3104 = vst.msk [vmem:[#allocation3 + $0x18] sm:$0xff] %vm3100, %v3083
      %3105 = vst.msk [vmem:[#allocation3 + $0x20] sm:$0xff] %vm3100, %v3085
      %3106 = vst.msk [vmem:[#allocation3 + $0x28] sm:$0xff] %vm3100, %v3087
      %3107 = vst.msk [vmem:[#allocation3 + $0x30] sm:$0xff] %vm3100, %v3089
      %3108 = vst.msk [vmem:[#allocation3 + $0x38] sm:$0xff] %vm3100, %v3091
      %v3110 = vsel %vm2630, %v2582, 0
      %v3113 = vsel %vm2630, %v2583, 0
      %v3116 = vsel %vm2630, %v2584, 0
      %v3119 = vsel %vm2630, %v2585, 0
      %v3122 = vsel %vm2630, %v2586, 0
      %v3125 = vsel %vm2630, %v2587, 0
      %v3128 = vsel %vm2630, %v2588, 0
      %v3131 = vsel %vm2630, %v2589, 0
      %3133 = vmatprep.subr.mxu0 0.0
      %3134 = vmatpush1.msra.mxu0 %v2520
      %3135 = vmatprep.subr.mxu0 0.0
      %3136 = vmatpush1.msra.mxu0 %v2525
      %3137 = vmatprep.subr.mxu0 0.0
      %3138 = vmatpush1.msra.mxu0 %v2530
      %3139 = vmatprep.subr.mxu0 0.0
      %3140 = vmatpush1.msra.mxu0 %v2535
      %3141 = vmatprep.subr.mxu0 0.0
      %3142 = vmatpush1.msra.mxu0 %v2540
      %3143 = vmatprep.subr.mxu0 0.0
      %3144 = vmatpush1.msra.mxu0 %v2545
      %3145 = vmatprep.subr.mxu0 0.0
      %3146 = vmatpush1.msra.mxu0 %v2550
      %3147 = vmatprep.subr.mxu0 0.0
      %3148 = vmatpush1.msra.mxu0 %v2555
      %3149 = vmatprep.subr.mxu0 0.0
      %3150 = vmatpush1.msra.mxu0 0.0
      %3151 = vmatprep.subr.mxu0 0.0
      %3152 = vmatpush1.msra.mxu0 0.0
      %3153 = vmatprep.subr.mxu0 0.0
      %3154 = vmatpush1.msra.mxu0 0.0
      %3155 = vmatprep.subr.mxu0 0.0
      %3156 = vmatpush1.msra.mxu0 0.0
      %3157 = vmatprep.subr.mxu0 0.0
      %3158 = vmatpush1.msra.mxu0 0.0
      %3159 = vmatprep.subr.mxu0 0.0
      %3160 = vmatpush1.msra.mxu0 0.0
      %3161 = vmatprep.subr.mxu0 0.0
      %3162 = vmatpush1.msra.mxu0 0.0
      %3163 = vmatprep.subr.mxu0 0.0
      %3164 = vmatpush1.msra.mxu0 0.0
      %3165 = vmatprep.subr.mxu0 0.0
      %3166 = vmatpush1.msra.mxu0 0.0
      %3167 = vmatprep.subr.mxu0 0.0
      %3168 = vmatpush1.msra.mxu0 0.0
      %3169 = vmatprep.subr.mxu0 0.0
      %3170 = vmatpush1.msra.mxu0 0.0
      %3171 = vmatprep.subr.mxu0 0.0
      %3172 = vmatpush1.msra.mxu0 0.0
      %3173 = vmatprep.subr.mxu0 0.0
      %3174 = vmatpush1.msra.mxu0 0.0
      %3175 = vmatprep.subr.mxu0 0.0
      %3176 = vmatpush1.msra.mxu0 0.0
      %3177 = vmatprep.subr.mxu0 0.0
      %3178 = vmatpush1.msra.mxu0 0.0
      %3179 = vmatprep.subr.mxu0 0.0
      %3180 = vmatpush1.msra.mxu0 0.0
      %3181 = vmatprep.subr.mxu0 0.0
      %3182 = vmatpush1.msra.mxu0 0.0
      %3183 = vmatprep.subr.mxu0 0.0
      %3184 = vmatpush1.msra.mxu0 0.0
      %3185 = vmatprep.subr.mxu0 0.0
      %3186 = vmatpush1.msra.mxu0 0.0
      %3187 = vmatprep.subr.mxu0 0.0
      %3188 = vmatpush1.msra.mxu0 0.0
      %3189 = vmatprep.subr.mxu0 0.0
      %3190 = vmatpush1.msra.mxu0 0.0
      %3191 = vmatprep.subr.mxu0 0.0
      %3192 = vmatpush1.msra.mxu0 0.0
      %3193 = vmatprep.subr.mxu0 0.0
      %3194 = vmatpush1.msra.mxu0 0.0
      %3195 = vmatprep.subr.mxu0 0.0
      %3196 = vmatpush1.msra.mxu0 0.0
      %3197 = vmatprep.mubr.f32.mxu0 0.0
      %3198 = vmatmul.mubr.f32.gmra.mrb[0].mxu0 %v3110
      %v3199 = vpop.f32.mrb[0].mxu0
      %v3200 = vadd.f32 0.0, %v3199
      %v3201 = vpop.f32.mrb[0].mxu0
      %3202 = vmatprep.mubr.f32.mxu0 0.0
      %3203 = vmatmul.mubr.f32.gmra.mrb[0].mxu0 %v3113
      %v3204 = vpop.f32.mrb[0].mxu0
      %v3205 = vadd.f32 0.0, %v3204
      %v3206 = vpop.f32.mrb[0].mxu0
      %3207 = vmatprep.mubr.f32.mxu0 0.0
      %3208 = vmatmul.mubr.f32.gmra.mrb[0].mxu0 %v3116
      %v3209 = vpop.f32.mrb[0].mxu0
      %v3210 = vadd.f32 0.0, %v3209
      %v3211 = vpop.f32.mrb[0].mxu0
      %3212 = vmatprep.mubr.f32.mxu0 0.0
      %3213 = vmatmul.mubr.f32.gmra.mrb[0].mxu0 %v3119
      %v3214 = vpop.f32.mrb[0].mxu0
      %v3215 = vadd.f32 0.0, %v3214
      %v3216 = vpop.f32.mrb[0].mxu0
      %3217 = vmatprep.mubr.f32.mxu0 0.0
      %3218 = vmatmul.mubr.f32.gmra.mrb[0].mxu0 %v3122
      %v3219 = vpop.f32.mrb[0].mxu0
      %v3220 = vadd.f32 0.0, %v3219
      %v3221 = vpop.f32.mrb[0].mxu0
      %3222 = vmatprep.mubr.f32.mxu0 0.0
      %3223 = vmatmul.mubr.f32.gmra.mrb[0].mxu0 %v3125
      %v3224 = vpop.f32.mrb[0].mxu0
      %v3225 = vadd.f32 0.0, %v3224
      %v3226 = vpop.f32.mrb[0].mxu0
      %3227 = vmatprep.mubr.f32.mxu0 0.0
      %3228 = vmatmul.mubr.f32.gmra.mrb[0].mxu0 %v3128
      %v3229 = vpop.f32.mrb[0].mxu0
      %v3230 = vadd.f32 0.0, %v3229
      %v3231 = vpop.f32.mrb[0].mxu0
      %3232 = vmatprep.mubr.f32.mxu0 0.0
      %3233 = vmatmul.mubr.f32.gmra.mrb[0].mxu0 %v3131
      %v3234 = vpop.f32.mrb[0].mxu0
      %v3235 = vadd.f32 0.0, %v3234
      %v3236 = vpop.f32.mrb[0].mxu0
      %3237 = vdwg.mxu0
      %3246 = vrot.lane.b32.xlu0 %v3200, 24
      %v3247 = vpop.permute.xlu0 %3246
      %3248 = vrot.lane.b32.xlu0 %v3205, 24
      %v3249 = vpop.permute.xlu0 %3248
      %3250 = vrot.lane.b32.xlu0 %v3210, 24
      %v3251 = vpop.permute.xlu0 %3250
      %3252 = vrot.lane.b32.xlu0 %v3215, 24
      %v3253 = vpop.permute.xlu0 %3252
      %3254 = vrot.lane.b32.xlu0 %v3220, 24
      %v3255 = vpop.permute.xlu0 %3254
      %3256 = vrot.lane.b32.xlu0 %v3225, 24
      %v3257 = vpop.permute.xlu0 %3256
      %3258 = vrot.lane.b32.xlu0 %v3230, 24
      %v3259 = vpop.permute.xlu0 %3258
      %3260 = vrot.lane.b32.xlu0 %v3235, 24
      %v3261 = vpop.permute.xlu0 %3260
      %vm3270 = vcmask 261312
      %3271 = vst.msk [vmem:[#allocation3] sm:$0xff] %vm3270, %v3247
      %3272 = vst.msk [vmem:[#allocation3 + $0x8] sm:$0xff] %vm3270, %v3249
      %3273 = vst.msk [vmem:[#allocation3 + $0x10] sm:$0xff] %vm3270, %v3251
      %3274 = vst.msk [vmem:[#allocation3 + $0x18] sm:$0xff] %vm3270, %v3253
      %3275 = vst.msk [vmem:[#allocation3 + $0x20] sm:$0xff] %vm3270, %v3255
      %3276 = vst.msk [vmem:[#allocation3 + $0x28] sm:$0xff] %vm3270, %v3257
      %3277 = vst.msk [vmem:[#allocation3 + $0x30] sm:$0xff] %vm3270, %v3259
      %3278 = vst.msk [vmem:[#allocation3 + $0x38] sm:$0xff] %vm3270, %v3261
      %v3280 = vsel %vm2630, %v2590, 0
      %v3283 = vsel %vm2630, %v2591, 0
      %v3286 = vsel %vm2630, %v2592, 0
      %v3289 = vsel %vm2630, %v2593, 0
      %v3292 = vsel %vm2630, %v2594, 0
      %v3295 = vsel %vm2630, %v2595, 0
      %v3298 = vsel %vm2630, %v2596, 0
      %v3301 = vsel %vm2630, %v2597, 0
      %3303 = vmatprep.subr.mxu0 0.0
      %3304 = vmatpush1.msra.mxu0 %v2520
      %3305 = vmatprep.subr.mxu0 0.0
      %3306 = vmatpush1.msra.mxu0 %v2525
      %3307 = vmatprep.subr.mxu0 0.0
      %3308 = vmatpush1.msra.mxu0 %v2530
      %3309 = vmatprep.subr.mxu0 0.0
      %3310 = vmatpush1.msra.mxu0 %v2535
      %3311 = vmatprep.subr.mxu0 0.0
      %3312 = vmatpush1.msra.mxu0 %v2540
      %3313 = vmatprep.subr.mxu0 0.0
      %3314 = vmatpush1.msra.mxu0 %v2545
      %3315 = vmatprep.subr.mxu0 0.0
      %3316 = vmatpush1.msra.mxu0 %v2550
      %3317 = vmatprep.subr.mxu0 0.0
      %3318 = vmatpush1.msra.mxu0 %v2555
      %3319 = vmatprep.subr.mxu0 0.0
      %3320 = vmatpush1.msra.mxu0 0.0
      %3321 = vmatprep.subr.mxu0 0.0
      %3322 = vmatpush1.msra.mxu0 0.0
      %3323 = vmatprep.subr.mxu0 0.0
      %3324 = vmatpush1.msra.mxu0 0.0
      %3325 = vmatprep.subr.mxu0 0.0
      %3326 = vmatpush1.msra.mxu0 0.0
      %3327 = vmatprep.subr.mxu0 0.0
      %3328 = vmatpush1.msra.mxu0 0.0
      %3329 = vmatprep.subr.mxu0 0.0
      %3330 = vmatpush1.msra.mxu0 0.0
      %3331 = vmatprep.subr.mxu0 0.0
      %3332 = vmatpush1.msra.mxu0 0.0
      %3333 = vmatprep.subr.mxu0 0.0
      %3334 = vmatpush1.msra.mxu0 0.0
      %3335 = vmatprep.subr.mxu0 0.0
      %3336 = vmatpush1.msra.mxu0 0.0
      %3337 = vmatprep.subr.mxu0 0.0
      %3338 = vmatpush1.msra.mxu0 0.0
      %3339 = vmatprep.subr.mxu0 0.0
      %3340 = vmatpush1.msra.mxu0 0.0
      %3341 = vmatprep.subr.mxu0 0.0
      %3342 = vmatpush1.msra.mxu0 0.0
      %3343 = vmatprep.subr.mxu0 0.0
      %3344 = vmatpush1.msra.mxu0 0.0
      %3345 = vmatprep.subr.mxu0 0.0
      %3346 = vmatpush1.msra.mxu0 0.0
      %3347 = vmatprep.subr.mxu0 0.0
      %3348 = vmatpush1.msra.mxu0 0.0
      %3349 = vmatprep.subr.mxu0 0.0
      %3350 = vmatpush1.msra.mxu0 0.0
      %3351 = vmatprep.subr.mxu0 0.0
      %3352 = vmatpush1.msra.mxu0 0.0
      %3353 = vmatprep.subr.mxu0 0.0
      %3354 = vmatpush1.msra.mxu0 0.0
      %3355 = vmatprep.subr.mxu0 0.0
      %3356 = vmatpush1.msra.mxu0 0.0
      %3357 = vmatprep.subr.mxu0 0.0
      %3358 = vmatpush1.msra.mxu0 0.0
      %3359 = vmatprep.subr.mxu0 0.0
      %3360 = vmatpush1.msra.mxu0 0.0
      %3361 = vmatprep.subr.mxu0 0.0
      %3362 = vmatpush1.msra.mxu0 0.0
      %3363 = vmatprep.subr.mxu0 0.0
      %3364 = vmatpush1.msra.mxu0 0.0
      %3365 = vmatprep.subr.mxu0 0.0
      %3366 = vmatpush1.msra.mxu0 0.0
      %3367 = vmatprep.mubr.f32.mxu0 0.0
      %3368 = vmatmul.mubr.f32.gmra.mrb[0].mxu0 %v3280
      %v3369 = vpop.f32.mrb[0].mxu0
      %v3370 = vadd.f32 0.0, %v3369
      %v3371 = vpop.f32.mrb[0].mxu0
      %3372 = vmatprep.mubr.f32.mxu0 0.0
      %3373 = vmatmul.mubr.f32.gmra.mrb[0].mxu0 %v3283
      %v3374 = vpop.f32.mrb[0].mxu0
      %v3375 = vadd.f32 0.0, %v3374
      %v3376 = vpop.f32.mrb[0].mxu0
      %3377 = vmatprep.mubr.f32.mxu0 0.0
      %3378 = vmatmul.mubr.f32.gmra.mrb[0].mxu0 %v3286
      %v3379 = vpop.f32.mrb[0].mxu0
      %v3380 = vadd.f32 0.0, %v3379
      %v3381 = vpop.f32.mrb[0].mxu0
      %3382 = vmatprep.mubr.f32.mxu0 0.0
      %3383 = vmatmul.mubr.f32.gmra.mrb[0].mxu0 %v3289
      %v3384 = vpop.f32.mrb[0].mxu0
      %v3385 = vadd.f32 0.0, %v3384
      %v3386 = vpop.f32.mrb[0].mxu0
      %3387 = vmatprep.mubr.f32.mxu0 0.0
      %3388 = vmatmul.mubr.f32.gmra.mrb[0].mxu0 %v3292
      %v3389 = vpop.f32.mrb[0].mxu0
      %v3390 = vadd.f32 0.0, %v3389
      %v3391 = vpop.f32.mrb[0].mxu0
      %3392 = vmatprep.mubr.f32.mxu0 0.0
      %3393 = vmatmul.mubr.f32.gmra.mrb[0].mxu0 %v3295
      %v3394 = vpop.f32.mrb[0].mxu0
      %v3395 = vadd.f32 0.0, %v3394
      %v3396 = vpop.f32.mrb[0].mxu0
      %3397 = vmatprep.mubr.f32.mxu0 0.0
      %3398 = vmatmul.mubr.f32.gmra.mrb[0].mxu0 %v3298
      %v3399 = vpop.f32.mrb[0].mxu0
      %v3400 = vadd.f32 0.0, %v3399
      %v3401 = vpop.f32.mrb[0].mxu0
      %3402 = vmatprep.mubr.f32.mxu0 0.0
      %3403 = vmatmul.mubr.f32.gmra.mrb[0].mxu0 %v3301
      %v3404 = vpop.f32.mrb[0].mxu0
      %v3405 = vadd.f32 0.0, %v3404
      %v3406 = vpop.f32.mrb[0].mxu0
      %3407 = vdwg.mxu0
      %3416 = vrot.lane.b32.xlu0 %v3370, 32
      %v3417 = vpop.permute.xlu0 %3416
      %3418 = vrot.lane.b32.xlu0 %v3375, 32
      %v3419 = vpop.permute.xlu0 %3418
      %3420 = vrot.lane.b32.xlu0 %v3380, 32
      %v3421 = vpop.permute.xlu0 %3420
      %3422 = vrot.lane.b32.xlu0 %v3385, 32
      %v3423 = vpop.permute.xlu0 %3422
      %3424 = vrot.lane.b32.xlu0 %v3390, 32
      %v3425 = vpop.permute.xlu0 %3424
      %3426 = vrot.lane.b32.xlu0 %v3395, 32
      %v3427 = vpop.permute.xlu0 %3426
      %3428 = vrot.lane.b32.xlu0 %v3400, 32
      %v3429 = vpop.permute.xlu0 %3428
      %3430 = vrot.lane.b32.xlu0 %v3405, 32
      %v3431 = vpop.permute.xlu0 %3430
      %vm3440 = vcmask 326912
      %3441 = vst.msk [vmem:[#allocation3] sm:$0xff] %vm3440, %v3417
      %3442 = vst.msk [vmem:[#allocation3 + $0x8] sm:$0xff] %vm3440, %v3419
      %3443 = vst.msk [vmem:[#allocation3 + $0x10] sm:$0xff] %vm3440, %v3421
      %3444 = vst.msk [vmem:[#allocation3 + $0x18] sm:$0xff] %vm3440, %v3423
      %3445 = vst.msk [vmem:[#allocation3 + $0x20] sm:$0xff] %vm3440, %v3425
      %3446 = vst.msk [vmem:[#allocation3 + $0x28] sm:$0xff] %vm3440, %v3427
      %3447 = vst.msk [vmem:[#allocation3 + $0x30] sm:$0xff] %vm3440, %v3429
      %3448 = vst.msk [vmem:[#allocation3 + $0x38] sm:$0xff] %vm3440, %v3431
      %v3450 = vsel %vm2630, %v2598, 0
      %v3453 = vsel %vm2630, %v2599, 0
      %v3456 = vsel %vm2630, %v2600, 0
      %v3459 = vsel %vm2630, %v2601, 0
      %v3462 = vsel %vm2630, %v2602, 0
      %v3465 = vsel %vm2630, %v2603, 0
      %v3468 = vsel %vm2630, %v2604, 0
      %v3471 = vsel %vm2630, %v2605, 0
      %3473 = vmatprep.subr.mxu0 0.0
      %3474 = vmatpush1.msra.mxu0 %v2520
      %3475 = vmatprep.subr.mxu0 0.0
      %3476 = vmatpush1.msra.mxu0 %v2525
      %3477 = vmatprep.subr.mxu0 0.0
      %3478 = vmatpush1.msra.mxu0 %v2530
      %3479 = vmatprep.subr.mxu0 0.0
      %3480 = vmatpush1.msra.mxu0 %v2535
      %3481 = vmatprep.subr.mxu0 0.0
      %3482 = vmatpush1.msra.mxu0 %v2540
      %3483 = vmatprep.subr.mxu0 0.0
      %3484 = vmatpush1.msra.mxu0 %v2545
      %3485 = vmatprep.subr.mxu0 0.0
      %3486 = vmatpush1.msra.mxu0 %v2550
      %3487 = vmatprep.subr.mxu0 0.0
      %3488 = vmatpush1.msra.mxu0 %v2555
      %3489 = vmatprep.subr.mxu0 0.0
      %3490 = vmatpush1.msra.mxu0 0.0
      %3491 = vmatprep.subr.mxu0 0.0
      %3492 = vmatpush1.msra.mxu0 0.0
      %3493 = vmatprep.subr.mxu0 0.0
      %3494 = vmatpush1.msra.mxu0 0.0
      %3495 = vmatprep.subr.mxu0 0.0
      %3496 = vmatpush1.msra.mxu0 0.0
      %3497 = vmatprep.subr.mxu0 0.0
      %3498 = vmatpush1.msra.mxu0 0.0
      %3499 = vmatprep.subr.mxu0 0.0
      %3500 = vmatpush1.msra.mxu0 0.0
      %3501 = vmatprep.subr.mxu0 0.0
      %3502 = vmatpush1.msra.mxu0 0.0
      %3503 = vmatprep.subr.mxu0 0.0
      %3504 = vmatpush1.msra.mxu0 0.0
      %3505 = vmatprep.subr.mxu0 0.0
      %3506 = vmatpush1.msra.mxu0 0.0
      %3507 = vmatprep.subr.mxu0 0.0
      %3508 = vmatpush1.msra.mxu0 0.0
      %3509 = vmatprep.subr.mxu0 0.0
      %3510 = vmatpush1.msra.mxu0 0.0
      %3511 = vmatprep.subr.mxu0 0.0
      %3512 = vmatpush1.msra.mxu0 0.0
      %3513 = vmatprep.subr.mxu0 0.0
      %3514 = vmatpush1.msra.mxu0 0.0
      %3515 = vmatprep.subr.mxu0 0.0
      %3516 = vmatpush1.msra.mxu0 0.0
      %3517 = vmatprep.subr.mxu0 0.0
      %3518 = vmatpush1.msra.mxu0 0.0
      %3519 = vmatprep.subr.mxu0 0.0
      %3520 = vmatpush1.msra.mxu0 0.0
      %3521 = vmatprep.subr.mxu0 0.0
      %3522 = vmatpush1.msra.mxu0 0.0
      %3523 = vmatprep.subr.mxu0 0.0
      %3524 = vmatpush1.msra.mxu0 0.0
      %3525 = vmatprep.subr.mxu0 0.0
      %3526 = vmatpush1.msra.mxu0 0.0
      %3527 = vmatprep.subr.mxu0 0.0
      %3528 = vmatpush1.msra.mxu0 0.0
      %3529 = vmatprep.subr.mxu0 0.0
      %3530 = vmatpush1.msra.mxu0 0.0
      %3531 = vmatprep.subr.mxu0 0.0
      %3532 = vmatpush1.msra.mxu0 0.0
      %3533 = vmatprep.subr.mxu0 0.0
      %3534 = vmatpush1.msra.mxu0 0.0
      %3535 = vmatprep.subr.mxu0 0.0
      %3536 = vmatpush1.msra.mxu0 0.0
      %3537 = vmatprep.mubr.f32.mxu0 0.0
      %3538 = vmatmul.mubr.f32.gmra.mrb[0].mxu0 %v3450
      %v3539 = vpop.f32.mrb[0].mxu0
      %v3540 = vadd.f32 0.0, %v3539
      %v3541 = vpop.f32.mrb[0].mxu0
      %3542 = vmatprep.mubr.f32.mxu0 0.0
      %3543 = vmatmul.mubr.f32.gmra.mrb[0].mxu0 %v3453
      %v3544 = vpop.f32.mrb[0].mxu0
      %v3545 = vadd.f32 0.0, %v3544
      %v3546 = vpop.f32.mrb[0].mxu0
      %3547 = vmatprep.mubr.f32.mxu0 0.0
      %3548 = vmatmul.mubr.f32.gmra.mrb[0].mxu0 %v3456
      %v3549 = vpop.f32.mrb[0].mxu0
      %v3550 = vadd.f32 0.0, %v3549
      %v3551 = vpop.f32.mrb[0].mxu0
      %3552 = vmatprep.mubr.f32.mxu0 0.0
      %3553 = vmatmul.mubr.f32.gmra.mrb[0].mxu0 %v3459
      %v3554 = vpop.f32.mrb[0].mxu0
      %v3555 = vadd.f32 0.0, %v3554
      %v3556 = vpop.f32.mrb[0].mxu0
      %3557 = vmatprep.mubr.f32.mxu0 0.0
      %3558 = vmatmul.mubr.f32.gmra.mrb[0].mxu0 %v3462
      %v3559 = vpop.f32.mrb[0].mxu0
      %v3560 = vadd.f32 0.0, %v3559
      %v3561 = vpop.f32.mrb[0].mxu0
      %3562 = vmatprep.mubr.f32.mxu0 0.0
      %3563 = vmatmul.mubr.f32.gmra.mrb[0].mxu0 %v3465
      %v3564 = vpop.f32.mrb[0].mxu0
      %v3565 = vadd.f32 0.0, %v3564
      %v3566 = vpop.f32.mrb[0].mxu0
      %3567 = vmatprep.mubr.f32.mxu0 0.0
      %3568 = vmatmul.mubr.f32.gmra.mrb[0].mxu0 %v3468
      %v3569 = vpop.f32.mrb[0].mxu0
      %v3570 = vadd.f32 0.0, %v3569
      %v3571 = vpop.f32.mrb[0].mxu0
      %3572 = vmatprep.mubr.f32.mxu0 0.0
      %3573 = vmatmul.mubr.f32.gmra.mrb[0].mxu0 %v3471
      %v3574 = vpop.f32.mrb[0].mxu0
      %v3575 = vadd.f32 0.0, %v3574
      %v3576 = vpop.f32.mrb[0].mxu0
      %3577 = vdwg.mxu0
      %3586 = vrot.lane.b32.xlu0 %v3540, 40
      %v3587 = vpop.permute.xlu0 %3586
      %3588 = vrot.lane.b32.xlu0 %v3545, 40
      %v3589 = vpop.permute.xlu0 %3588
      %3590 = vrot.lane.b32.xlu0 %v3550, 40
      %v3591 = vpop.permute.xlu0 %3590
      %3592 = vrot.lane.b32.xlu0 %v3555, 40
      %v3593 = vpop.permute.xlu0 %3592
      %3594 = vrot.lane.b32.xlu0 %v3560, 40
      %v3595 = vpop.permute.xlu0 %3594
      %3596 = vrot.lane.b32.xlu0 %v3565, 40
      %v3597 = vpop.permute.xlu0 %3596
      %3598 = vrot.lane.b32.xlu0 %v3570, 40
      %v3599 = vpop.permute.xlu0 %3598
      %3600 = vrot.lane.b32.xlu0 %v3575, 40
      %v3601 = vpop.permute.xlu0 %3600
      %vm3610 = vcmask 392512
      %3611 = vst.msk [vmem:[#allocation3] sm:$0xff] %vm3610, %v3587
      %3612 = vst.msk [vmem:[#allocation3 + $0x8] sm:$0xff] %vm3610, %v3589
      %3613 = vst.msk [vmem:[#allocation3 + $0x10] sm:$0xff] %vm3610, %v3591
      %3614 = vst.msk [vmem:[#allocation3 + $0x18] sm:$0xff] %vm3610, %v3593
      %3615 = vst.msk [vmem:[#allocation3 + $0x20] sm:$0xff] %vm3610, %v3595
      %3616 = vst.msk [vmem:[#allocation3 + $0x28] sm:$0xff] %vm3610, %v3597
      %3617 = vst.msk [vmem:[#allocation3 + $0x30] sm:$0xff] %vm3610, %v3599
      %3618 = vst.msk [vmem:[#allocation3 + $0x38] sm:$0xff] %vm3610, %v3601
      %v3620 = vsel %vm2630, %v2606, 0
      %v3623 = vsel %vm2630, %v2607, 0
      %v3626 = vsel %vm2630, %v2608, 0
      %v3629 = vsel %vm2630, %v2609, 0
      %v3632 = vsel %vm2630, %v2610, 0
      %v3635 = vsel %vm2630, %v2611, 0
      %v3638 = vsel %vm2630, %v2612, 0
      %v3641 = vsel %vm2630, %v2613, 0
      %3643 = vmatprep.subr.mxu0 0.0
      %3644 = vmatpush1.msra.mxu0 %v2520
      %3645 = vmatprep.subr.mxu0 0.0
      %3646 = vmatpush1.msra.mxu0 %v2525
      %3647 = vmatprep.subr.mxu0 0.0
      %3648 = vmatpush1.msra.mxu0 %v2530
      %3649 = vmatprep.subr.mxu0 0.0
      %3650 = vmatpush1.msra.mxu0 %v2535
      %3651 = vmatprep.subr.mxu0 0.0
      %3652 = vmatpush1.msra.mxu0 %v2540
      %3653 = vmatprep.subr.mxu0 0.0
      %3654 = vmatpush1.msra.mxu0 %v2545
      %3655 = vmatprep.subr.mxu0 0.0
      %3656 = vmatpush1.msra.mxu0 %v2550
      %3657 = vmatprep.subr.mxu0 0.0
      %3658 = vmatpush1.msra.mxu0 %v2555
      %3659 = vmatprep.subr.mxu0 0.0
      %3660 = vmatpush1.msra.mxu0 0.0
      %3661 = vmatprep.subr.mxu0 0.0
      %3662 = vmatpush1.msra.mxu0 0.0
      %3663 = vmatprep.subr.mxu0 0.0
      %3664 = vmatpush1.msra.mxu0 0.0
      %3665 = vmatprep.subr.mxu0 0.0
      %3666 = vmatpush1.msra.mxu0 0.0
      %3667 = vmatprep.subr.mxu0 0.0
      %3668 = vmatpush1.msra.mxu0 0.0
      %3669 = vmatprep.subr.mxu0 0.0
      %3670 = vmatpush1.msra.mxu0 0.0
      %3671 = vmatprep.subr.mxu0 0.0
      %3672 = vmatpush1.msra.mxu0 0.0
      %3673 = vmatprep.subr.mxu0 0.0
      %3674 = vmatpush1.msra.mxu0 0.0
      %3675 = vmatprep.subr.mxu0 0.0
      %3676 = vmatpush1.msra.mxu0 0.0
      %3677 = vmatprep.subr.mxu0 0.0
      %3678 = vmatpush1.msra.mxu0 0.0
      %3679 = vmatprep.subr.mxu0 0.0
      %3680 = vmatpush1.msra.mxu0 0.0
      %3681 = vmatprep.subr.mxu0 0.0
      %3682 = vmatpush1.msra.mxu0 0.0
      %3683 = vmatprep.subr.mxu0 0.0
      %3684 = vmatpush1.msra.mxu0 0.0
      %3685 = vmatprep.subr.mxu0 0.0
      %3686 = vmatpush1.msra.mxu0 0.0
      %3687 = vmatprep.subr.mxu0 0.0
      %3688 = vmatpush1.msra.mxu0 0.0
      %3689 = vmatprep.subr.mxu0 0.0
      %3690 = vmatpush1.msra.mxu0 0.0
      %3691 = vmatprep.subr.mxu0 0.0
      %3692 = vmatpush1.msra.mxu0 0.0
      %3693 = vmatprep.subr.mxu0 0.0
      %3694 = vmatpush1.msra.mxu0 0.0
      %3695 = vmatprep.subr.mxu0 0.0
      %3696 = vmatpush1.msra.mxu0 0.0
      %3697 = vmatprep.subr.mxu0 0.0
      %3698 = vmatpush1.msra.mxu0 0.0
      %3699 = vmatprep.subr.mxu0 0.0
      %3700 = vmatpush1.msra.mxu0 0.0
      %3701 = vmatprep.subr.mxu0 0.0
      %3702 = vmatpush1.msra.mxu0 0.0
      %3703 = vmatprep.subr.mxu0 0.0
      %3704 = vmatpush1.msra.mxu0 0.0
      %3705 = vmatprep.subr.mxu0 0.0
      %3706 = vmatpush1.msra.mxu0 0.0
      %3707 = vmatprep.mubr.f32.mxu0 0.0
      %3708 = vmatmul.mubr.f32.gmra.mrb[0].mxu0 %v3620
      %v3709 = vpop.f32.mrb[0].mxu0
      %v3710 = vadd.f32 0.0, %v3709
      %v3711 = vpop.f32.mrb[0].mxu0
      %3712 = vmatprep.mubr.f32.mxu0 0.0
      %3713 = vmatmul.mubr.f32.gmra.mrb[0].mxu0 %v3623
      %v3714 = vpop.f32.mrb[0].mxu0
      %v3715 = vadd.f32 0.0, %v3714
      %v3716 = vpop.f32.mrb[0].mxu0
      %3717 = vmatprep.mubr.f32.mxu0 0.0
      %3718 = vmatmul.mubr.f32.gmra.mrb[0].mxu0 %v3626
      %v3719 = vpop.f32.mrb[0].mxu0
      %v3720 = vadd.f32 0.0, %v3719
      %v3721 = vpop.f32.mrb[0].mxu0
      %3722 = vmatprep.mubr.f32.mxu0 0.0
      %3723 = vmatmul.mubr.f32.gmra.mrb[0].mxu0 %v3629
      %v3724 = vpop.f32.mrb[0].mxu0
      %v3725 = vadd.f32 0.0, %v3724
      %v3726 = vpop.f32.mrb[0].mxu0
      %3727 = vmatprep.mubr.f32.mxu0 0.0
      %3728 = vmatmul.mubr.f32.gmra.mrb[0].mxu0 %v3632
      %v3729 = vpop.f32.mrb[0].mxu0
      %v3730 = vadd.f32 0.0, %v3729
      %v3731 = vpop.f32.mrb[0].mxu0
      %3732 = vmatprep.mubr.f32.mxu0 0.0
      %3733 = vmatmul.mubr.f32.gmra.mrb[0].mxu0 %v3635
      %v3734 = vpop.f32.mrb[0].mxu0
      %v3735 = vadd.f32 0.0, %v3734
      %v3736 = vpop.f32.mrb[0].mxu0
      %3737 = vmatprep.mubr.f32.mxu0 0.0
      %3738 = vmatmul.mubr.f32.gmra.mrb[0].mxu0 %v3638
      %v3739 = vpop.f32.mrb[0].mxu0
      %v3740 = vadd.f32 0.0, %v3739
      %v3741 = vpop.f32.mrb[0].mxu0
      %3742 = vmatprep.mubr.f32.mxu0 0.0
      %3743 = vmatmul.mubr.f32.gmra.mrb[0].mxu0 %v3641
      %v3744 = vpop.f32.mrb[0].mxu0
      %v3745 = vadd.f32 0.0, %v3744
      %v3746 = vpop.f32.mrb[0].mxu0
      %3747 = vdwg.mxu0
      %3756 = vrot.lane.b32.xlu0 %v3710, 48
      %v3757 = vpop.permute.xlu0 %3756
      %3758 = vrot.lane.b32.xlu0 %v3715, 48
      %v3759 = vpop.permute.xlu0 %3758
      %3760 = vrot.lane.b32.xlu0 %v3720, 48
      %v3761 = vpop.permute.xlu0 %3760
      %3762 = vrot.lane.b32.xlu0 %v3725, 48
      %v3763 = vpop.permute.xlu0 %3762
      %3764 = vrot.lane.b32.xlu0 %v3730, 48
      %v3765 = vpop.permute.xlu0 %3764
      %3766 = vrot.lane.b32.xlu0 %v3735, 48
      %v3767 = vpop.permute.xlu0 %3766
      %3768 = vrot.lane.b32.xlu0 %v3740, 48
      %v3769 = vpop.permute.xlu0 %3768
      %3770 = vrot.lane.b32.xlu0 %v3745, 48
      %v3771 = vpop.permute.xlu0 %3770
      %vm3780 = vcmask 458112
      %3781 = vst.msk [vmem:[#allocation3] sm:$0xff] %vm3780, %v3757
      %3782 = vst.msk [vmem:[#allocation3 + $0x8] sm:$0xff] %vm3780, %v3759
      %3783 = vst.msk [vmem:[#allocation3 + $0x10] sm:$0xff] %vm3780, %v3761
      %3784 = vst.msk [vmem:[#allocation3 + $0x18] sm:$0xff] %vm3780, %v3763
      %3785 = vst.msk [vmem:[#allocation3 + $0x20] sm:$0xff] %vm3780, %v3765
      %3786 = vst.msk [vmem:[#allocation3 + $0x28] sm:$0xff] %vm3780, %v3767
      %3787 = vst.msk [vmem:[#allocation3 + $0x30] sm:$0xff] %vm3780, %v3769
      %3788 = vst.msk [vmem:[#allocation3 + $0x38] sm:$0xff] %vm3780, %v3771
      %v3790 = vsel %vm2630, %v2614, 0
      %v3793 = vsel %vm2630, %v2615, 0
      %v3796 = vsel %vm2630, %v2616, 0
      %v3799 = vsel %vm2630, %v2617, 0
      %v3802 = vsel %vm2630, %v2618, 0
      %v3805 = vsel %vm2630, %v2619, 0
      %v3808 = vsel %vm2630, %v2620, 0
      %v3811 = vsel %vm2630, %v2621, 0
      %3813 = vmatprep.subr.mxu0 0.0
      %3814 = vmatpush1.msra.mxu0 %v2520
      %3815 = vmatprep.subr.mxu0 0.0
      %3816 = vmatpush1.msra.mxu0 %v2525
      %3817 = vmatprep.subr.mxu0 0.0
      %3818 = vmatpush1.msra.mxu0 %v2530
      %3819 = vmatprep.subr.mxu0 0.0
      %3820 = vmatpush1.msra.mxu0 %v2535
      %3821 = vmatprep.subr.mxu0 0.0
      %3822 = vmatpush1.msra.mxu0 %v2540
      %3823 = vmatprep.subr.mxu0 0.0
      %3824 = vmatpush1.msra.mxu0 %v2545
      %3825 = vmatprep.subr.mxu0 0.0
      %3826 = vmatpush1.msra.mxu0 %v2550
      %3827 = vmatprep.subr.mxu0 0.0
      %3828 = vmatpush1.msra.mxu0 %v2555
      %3829 = vmatprep.subr.mxu0 0.0
      %3830 = vmatpush1.msra.mxu0 0.0
      %3831 = vmatprep.subr.mxu0 0.0
      %3832 = vmatpush1.msra.mxu0 0.0
      %3833 = vmatprep.subr.mxu0 0.0
      %3834 = vmatpush1.msra.mxu0 0.0
      %3835 = vmatprep.subr.mxu0 0.0
      %3836 = vmatpush1.msra.mxu0 0.0
      %3837 = vmatprep.subr.mxu0 0.0
      %3838 = vmatpush1.msra.mxu0 0.0
      %3839 = vmatprep.subr.mxu0 0.0
      %3840 = vmatpush1.msra.mxu0 0.0
      %3841 = vmatprep.subr.mxu0 0.0
      %3842 = vmatpush1.msra.mxu0 0.0
      %3843 = vmatprep.subr.mxu0 0.0
      %3844 = vmatpush1.msra.mxu0 0.0
      %3845 = vmatprep.subr.mxu0 0.0
      %3846 = vmatpush1.msra.mxu0 0.0
      %3847 = vmatprep.subr.mxu0 0.0
      %3848 = vmatpush1.msra.mxu0 0.0
      %3849 = vmatprep.subr.mxu0 0.0
      %3850 = vmatpush1.msra.mxu0 0.0
      %3851 = vmatprep.subr.mxu0 0.0
      %3852 = vmatpush1.msra.mxu0 0.0
      %3853 = vmatprep.subr.mxu0 0.0
      %3854 = vmatpush1.msra.mxu0 0.0
      %3855 = vmatprep.subr.mxu0 0.0
      %3856 = vmatpush1.msra.mxu0 0.0
      %3857 = vmatprep.subr.mxu0 0.0
      %3858 = vmatpush1.msra.mxu0 0.0
      %3859 = vmatprep.subr.mxu0 0.0
      %3860 = vmatpush1.msra.mxu0 0.0
      %3861 = vmatprep.subr.mxu0 0.0
      %3862 = vmatpush1.msra.mxu0 0.0
      %3863 = vmatprep.subr.mxu0 0.0
      %3864 = vmatpush1.msra.mxu0 0.0
      %3865 = vmatprep.subr.mxu0 0.0
      %3866 = vmatpush1.msra.mxu0 0.0
      %3867 = vmatprep.subr.mxu0 0.0
      %3868 = vmatpush1.msra.mxu0 0.0
      %3869 = vmatprep.subr.mxu0 0.0
      %3870 = vmatpush1.msra.mxu0 0.0
      %3871 = vmatprep.subr.mxu0 0.0
      %3872 = vmatpush1.msra.mxu0 0.0
      %3873 = vmatprep.subr.mxu0 0.0
      %3874 = vmatpush1.msra.mxu0 0.0
      %3875 = vmatprep.subr.mxu0 0.0
      %3876 = vmatpush1.msra.mxu0 0.0
      %3877 = vmatprep.mubr.f32.mxu0 0.0
      %3878 = vmatmul.mubr.f32.gmra.mrb[0].mxu0 %v3790
      %v3879 = vpop.f32.mrb[0].mxu0
      %v3880 = vadd.f32 0.0, %v3879
      %v3881 = vpop.f32.mrb[0].mxu0
      %3882 = vmatprep.mubr.f32.mxu0 0.0
      %3883 = vmatmul.mubr.f32.gmra.mrb[0].mxu0 %v3793
      %v3884 = vpop.f32.mrb[0].mxu0
      %v3885 = vadd.f32 0.0, %v3884
      %v3886 = vpop.f32.mrb[0].mxu0
      %3887 = vmatprep.mubr.f32.mxu0 0.0
      %3888 = vmatmul.mubr.f32.gmra.mrb[0].mxu0 %v3796
      %v3889 = vpop.f32.mrb[0].mxu0
      %v3890 = vadd.f32 0.0, %v3889
      %v3891 = vpop.f32.mrb[0].mxu0
      %3892 = vmatprep.mubr.f32.mxu0 0.0
      %3893 = vmatmul.mubr.f32.gmra.mrb[0].mxu0 %v3799
      %v3894 = vpop.f32.mrb[0].mxu0
      %v3895 = vadd.f32 0.0, %v3894
      %v3896 = vpop.f32.mrb[0].mxu0
      %3897 = vmatprep.mubr.f32.mxu0 0.0
      %3898 = vmatmul.mubr.f32.gmra.mrb[0].mxu0 %v3802
      %v3899 = vpop.f32.mrb[0].mxu0
      %v3900 = vadd.f32 0.0, %v3899
      %v3901 = vpop.f32.mrb[0].mxu0
      %3902 = vmatprep.mubr.f32.mxu0 0.0
      %3903 = vmatmul.mubr.f32.gmra.mrb[0].mxu0 %v3805
      %v3904 = vpop.f32.mrb[0].mxu0
      %v3905 = vadd.f32 0.0, %v3904
      %v3906 = vpop.f32.mrb[0].mxu0
      %3907 = vmatprep.mubr.f32.mxu0 0.0
      %3908 = vmatmul.mubr.f32.gmra.mrb[0].mxu0 %v3808
      %v3909 = vpop.f32.mrb[0].mxu0
      %v3910 = vadd.f32 0.0, %v3909
      %v3911 = vpop.f32.mrb[0].mxu0
      %3912 = vmatprep.mubr.f32.mxu0 0.0
      %3913 = vmatmul.mubr.f32.gmra.mrb[0].mxu0 %v3811
      %v3914 = vpop.f32.mrb[0].mxu0
      %v3915 = vadd.f32 0.0, %v3914
      %v3916 = vpop.f32.mrb[0].mxu0
      %3917 = vdwg.mxu0
      %3926 = vrot.lane.b32.xlu0 %v3880, 56
      %v3927 = vpop.permute.xlu0 %3926
      %3928 = vrot.lane.b32.xlu0 %v3885, 56
      %v3929 = vpop.permute.xlu0 %3928
      %3930 = vrot.lane.b32.xlu0 %v3890, 56
      %v3931 = vpop.permute.xlu0 %3930
      %3932 = vrot.lane.b32.xlu0 %v3895, 56
      %v3933 = vpop.permute.xlu0 %3932
      %3934 = vrot.lane.b32.xlu0 %v3900, 56
      %v3935 = vpop.permute.xlu0 %3934
      %3936 = vrot.lane.b32.xlu0 %v3905, 56
      %v3937 = vpop.permute.xlu0 %3936
      %3938 = vrot.lane.b32.xlu0 %v3910, 56
      %v3939 = vpop.permute.xlu0 %3938
      %3940 = vrot.lane.b32.xlu0 %v3915, 56
      %v3941 = vpop.permute.xlu0 %3940
      %vm3950 = vcmask 523712
      %3951 = vst.msk [vmem:[#allocation3] sm:$0xff] %vm3950, %v3927
      %3952 = vst.msk [vmem:[#allocation3 + $0x8] sm:$0xff] %vm3950, %v3929
      %3953 = vst.msk [vmem:[#allocation3 + $0x10] sm:$0xff] %vm3950, %v3931
      %3954 = vst.msk [vmem:[#allocation3 + $0x18] sm:$0xff] %vm3950, %v3933
      %3955 = vst.msk [vmem:[#allocation3 + $0x20] sm:$0xff] %vm3950, %v3935
      %3956 = vst.msk [vmem:[#allocation3 + $0x28] sm:$0xff] %vm3950, %v3937
      %3957 = vst.msk [vmem:[#allocation3 + $0x30] sm:$0xff] %vm3950, %v3939
      %3958 = vst.msk [vmem:[#allocation3 + $0x38] sm:$0xff] %vm3950, %v3941
      %v3960 = vsel %vm2630, %v2622, 0
      %v3963 = vsel %vm2630, %v2623, 0
      %v3966 = vsel %vm2630, %v2624, 0
      %v3969 = vsel %vm2630, %v2625, 0
      %v3972 = vsel %vm2630, %v2626, 0
      %v3975 = vsel %vm2630, %v2627, 0
      %v3978 = vsel %vm2630, %v2628, 0
      %v3981 = vsel %vm2630, %v2629, 0
      %3983 = vmatprep.subr.mxu0 0.0
      %3984 = vmatpush1.msra.mxu0 %v2520
      %3985 = vmatprep.subr.mxu0 0.0
      %3986 = vmatpush1.msra.mxu0 %v2525
      %3987 = vmatprep.subr.mxu0 0.0
      %3988 = vmatpush1.msra.mxu0 %v2530
      %3989 = vmatprep.subr.mxu0 0.0
      %3990 = vmatpush1.msra.mxu0 %v2535
      %3991 = vmatprep.subr.mxu0 0.0
      %3992 = vmatpush1.msra.mxu0 %v2540
      %3993 = vmatprep.subr.mxu0 0.0
      %3994 = vmatpush1.msra.mxu0 %v2545
      %3995 = vmatprep.subr.mxu0 0.0
      %3996 = vmatpush1.msra.mxu0 %v2550
      %3997 = vmatprep.subr.mxu0 0.0
      %3998 = vmatpush1.msra.mxu0 %v2555
      %3999 = vmatprep.subr.mxu0 0.0
      %4000 = vmatpush1.msra.mxu0 0.0
      %4001 = vmatprep.subr.mxu0 0.0
      %4002 = vmatpush1.msra.mxu0 0.0
      %4003 = vmatprep.subr.mxu0 0.0
      %4004 = vmatpush1.msra.mxu0 0.0
      %4005 = vmatprep.subr.mxu0 0.0
      %4006 = vmatpush1.msra.mxu0 0.0
      %4007 = vmatprep.subr.mxu0 0.0
      %4008 = vmatpush1.msra.mxu0 0.0
      %4009 = vmatprep.subr.mxu0 0.0
      %4010 = vmatpush1.msra.mxu0 0.0
      %4011 = vmatprep.subr.mxu0 0.0
      %4012 = vmatpush1.msra.mxu0 0.0
      %4013 = vmatprep.subr.mxu0 0.0
      %4014 = vmatpush1.msra.mxu0 0.0
      %4015 = vmatprep.subr.mxu0 0.0
      %4016 = vmatpush1.msra.mxu0 0.0
      %4017 = vmatprep.subr.mxu0 0.0
      %4018 = vmatpush1.msra.mxu0 0.0
      %4019 = vmatprep.subr.mxu0 0.0
      %4020 = vmatpush1.msra.mxu0 0.0
      %4021 = vmatprep.subr.mxu0 0.0
      %4022 = vmatpush1.msra.mxu0 0.0
      %4023 = vmatprep.subr.mxu0 0.0
      %4024 = vmatpush1.msra.mxu0 0.0
      %4025 = vmatprep.subr.mxu0 0.0
      %4026 = vmatpush1.msra.mxu0 0.0
      %4027 = vmatprep.subr.mxu0 0.0
      %4028 = vmatpush1.msra.mxu0 0.0
      %4029 = vmatprep.subr.mxu0 0.0
      %4030 = vmatpush1.msra.mxu0 0.0
      %4031 = vmatprep.subr.mxu0 0.0
      %4032 = vmatpush1.msra.mxu0 0.0
      %4033 = vmatprep.subr.mxu0 0.0
      %4034 = vmatpush1.msra.mxu0 0.0
      %4035 = vmatprep.subr.mxu0 0.0
      %4036 = vmatpush1.msra.mxu0 0.0
      %4037 = vmatprep.subr.mxu0 0.0
      %4038 = vmatpush1.msra.mxu0 0.0
      %4039 = vmatprep.subr.mxu0 0.0
      %4040 = vmatpush1.msra.mxu0 0.0
      %4041 = vmatprep.subr.mxu0 0.0
      %4042 = vmatpush1.msra.mxu0 0.0
      %4043 = vmatprep.subr.mxu0 0.0
      %4044 = vmatpush1.msra.mxu0 0.0
      %4045 = vmatprep.subr.mxu0 0.0
      %4046 = vmatpush1.msra.mxu0 0.0
      %4047 = vmatprep.mubr.f32.mxu0 0.0
      %4048 = vmatmul.mubr.f32.gmra.mrb[0].mxu0 %v3960
      %v4049 = vpop.f32.mrb[0].mxu0
      %v4050 = vadd.f32 0.0, %v4049
      %v4051 = vpop.f32.mrb[0].mxu0
      %4052 = vmatprep.mubr.f32.mxu0 0.0
      %4053 = vmatmul.mubr.f32.gmra.mrb[0].mxu0 %v3963
      %v4054 = vpop.f32.mrb[0].mxu0
      %v4055 = vadd.f32 0.0, %v4054
      %v4056 = vpop.f32.mrb[0].mxu0
      %4057 = vmatprep.mubr.f32.mxu0 0.0
      %4058 = vmatmul.mubr.f32.gmra.mrb[0].mxu0 %v3966
      %v4059 = vpop.f32.mrb[0].mxu0
      %v4060 = vadd.f32 0.0, %v4059
      %v4061 = vpop.f32.mrb[0].mxu0
      %4062 = vmatprep.mubr.f32.mxu0 0.0
      %4063 = vmatmul.mubr.f32.gmra.mrb[0].mxu0 %v3969
      %v4064 = vpop.f32.mrb[0].mxu0
      %v4065 = vadd.f32 0.0, %v4064
      %v4066 = vpop.f32.mrb[0].mxu0
      %4067 = vmatprep.mubr.f32.mxu0 0.0
      %4068 = vmatmul.mubr.f32.gmra.mrb[0].mxu0 %v3972
      %v4069 = vpop.f32.mrb[0].mxu0
      %v4070 = vadd.f32 0.0, %v4069
      %v4071 = vpop.f32.mrb[0].mxu0
      %4072 = vmatprep.mubr.f32.mxu0 0.0
      %4073 = vmatmul.mubr.f32.gmra.mrb[0].mxu0 %v3975
      %v4074 = vpop.f32.mrb[0].mxu0
      %v4075 = vadd.f32 0.0, %v4074
      %v4076 = vpop.f32.mrb[0].mxu0
      %4077 = vmatprep.mubr.f32.mxu0 0.0
      %4078 = vmatmul.mubr.f32.gmra.mrb[0].mxu0 %v3978
      %v4079 = vpop.f32.mrb[0].mxu0
      %v4080 = vadd.f32 0.0, %v4079
      %v4081 = vpop.f32.mrb[0].mxu0
      %4082 = vmatprep.mubr.f32.mxu0 0.0
      %4083 = vmatmul.mubr.f32.gmra.mrb[0].mxu0 %v3981
      %v4084 = vpop.f32.mrb[0].mxu0
      %v4085 = vadd.f32 0.0, %v4084
      %v4086 = vpop.f32.mrb[0].mxu0
      %4087 = vdwg.mxu0
      %4096 = vrot.lane.b32.xlu0 %v4050, 64
      %v4097 = vpop.permute.xlu0 %4096
      %4098 = vrot.lane.b32.xlu0 %v4055, 64
      %v4099 = vpop.permute.xlu0 %4098
      %4100 = vrot.lane.b32.xlu0 %v4060, 64
      %v4101 = vpop.permute.xlu0 %4100
      %4102 = vrot.lane.b32.xlu0 %v4065, 64
      %v4103 = vpop.permute.xlu0 %4102
      %4104 = vrot.lane.b32.xlu0 %v4070, 64
      %v4105 = vpop.permute.xlu0 %4104
      %4106 = vrot.lane.b32.xlu0 %v4075, 64
      %v4107 = vpop.permute.xlu0 %4106
      %4108 = vrot.lane.b32.xlu0 %v4080, 64
      %v4109 = vpop.permute.xlu0 %4108
      %4110 = vrot.lane.b32.xlu0 %v4085, 64
      %v4111 = vpop.permute.xlu0 %4110
      %vm4120 = vcmask 589312
      %4121 = vst.msk [vmem:[#allocation3] sm:$0xff] %vm4120, %v4097
      %4122 = vst.msk [vmem:[#allocation3 + $0x8] sm:$0xff] %vm4120, %v4099
      %4123 = vst.msk [vmem:[#allocation3 + $0x10] sm:$0xff] %vm4120, %v4101
      %4124 = vst.msk [vmem:[#allocation3 + $0x18] sm:$0xff] %vm4120, %v4103
      %4125 = vst.msk [vmem:[#allocation3 + $0x20] sm:$0xff] %vm4120, %v4105
      %4126 = vst.msk [vmem:[#allocation3 + $0x28] sm:$0xff] %vm4120, %v4107
      %4127 = vst.msk [vmem:[#allocation3 + $0x30] sm:$0xff] %vm4120, %v4109
      %4128 = vst.msk [vmem:[#allocation3 + $0x38] sm:$0xff] %vm4120, %v4111
      %v4129 = vld [vmem:[#allocation3] sm:$0xff]
      %v4130 = vld [vmem:[#allocation3 + $0x8] sm:$0xff]
      %v4131 = vld [vmem:[#allocation3 + $0x10] sm:$0xff]
      %v4132 = vld [vmem:[#allocation3 + $0x18] sm:$0xff]
      %v4133 = vld [vmem:[#allocation3 + $0x20] sm:$0xff]
      %v4134 = vld [vmem:[#allocation3 + $0x28] sm:$0xff]
      %v4135 = vld [vmem:[#allocation3 + $0x30] sm:$0xff]
      %v4136 = vld [vmem:[#allocation3 + $0x38] sm:$0xff]
      %v4137 = vld [vmem:[%s2] sm:$0xff]
      %v4138 = vld [vmem:[%s2 + $0x8] sm:$0xff]
      %v4139 = vld [vmem:[%s2 + $0x10] sm:$0xff]
      %v4140 = vld [vmem:[%s2 + $0x18] sm:$0xff]
      %v4141 = vld [vmem:[%s2 + $0x20] sm:$0xff]
      %v4142 = vld [vmem:[%s2 + $0x28] sm:$0xff]
      %v4143 = vld [vmem:[%s2 + $0x30] sm:$0xff]
      %v4144 = vld [vmem:[%s2 + $0x38] sm:$0xff]
      %v4145 = vld [vmem:[%s2 + $0x40] sm:$0xff]
      %v4146 = vld [vmem:[%s5] sm:$0x1]
      %v4148 = vlaneseq
      %v4149 = vshrl.u32 %v4148, 7
      %v4150 = vsub.s32 0, %v4149
      %v4151 = vrot.slane %v4146, %v4150
      %vm4153 = vcmask 588800
      %v4155 = vsel %vm4153, %v4129, 0
      %v4158 = vsel %vm4153, %v4130, 0
      %v4161 = vsel %vm4153, %v4131, 0
      %v4164 = vsel %vm4153, %v4132, 0
      %v4167 = vsel %vm4153, %v4133, 0
      %v4170 = vsel %vm4153, %v4134, 0
      %v4173 = vsel %vm4153, %v4135, 0
      %v4176 = vsel %vm4153, %v4136, 0
      %4178 = vmatprep.subr.mxu0 0.0
      %4179 = vmatpush1.msra.mxu0 %v4137
      %4180 = vmatprep.subr.mxu0 0.0
      %4181 = vmatpush1.msra.mxu0 %v4138
      %4182 = vmatprep.subr.mxu0 0.0
      %4183 = vmatpush1.msra.mxu0 %v4139
      %4184 = vmatprep.subr.mxu0 0.0
      %4185 = vmatpush1.msra.mxu0 %v4140
      %4186 = vmatprep.subr.mxu0 0.0
      %4187 = vmatpush1.msra.mxu0 %v4141
      %4188 = vmatprep.subr.mxu0 0.0
      %4189 = vmatpush1.msra.mxu0 %v4142
      %4190 = vmatprep.subr.mxu0 0.0
      %4191 = vmatpush1.msra.mxu0 %v4143
      %4192 = vmatprep.subr.mxu0 0.0
      %4193 = vmatpush1.msra.mxu0 %v4144
      %4194 = vmatprep.subr.mxu0 0.0
      %4195 = vmatpush1.msra.mxu0 %v4145
      %4196 = vmatprep.subr.mxu0 0.0
      %4197 = vmatpush1.msra.mxu0 0.0
      %4198 = vmatprep.subr.mxu0 0.0
      %4199 = vmatpush1.msra.mxu0 0.0
      %4200 = vmatprep.subr.mxu0 0.0
      %4201 = vmatpush1.msra.mxu0 0.0
      %4202 = vmatprep.subr.mxu0 0.0
      %4203 = vmatpush1.msra.mxu0 0.0
      %4204 = vmatprep.subr.mxu0 0.0
      %4205 = vmatpush1.msra.mxu0 0.0
      %4206 = vmatprep.subr.mxu0 0.0
      %4207 = vmatpush1.msra.mxu0 0.0
      %4208 = vmatprep.subr.mxu0 0.0
      %4209 = vmatpush1.msra.mxu0 0.0
      %4210 = vmatprep.subr.mxu0 0.0
      %4211 = vmatpush1.msra.mxu0 0.0
      %4212 = vmatprep.subr.mxu0 0.0
      %4213 = vmatpush1.msra.mxu0 0.0
      %4214 = vmatprep.subr.mxu0 0.0
      %4215 = vmatpush1.msra.mxu0 0.0
      %4216 = vmatprep.subr.mxu0 0.0
      %4217 = vmatpush1.msra.mxu0 0.0
      %4218 = vmatprep.subr.mxu0 0.0
      %4219 = vmatpush1.msra.mxu0 0.0
      %4220 = vmatprep.subr.mxu0 0.0
      %4221 = vmatpush1.msra.mxu0 0.0
      %4222 = vmatprep.subr.mxu0 0.0
      %4223 = vmatpush1.msra.mxu0 0.0
      %4224 = vmatprep.subr.mxu0 0.0
      %4225 = vmatpush1.msra.mxu0 0.0
      %4226 = vmatprep.subr.mxu0 0.0
      %4227 = vmatpush1.msra.mxu0 0.0
      %4228 = vmatprep.subr.mxu0 0.0
      %4229 = vmatpush1.msra.mxu0 0.0
      %4230 = vmatprep.subr.mxu0 0.0
      %4231 = vmatpush1.msra.mxu0 0.0
      %4232 = vmatprep.subr.mxu0 0.0
      %4233 = vmatpush1.msra.mxu0 0.0
      %4234 = vmatprep.subr.mxu0 0.0
      %4235 = vmatpush1.msra.mxu0 0.0
      %4236 = vmatprep.subr.mxu0 0.0
      %4237 = vmatpush1.msra.mxu0 0.0
      %4238 = vmatprep.subr.mxu0 0.0
      %4239 = vmatpush1.msra.mxu0 0.0
      %4240 = vmatprep.subr.mxu0 0.0
      %4241 = vmatpush1.msra.mxu0 0.0
      %4242 = vmatprep.mubr.f32.mxu0 0.0
      %4243 = vmatmul.mubr.f32.gmra.mrb[0].mxu0 %v4155
      %v4244 = vpop.f32.mrb[0].mxu0
      %v4245 = vadd.f32 %v4151, %v4244
      %v4246 = vpop.f32.mrb[0].mxu0
      %4247 = vmatprep.mubr.f32.mxu0 0.0
      %4248 = vmatmul.mubr.f32.gmra.mrb[0].mxu0 %v4158
      %v4249 = vpop.f32.mrb[0].mxu0
      %v4250 = vadd.f32 %v4151, %v4249
      %v4251 = vpop.f32.mrb[0].mxu0
      %4252 = vmatprep.mubr.f32.mxu0 0.0
      %4253 = vmatmul.mubr.f32.gmra.mrb[0].mxu0 %v4161
      %v4254 = vpop.f32.mrb[0].mxu0
      %v4255 = vadd.f32 %v4151, %v4254
      %v4256 = vpop.f32.mrb[0].mxu0
      %4257 = vmatprep.mubr.f32.mxu0 0.0
      %4258 = vmatmul.mubr.f32.gmra.mrb[0].mxu0 %v4164
      %v4259 = vpop.f32.mrb[0].mxu0
      %v4260 = vadd.f32 %v4151, %v4259
      %v4261 = vpop.f32.mrb[0].mxu0
      %4262 = vmatprep.mubr.f32.mxu0 0.0
      %4263 = vmatmul.mubr.f32.gmra.mrb[0].mxu0 %v4167
      %v4264 = vpop.f32.mrb[0].mxu0
      %v4265 = vadd.f32 %v4151, %v4264
      %v4266 = vpop.f32.mrb[0].mxu0
      %4267 = vmatprep.mubr.f32.mxu0 0.0
      %4268 = vmatmul.mubr.f32.gmra.mrb[0].mxu0 %v4170
      %v4269 = vpop.f32.mrb[0].mxu0
      %v4270 = vadd.f32 %v4151, %v4269
      %v4271 = vpop.f32.mrb[0].mxu0
      %4272 = vmatprep.mubr.f32.mxu0 0.0
      %4273 = vmatmul.mubr.f32.gmra.mrb[0].mxu0 %v4173
      %v4274 = vpop.f32.mrb[0].mxu0
      %v4275 = vadd.f32 %v4151, %v4274
      %v4276 = vpop.f32.mrb[0].mxu0
      %4277 = vmatprep.mubr.f32.mxu0 0.0
      %4278 = vmatmul.mubr.f32.gmra.mrb[0].mxu0 %v4176
      %v4279 = vpop.f32.mrb[0].mxu0
      %v4280 = vadd.f32 %v4151, %v4279
      %v4281 = vpop.f32.mrb[0].mxu0
      %4282 = vdwg.mxu0
      %vm4283 = vcmp.ge.f32.partialorder %v4245, 0.0
      %vm4284 = vcmp.ge.f32.partialorder %v4250, 0.0
      %vm4285 = vcmp.ge.f32.partialorder %v4255, 0.0
      %vm4286 = vcmp.ge.f32.partialorder %v4260, 0.0
      %vm4287 = vcmp.ge.f32.partialorder %v4265, 0.0
      %vm4288 = vcmp.ge.f32.partialorder %v4270, 0.0
      %vm4289 = vcmp.ge.f32.partialorder %v4275, 0.0
      %vm4290 = vcmp.ge.f32.partialorder %v4280, 0.0
      %v4291 = vmul.f32 %v4245, 0.01
      %v4292 = vmul.f32 %v4250, 0.01
      %v4293 = vmul.f32 %v4255, 0.01
      %v4294 = vmul.f32 %v4260, 0.01
      %v4295 = vmul.f32 %v4265, 0.01
      %v4296 = vmul.f32 %v4270, 0.01
      %v4297 = vmul.f32 %v4275, 0.01
      %v4298 = vmul.f32 %v4280, 0.01
      %v4299 = vsel %vm4283, %v4245, %v4291
      %v4300 = vsel %vm4284, %v4250, %v4292
      %v4301 = vsel %vm4285, %v4255, %v4293
      %v4302 = vsel %vm4286, %v4260, %v4294
      %v4303 = vsel %vm4287, %v4265, %v4295
      %v4304 = vsel %vm4288, %v4270, %v4296
      %v4305 = vsel %vm4289, %v4275, %v4297
      %v4306 = vsel %vm4290, %v4280, %v4298
      %v4307 = vld [vmem:[%s8] sm:$0xff]
      %v4308 = vld [vmem:[%s8 + $0x8] sm:$0xff]
      %v4309 = vld [vmem:[%s8 + $0x10] sm:$0xff]
      %v4310 = vld [vmem:[%s8 + $0x18] sm:$0xff]
      %v4311 = vld [vmem:[%s8 + $0x20] sm:$0xff]
      %v4312 = vld [vmem:[%s8 + $0x28] sm:$0xff]
      %v4313 = vld [vmem:[%s8 + $0x30] sm:$0xff]
      %v4314 = vld [vmem:[%s8 + $0x38] sm:$0xff]
      %v4315 = vld [vmem:[%s8 + $0x40] sm:$0xff]
      %v4316 = vld [vmem:[%s8 + $0x48] sm:$0xff]
      %v4317 = vld [vmem:[%s8 + $0x50] sm:$0xff]
      %v4318 = vld [vmem:[%s8 + $0x58] sm:$0xff]
      %v4319 = vld [vmem:[%s8 + $0x60] sm:$0xff]
      %v4320 = vld [vmem:[%s8 + $0x68] sm:$0xff]
      %v4321 = vld [vmem:[%s8 + $0x70] sm:$0xff]
      %v4322 = vld [vmem:[%s8 + $0x78] sm:$0xff]
      %4323 = vmatprep.subr.mxu0 0.0
      %4324 = vmatpush1.msra.mxu0 %v1971
      %4325 = vmatprep.subr.mxu0 0.0
      %4326 = vmatpush1.msra.mxu0 %v1972
      %4327 = vmatprep.subr.mxu0 0.0
      %4328 = vmatpush1.msra.mxu0 %v1973
      %4329 = vmatprep.subr.mxu0 0.0
      %4330 = vmatpush1.msra.mxu0 %v1974
      %4331 = vmatprep.subr.mxu0 0.0
      %4332 = vmatpush1.msra.mxu0 %v1975
      %4333 = vmatprep.subr.mxu0 0.0
      %4334 = vmatpush1.msra.mxu0 %v1976
      %4335 = vmatprep.subr.mxu0 0.0
      %4336 = vmatpush1.msra.mxu0 %v1977
      %4337 = vmatprep.subr.mxu0 0.0
      %4338 = vmatpush1.msra.mxu0 %v1978
      %4339 = vmatprep.subr.mxu0 0.0
      %4340 = vmatpush1.msra.mxu0 %v1979
      %4341 = vmatprep.subr.mxu0 0.0
      %4342 = vmatpush1.msra.mxu0 %v1980
      %4343 = vmatprep.subr.mxu0 0.0
      %4344 = vmatpush1.msra.mxu0 %v1981
      %4345 = vmatprep.subr.mxu0 0.0
      %4346 = vmatpush1.msra.mxu0 %v1982
      %4347 = vmatprep.subr.mxu0 0.0
      %4348 = vmatpush1.msra.mxu0 %v1983
      %4349 = vmatprep.subr.mxu0 0.0
      %4350 = vmatpush1.msra.mxu0 %v1984
      %4351 = vmatprep.subr.mxu0 0.0
      %4352 = vmatpush1.msra.mxu0 %v1985
      %4353 = vmatprep.subr.mxu0 0.0
      %4354 = vmatpush1.msra.mxu0 %v1986
      %4355 = vmatprep.subr.mxu0 0.0
      %4356 = vmatpush1.msra.mxu0 %v1987
      %4357 = vmatprep.subr.mxu0 0.0
      %4358 = vmatpush1.msra.mxu0 %v1988
      %4359 = vmatprep.subr.mxu0 0.0
      %4360 = vmatpush1.msra.mxu0 %v1989
      %4361 = vmatprep.subr.mxu0 0.0
      %4362 = vmatpush1.msra.mxu0 %v1990
      %4363 = vmatprep.subr.mxu0 0.0
      %4364 = vmatpush1.msra.mxu0 %v1991
      %4365 = vmatprep.subr.mxu0 0.0
      %4366 = vmatpush1.msra.mxu0 %v1992
      %4367 = vmatprep.subr.mxu0 0.0
      %4368 = vmatpush1.msra.mxu0 %v1993
      %4369 = vmatprep.subr.mxu0 0.0
      %4370 = vmatpush1.msra.mxu0 %v1994
      %4371 = vmatprep.subr.mxu0 0.0
      %4372 = vmatpush1.msra.mxu0 %v1995
      %4373 = vmatprep.subr.mxu0 0.0
      %4374 = vmatpush1.msra.mxu0 %v1996
      %4375 = vmatprep.subr.mxu0 0.0
      %4376 = vmatpush1.msra.mxu0 %v1997
      %4377 = vmatprep.subr.mxu0 0.0
      %4378 = vmatpush1.msra.mxu0 %v1998
      %4379 = vmatprep.subr.mxu0 0.0
      %4380 = vmatpush1.msra.mxu0 %v1999
      %4381 = vmatprep.subr.mxu0 0.0
      %4382 = vmatpush1.msra.mxu0 %v2000
      %4383 = vmatprep.subr.mxu0 0.0
      %4384 = vmatpush1.msra.mxu0 %v2001
      %4385 = vmatprep.subr.mxu0 0.0
      %4386 = vmatpush1.msra.mxu0 %v2002
      %4387 = vmatprep.mubr.f32.mxu0 %v4308
      %4388 = vmatmul.mubr.f32.gmra.mrb[0].mxu0 %v4307
      %v4389 = vpop.f32.mrb[0].mxu0
      %v4390 = vadd.f32 0.0, %v4389
      %v4391 = vpop.f32.mrb[0].mxu0
      %4392 = vmatprep.mubr.f32.mxu0 %v4310
      %4393 = vmatmul.mubr.f32.gmra.mrb[0].mxu0 %v4309
      %v4394 = vpop.f32.mrb[0].mxu0
      %v4395 = vadd.f32 0.0, %v4394
      %v4396 = vpop.f32.mrb[0].mxu0
      %4397 = vmatprep.mubr.f32.mxu0 %v4312
      %4398 = vmatmul.mubr.f32.gmra.mrb[0].mxu0 %v4311
      %v4399 = vpop.f32.mrb[0].mxu0
      %v4400 = vadd.f32 0.0, %v4399
      %v4401 = vpop.f32.mrb[0].mxu0
      %4402 = vmatprep.mubr.f32.mxu0 %v4314
      %4403 = vmatmul.mubr.f32.gmra.mrb[0].mxu0 %v4313
      %v4404 = vpop.f32.mrb[0].mxu0
      %v4405 = vadd.f32 0.0, %v4404
      %v4406 = vpop.f32.mrb[0].mxu0
      %4407 = vmatprep.mubr.f32.mxu0 %v4316
      %4408 = vmatmul.mubr.f32.gmra.mrb[0].mxu0 %v4315
      %v4409 = vpop.f32.mrb[0].mxu0
      %v4410 = vadd.f32 0.0, %v4409
      %v4411 = vpop.f32.mrb[0].mxu0
      %4412 = vmatprep.mubr.f32.mxu0 %v4318
      %4413 = vmatmul.mubr.f32.gmra.mrb[0].mxu0 %v4317
      %v4414 = vpop.f32.mrb[0].mxu0
      %v4415 = vadd.f32 0.0, %v4414
      %v4416 = vpop.f32.mrb[0].mxu0
      %4417 = vmatprep.mubr.f32.mxu0 %v4320
      %4418 = vmatmul.mubr.f32.gmra.mrb[0].mxu0 %v4319
      %v4419 = vpop.f32.mrb[0].mxu0
      %v4420 = vadd.f32 0.0, %v4419
      %v4421 = vpop.f32.mrb[0].mxu0
      %4422 = vmatprep.mubr.f32.mxu0 %v4322
      %4423 = vmatmul.mubr.f32.gmra.mrb[0].mxu0 %v4321
      %v4424 = vpop.f32.mrb[0].mxu0
      %v4425 = vadd.f32 0.0, %v4424
      %v4426 = vpop.f32.mrb[0].mxu0
      %4427 = vdwg.mxu0
      %v4428 = vld [vmem:[%s3] sm:$0xff]
      %v4429 = vld [vmem:[%s3 + $0x8] sm:$0xff]
      %v4430 = vld [vmem:[%s3 + $0x10] sm:$0xff]
      %v4431 = vld [vmem:[%s3 + $0x18] sm:$0xff]
      %v4432 = vld [vmem:[%s3 + $0x20] sm:$0xf]
      %v4433 = vld [vmem:[%s6] sm:$0x1]
      %v4435 = vlaneseq
      %v4436 = vshrl.u32 %v4435, 7
      %v4437 = vsub.s32 0, %v4436
      %v4438 = vrot.slane %v4433, %v4437
      %v4441 = vsel %vm2015, %v4390, 0
      %v4444 = vsel %vm2015, %v4395, 0
      %v4447 = vsel %vm2015, %v4400, 0
      %v4450 = vsel %vm2015, %v4405, 0
      %v4453 = vsel %vm2015, %v4410, 0
      %v4456 = vsel %vm2015, %v4415, 0
      %v4459 = vsel %vm2015, %v4420, 0
      %v4462 = vsel %vm2015, %v4425, 0
      %v4465 = vsel %vm2112, %v4432, 0
      %4467 = vmatprep.subr.mxu0 0.0
      %4468 = vmatpush1.msra.mxu0 %v4428
      %4469 = vmatprep.subr.mxu0 0.0
      %4470 = vmatpush1.msra.mxu0 %v4429
      %4471 = vmatprep.subr.mxu0 0.0
      %4472 = vmatpush1.msra.mxu0 %v4430
      %4473 = vmatprep.subr.mxu0 0.0
      %4474 = vmatpush1.msra.mxu0 %v4431
      %4475 = vmatprep.subr.mxu0 0.0
      %4476 = vmatpush1.msra.mxu0 %v4465
      %4477 = vmatprep.subr.mxu0 0.0
      %4478 = vmatpush1.msra.mxu0 0.0
      %4479 = vmatprep.subr.mxu0 0.0
      %4480 = vmatpush1.msra.mxu0 0.0
      %4481 = vmatprep.subr.mxu0 0.0
      %4482 = vmatpush1.msra.mxu0 0.0
      %4483 = vmatprep.subr.mxu0 0.0
      %4484 = vmatpush1.msra.mxu0 0.0
      %4485 = vmatprep.subr.mxu0 0.0
      %4486 = vmatpush1.msra.mxu0 0.0
      %4487 = vmatprep.subr.mxu0 0.0
      %4488 = vmatpush1.msra.mxu0 0.0
      %4489 = vmatprep.subr.mxu0 0.0
      %4490 = vmatpush1.msra.mxu0 0.0
      %4491 = vmatprep.subr.mxu0 0.0
      %4492 = vmatpush1.msra.mxu0 0.0
      %4493 = vmatprep.subr.mxu0 0.0
      %4494 = vmatpush1.msra.mxu0 0.0
      %4495 = vmatprep.subr.mxu0 0.0
      %4496 = vmatpush1.msra.mxu0 0.0
      %4497 = vmatprep.subr.mxu0 0.0
      %4498 = vmatpush1.msra.mxu0 0.0
      %4499 = vmatprep.subr.mxu0 0.0
      %4500 = vmatpush1.msra.mxu0 0.0
      %4501 = vmatprep.subr.mxu0 0.0
      %4502 = vmatpush1.msra.mxu0 0.0
      %4503 = vmatprep.subr.mxu0 0.0
      %4504 = vmatpush1.msra.mxu0 0.0
      %4505 = vmatprep.subr.mxu0 0.0
      %4506 = vmatpush1.msra.mxu0 0.0
      %4507 = vmatprep.subr.mxu0 0.0
      %4508 = vmatpush1.msra.mxu0 0.0
      %4509 = vmatprep.subr.mxu0 0.0
      %4510 = vmatpush1.msra.mxu0 0.0
      %4511 = vmatprep.subr.mxu0 0.0
      %4512 = vmatpush1.msra.mxu0 0.0
      %4513 = vmatprep.subr.mxu0 0.0
      %4514 = vmatpush1.msra.mxu0 0.0
      %4515 = vmatprep.subr.mxu0 0.0
      %4516 = vmatpush1.msra.mxu0 0.0
      %4517 = vmatprep.subr.mxu0 0.0
      %4518 = vmatpush1.msra.mxu0 0.0
      %4519 = vmatprep.subr.mxu0 0.0
      %4520 = vmatpush1.msra.mxu0 0.0
      %4521 = vmatprep.subr.mxu0 0.0
      %4522 = vmatpush1.msra.mxu0 0.0
      %4523 = vmatprep.subr.mxu0 0.0
      %4524 = vmatpush1.msra.mxu0 0.0
      %4525 = vmatprep.subr.mxu0 0.0
      %4526 = vmatpush1.msra.mxu0 0.0
      %4527 = vmatprep.subr.mxu0 0.0
      %4528 = vmatpush1.msra.mxu0 0.0
      %4529 = vmatprep.subr.mxu0 0.0
      %4530 = vmatpush1.msra.mxu0 0.0
      %4531 = vmatprep.mubr.f32.mxu0 0.0
      %4532 = vmatmul.mubr.f32.gmra.mrb[0].mxu0 %v4441
      %v4533 = vpop.f32.mrb[0].mxu0
      %v4534 = vadd.f32 %v4438, %v4533
      %v4535 = vpop.f32.mrb[0].mxu0
      %4536 = vmatprep.mubr.f32.mxu0 0.0
      %4537 = vmatmul.mubr.f32.gmra.mrb[0].mxu0 %v4444
      %v4538 = vpop.f32.mrb[0].mxu0
      %v4539 = vadd.f32 %v4438, %v4538
      %v4540 = vpop.f32.mrb[0].mxu0
      %4541 = vmatprep.mubr.f32.mxu0 0.0
      %4542 = vmatmul.mubr.f32.gmra.mrb[0].mxu0 %v4447
      %v4543 = vpop.f32.mrb[0].mxu0
      %v4544 = vadd.f32 %v4438, %v4543
      %v4545 = vpop.f32.mrb[0].mxu0
      %4546 = vmatprep.mubr.f32.mxu0 0.0
      %4547 = vmatmul.mubr.f32.gmra.mrb[0].mxu0 %v4450
      %v4548 = vpop.f32.mrb[0].mxu0
      %v4549 = vadd.f32 %v4438, %v4548
      %v4550 = vpop.f32.mrb[0].mxu0
      %4551 = vmatprep.mubr.f32.mxu0 0.0
      %4552 = vmatmul.mubr.f32.gmra.mrb[0].mxu0 %v4453
      %v4553 = vpop.f32.mrb[0].mxu0
      %v4554 = vadd.f32 %v4438, %v4553
      %v4555 = vpop.f32.mrb[0].mxu0
      %4556 = vmatprep.mubr.f32.mxu0 0.0
      %4557 = vmatmul.mubr.f32.gmra.mrb[0].mxu0 %v4456
      %v4558 = vpop.f32.mrb[0].mxu0
      %v4559 = vadd.f32 %v4438, %v4558
      %v4560 = vpop.f32.mrb[0].mxu0
      %4561 = vmatprep.mubr.f32.mxu0 0.0
      %4562 = vmatmul.mubr.f32.gmra.mrb[0].mxu0 %v4459
      %v4563 = vpop.f32.mrb[0].mxu0
      %v4564 = vadd.f32 %v4438, %v4563
      %v4565 = vpop.f32.mrb[0].mxu0
      %4566 = vmatprep.mubr.f32.mxu0 0.0
      %4567 = vmatmul.mubr.f32.gmra.mrb[0].mxu0 %v4462
      %v4568 = vpop.f32.mrb[0].mxu0
      %v4569 = vadd.f32 %v4438, %v4568
      %v4570 = vpop.f32.mrb[0].mxu0
      %4571 = vdwg.mxu0
      %v4572 = vadd.f32 %v4299, %v4534
      %v4573 = vadd.f32 %v4300, %v4539
      %v4574 = vadd.f32 %v4301, %v4544
      %v4575 = vadd.f32 %v4302, %v4549
      %v4576 = vadd.f32 %v4303, %v4554
      %v4577 = vadd.f32 %v4304, %v4559
      %v4578 = vadd.f32 %v4305, %v4564
      %v4579 = vadd.f32 %v4306, %v4569
      %vm4580 = vcmp.ge.f32.partialorder %v4572, 0.0
      %vm4581 = vcmp.ge.f32.partialorder %v4573, 0.0
      %vm4582 = vcmp.ge.f32.partialorder %v4574, 0.0
      %vm4583 = vcmp.ge.f32.partialorder %v4575, 0.0
      %vm4584 = vcmp.ge.f32.partialorder %v4576, 0.0
      %vm4585 = vcmp.ge.f32.partialorder %v4577, 0.0
      %vm4586 = vcmp.ge.f32.partialorder %v4578, 0.0
      %vm4587 = vcmp.ge.f32.partialorder %v4579, 0.0
      %v4588 = vmul.f32 %v4572, 0.01
      %v4589 = vmul.f32 %v4573, 0.01
      %v4590 = vmul.f32 %v4574, 0.01
      %v4591 = vmul.f32 %v4575, 0.01
      %v4592 = vmul.f32 %v4576, 0.01
      %v4593 = vmul.f32 %v4577, 0.01
      %v4594 = vmul.f32 %v4578, 0.01
      %v4595 = vmul.f32 %v4579, 0.01
      %v4596 = vsel %vm4580, %v4572, %v4588
      %v4597 = vsel %vm4581, %v4573, %v4589
      %v4598 = vsel %vm4582, %v4574, %v4590
      %v4599 = vsel %vm4583, %v4575, %v4591
      %v4600 = vsel %vm4584, %v4576, %v4592
      %v4601 = vsel %vm4585, %v4577, %v4593
      %v4602 = vsel %vm4586, %v4578, %v4594
      %v4603 = vsel %vm4587, %v4579, %v4595
      %4604 = vst.msk [vmem:[%s359] sm:$0xff] %vm2760, %v4596
      %4605 = vst.msk [vmem:[%s359 + $0x8] sm:$0xff] %vm2760, %v4597
      %4606 = vst.msk [vmem:[%s359 + $0x10] sm:$0xff] %vm2760, %v4598
      %4607 = vst.msk [vmem:[%s359 + $0x18] sm:$0xff] %vm2760, %v4599
      %4608 = vst.msk [vmem:[%s359 + $0x20] sm:$0xff] %vm2760, %v4600
      %4609 = vst.msk [vmem:[%s359 + $0x28] sm:$0xff] %vm2760, %v4601
      %4610 = vst.msk [vmem:[%s359 + $0x30] sm:$0xff] %vm2760, %v4602
      %4611 = vst.msk [vmem:[%s359 + $0x38] sm:$0xff] %vm2760, %v4603
      %p4612 = scmp.lt.s32.totalorder %s21, 1
      %s4613 = scalar_select %p4612, %s21, 1
      %s4614 = smul.addr %s4613, 8
      %s4615 = smul.addr %s4614, 8
      %s4616 = scalar_lea.vmem %s10, %s4615
      // Predicated region
      $region61: #{forward.1} parent=59 // pred_check
        %p4617 = pneg %p254
      $region62: #{forward.1} parent=59 // pred_check_branch
        %4619 = sbr.rel (%p4617) target = $region64
      $region63: #{forward.1} parent=59 // pred_region
        _
      $region64: #{forward.1} parent=59 // pred_fallthru
        _
    $region60: #{forward.1} parent=5 // pred_fallthru
      _
    %p4620 = scmp.le.s32.totalorder 2, %s16
    // Predicated region
    $region65: #{forward.1} parent=5 // pred_check
      %p4621 = pneg %p4620
    $region66: #{forward.1} parent=5 // pred_check_branch
      %4623 = sbr.rel (%p4621) target = $region68
    $region67: #{forward.1} parent=5 // pred_region
      %s4624 = ssub.s32 %s16, 2
      // Predicated region
      $region69: #{forward.1} parent=67 // pred_check
        %p4625 = pneg %p260
      $region70: #{forward.1} parent=67 // pred_check_branch
        %4627 = sbr.rel (%p4625) target = $region72
      $region71: #{forward.1} parent=67 // pred_region
        %p4628 = scmp.lt.s32.totalorder %s22, 1
        %s4629 = scalar_select %p4628, %s22, 1
        %s4630 = smul.addr %s4629, 8
        %s4631 = smul.addr %s4630, 8
        %s4632 = scalar_lea.vmem %s10, %s4631
      $region72: #{forward.1} parent=67 // pred_fallthru
        _
    $region68: #{forward.1} parent=5 // pred_fallthru
      _
  $region6: #{forward.1} parent=0 // loop_footer
    %s20 = sadd.s32 1, %s16
  $region7: #{forward.1} parent=0 // loop_footer_branch
    %15 = sbr.rel target = $region3
  $region8: #{forward.1} parent=0 // loop_exit
    _

</llo_original>
